<compile_context>
chip_gen: v6e
topology: v6e:2x2x1
jax: 0.10.0
libtpu: 0.0.40
codegen_flags: <defaults>
</compile_context>

<pallas_src>
import functools

import jax
import jax.numpy as jnp
from jax import lax
from jax.experimental import pallas as pl
from jax.experimental.pallas import tpu as pltpu

# ---- module hyper-parameters (localMutualInformation.__init__ defaults) ----
MINVAL = 0.0
MAXVAL = 1.0
NUM_BINS = 32
PATCH_SIZE = 5
SIGMA_RATIO = 1.0

BIN_WIDTH = (MAXVAL - MINVAL) / (NUM_BINS - 1)        # == np.mean(np.diff(bins))
SIGMA = BIN_WIDTH * SIGMA_RATIO
PRETERM = 1.0 / (2.0 * SIGMA ** 2)

# patches per grid step (lane axis; multiple of 128; sweepable)
TN_2D = 512     # P = 25  -> wa+wb scratch ~3.3 MiB
TN_3D = 256     # P = 125 -> wa+wb scratch ~8.2 MiB (v7x VMEM-safe)


def _lmi_kernel(a_ref, b_ref, mi_ref, wa_ref, wb_ref, pa_ref, pb_ref,
                *, preterm, num_bins, bin_width, minval):
    # a_ref, b_ref : (P, TN)  f32 — TN patches as lane-dense columns.
    # mi_ref       : (1, TN)  f32 — per-patch mutual information (lane-dense).
    # wa_ref/wb_ref: (P*NB, TN) VMEM scratch, row p*NB + k = weight of patch
    #                element p for bin k.  (NB, TN) minor tile = 4 full
    #                sublane tiles -> zero padding in the hot loop.
    # pa_ref/pb_ref: (NB, TN) VMEM scratch — per-patch marginals.
    P = a_ref.shape[0]
    tn = a_ref.shape[1]
    inv_p = 1.0 / float(P)

    # Bin centers along the sublane axis: c_col[k, :] = minval + k * bin_width.
    c_col = (minval + bin_width
             * lax.broadcasted_iota(jnp.int32, (num_bins, tn), 0)
             .astype(jnp.float32))

    # ---- Phase 1: soft (Parzen) bin weights, bins on sublanes ---------------
    def build_weights(src_ref, w_ref, marg_ref):
        acc = jnp.zeros((num_bins, tn), jnp.float32)
        for p in range(P):
            row = src_ref[pl.ds(p, 1), :]                        # (1, TN)
            w = jnp.exp(-preterm * jnp.square(row - c_col))      # (NB, TN)
            den = jnp.sum(w, axis=0, keepdims=True)              # (1, TN)
            w = w * pl.reciprocal(den, approx=True)              # EUP slot
            w_ref[pl.ds(p * num_bins, num_bins), :] = w          # contiguous vst
            acc = acc + w
        marg_ref[...] = acc * inv_p                               # (NB, TN)

    build_weights(a_ref, wa_ref, pa_ref)
    build_weights(b_ref, wb_ref, pb_ref)

    # ---- Phase 2: per-patch MI; fori over the 32 y_pred bins ----------------
    def bj_body(bj, contrib):
        # pab_j[bi, t] = (1/P) * sum_p wa[p, bi, t] * wb[p, bj, t]
        # Explicit MAC into a (NB, TN) accumulator: no 3-D temporaries.
        acc = jnp.zeros((num_bins, tn), jnp.float32)
        for p in range(P):
            wb_row = wb_ref[pl.ds(p * num_bins + bj, 1), :]       # (1, TN)
            wa_tile = wa_ref[pl.ds(p * num_bins, num_bins), :]    # (NB, TN)
            acc = acc + wa_tile * wb_row                          # bcast over bi
        pab_j = acc * inv_p                                       # (NB, TN)
        pb_j = pb_ref[pl.ds(bj, 1), :]                            # (1, TN)
        papb_j = pa_ref[...] * pb_j + 1e-6                        # (NB, TN)
        # exact divide here (feeds log, summed over 1024 bin pairs)
        ratio = pab_j / papb_j + 1e-6
        contrib = contrib + jnp.sum(pab_j * jnp.log(ratio),
                                    axis=0, keepdims=True)        # (1, TN) XLU
        return contrib

    contrib = lax.fori_loop(0, num_bins, bj_body,
                            jnp.zeros((1, tn), jnp.float32))
    mi_ref[...] = contrib


def _extract_patches_lanes(img, patch_size):
    """img: (B, C, *spatial), spatial already padded to multiples of
    patch_size.  Returns (patch_size**ndim, num_patches): patches on the
    minor (lane) axis."""
    if img.ndim == 4:
        B, C, H, W = img.shape
        nh, nw = H // patch_size, W // patch_size
        x = img.reshape(B, C, nh, patch_size, nw, patch_size)
        x = jnp.transpose(x, (3, 5, 0, 1, 2, 4))
        return x.reshape(patch_size * patch_size, -1)
    elif img.ndim == 5:
        B, C, H, W, D = img.shape
        nh, nw, nd = H // patch_size, W // patch_size, D // patch_size
        x = img.reshape(B, C, nh, patch_size, nw, patch_size, nd, patch_size)
        x = jnp.transpose(x, (3, 5, 7, 0, 1, 2, 4, 6))
        return x.reshape(patch_size ** 3, -1)
    raise ValueError("Supports 2D and 3D but not {}".format(img.shape))


def _round_up(x, m):
    return ((x + m - 1) // m) * m


def _pick_tile(n_patches, ndim):
    """Patch-tile width: multiple of 128, >=128, and — when the problem is big
    enough — small enough to give >=2 grid blocks (v7x megacore)."""
    desired = TN_2D if ndim == 2 else TN_3D
    if n_patches <= 128:
        return 128
    half = max(128, (n_patches // 2) // 128 * 128)
    return max(128, min(desired, half, _round_up(n_patches, 128)))


@jax.jit
def local_mutual_information(y_true, y_pred):
    """Returns -local_mi(y_true, y_pred), same semantics as the torch module."""
    y_true = jnp.clip(y_true.astype(jnp.float32), 0.0, MAXVAL)
    y_pred = jnp.clip(y_pred.astype(jnp.float32), 0.0, MAXVAL)

    spatial = y_pred.shape[2:]
    ndim = len(spatial)
    if ndim not in (2, 3):
        raise ValueError("Supports 2D and 3D but not {}".format(y_pred.shape))

    rems = [(-s) % PATCH_SIZE for s in spatial]
    pad = ((0, 0), (0, 0)) + tuple((r // 2, r - r // 2) for r in rems)
    y_true = jnp.pad(y_true, pad)
    y_pred = jnp.pad(y_pred, pad)

    a = _extract_patches_lanes(y_true, PATCH_SIZE)   # (P, N)
    b = _extract_patches_lanes(y_pred, PATCH_SIZE)   # (P, N)
    P, N = a.shape

    tn = _pick_tile(N, ndim)
    n_pad = (-N) % tn
    if n_pad:
        a = jnp.pad(a, ((0, 0), (0, n_pad)))
        b = jnp.pad(b, ((0, 0), (0, n_pad)))
    n_total = N + n_pad
    num_blocks = n_total // tn

    kernel = functools.partial(
        _lmi_kernel, preterm=PRETERM, num_bins=NUM_BINS,
        bin_width=BIN_WIDTH, minval=MINVAL)

    scratch = [
        pltpu.VMEM((P * NUM_BINS, tn), jnp.float32),   # wa  (P, NB, TN) flat
        pltpu.VMEM((P * NUM_BINS, tn), jnp.float32),   # wb
        pltpu.VMEM((NUM_BINS, tn), jnp.float32),       # pa
        pltpu.VMEM((NUM_BINS, tn), jnp.float32),       # pb
    ]

    cost = pl.CostEstimate(
        flops=int(n_total * (2 * P * NUM_BINS * NUM_BINS
                             + 12 * P * NUM_BINS + 10 * NUM_BINS * NUM_BINS)),
        transcendentals=int(n_total * (2 * P * NUM_BINS
                                       + NUM_BINS * NUM_BINS + 2 * P)),
        bytes_accessed=int(4 * (2 * P * n_total + n_total)),
    )

    mi_rows = pl.pallas_call(
        kernel,
        out_shape=jax.ShapeDtypeStruct((1, n_total), jnp.float32),
        grid_spec=pltpu.PrefetchScalarGridSpec(
            num_scalar_prefetch=0,
            grid=(num_blocks,),
            in_specs=[
                pl.BlockSpec((P, tn), lambda i: (0, i)),
                pl.BlockSpec((P, tn), lambda i: (0, i)),
            ],
            out_specs=pl.BlockSpec((1, tn), lambda i: (0, i)),
            scratch_shapes=scratch,
        ),
        compiler_params=pltpu.CompilerParams(
            dimension_semantics=("parallel",),
            vmem_limit_bytes=32 * 1024 * 1024,
        ),
        cost_estimate=cost,
    )(a, b)

    mi = jnp.mean(mi_rows[0, :N])   # drop padded patch columns before the mean
    return -mi


if __name__ == "__main__":
    key = jax.random.PRNGKey(0)
    k1, k2 = jax.random.split(key)
    # small NCHW inputs consistent with the module (2D images)
    y_true = jax.random.uniform(k1, (2, 4, 16, 16), dtype=jnp.float32)
    y_pred = jax.random.uniform(k2, (2, 4, 16, 16), dtype=jnp.float32)

    out = local_mutual_information(y_true, y_pred)
    jax.block_until_ready(out)
    print("KERNEL_OK")
</pallas_src>

<mosaic_0001>
module attributes {stable_mosaic.version = 11 : i64} {
  func.func @_lmi_kernel(%arg0: i32, %arg1: memref<25x128xf32, #tpu.memory_space<vmem>>, %arg2: memref<25x128xf32, #tpu.memory_space<vmem>>, %arg3: memref<1x128xf32, #tpu.memory_space<vmem>>, %arg4: memref<800x128xf32, #tpu.memory_space<vmem>>, %arg5: memref<800x128xf32, #tpu.memory_space<vmem>>, %arg6: memref<32x128xf32, #tpu.memory_space<vmem>>, %arg7: memref<32x128xf32, #tpu.memory_space<vmem>>) attributes {dimension_semantics = [#tpu.dimension_semantics<parallel>], iteration_bounds = array<i64: 1>, scalar_prefetch = 0 : i64, scratch_operands = 4 : i64, tpu.core_type = #tpu.core_type<tc>, window_params = [{transform_indices = @transform_0, window_bounds = array<i64: 25, 128>}, {transform_indices = @transform_1, window_bounds = array<i64: 25, 128>}, {transform_indices = @transform_2, window_bounds = array<i64: 1, 128>}]} {
    %0 = tpu.iota {dimensions = array<i32: 0>} : vector<32x128xi32>
    %1 = arith.sitofp %0 : vector<32x128xi32> to vector<32x128xf32>
    %cst = arith.constant 0.0322580636 : f32
    %2 = vector.broadcast %cst : f32 to vector<32x128xf32>
    %3 = arith.mulf %2, %1 : vector<32x128xf32>
    %cst_0 = arith.constant 0.000000e+00 : f32
    %4 = vector.broadcast %cst_0 : f32 to vector<32x128xf32>
    %5 = arith.addf %4, %3 : vector<32x128xf32>
    %cst_1 = arith.constant 0.000000e+00 : f32
    %6 = vector.broadcast %cst_1 : f32 to vector<32x128xf32>
    %c0 = arith.constant 0 : index
    %c0_2 = arith.constant 0 : index
    %7 = vector.load %arg1[%c0, %c0_2] : memref<25x128xf32, #tpu.memory_space<vmem>>, vector<1x128xf32>
    %8 = vector.broadcast %7 : vector<1x128xf32> to vector<32x128xf32>
    %9 = arith.subf %8, %5 : vector<32x128xf32>
    %10 = arith.mulf %9, %9 : vector<32x128xf32>
    %cst_3 = arith.constant -4.805000e+02 : f32
    %11 = vector.broadcast %cst_3 : f32 to vector<32x128xf32>
    %12 = arith.mulf %11, %10 : vector<32x128xf32>
    %13 = math.exp %12 : vector<32x128xf32>
    %cst_4 = arith.constant dense<0.000000e+00> : vector<128xf32>
    %14 = vector.multi_reduction <add>, %13, %cst_4 [0] : vector<32x128xf32> to vector<128xf32>
    %15 = vector.shape_cast %14 : vector<128xf32> to vector<1x128xf32>
    %16 = tpu.reciprocal %15 {approx = true} : vector<1x128xf32> -> vector<1x128xf32>
    %17 = vector.broadcast %16 : vector<1x128xf32> to vector<32x128xf32>
    %18 = arith.mulf %13, %17 : vector<32x128xf32>
    %c0_5 = arith.constant 0 : index
    %c0_6 = arith.constant 0 : index
    %19 = vector.load %arg4[%c0_5, %c0_6] : memref<800x128xf32, #tpu.memory_space<vmem>>, vector<32x128xf32>
    tpu.vector_store %arg4[%c0_5, %c0_6], %18 {strides = array<i32>} : memref<800x128xf32, #tpu.memory_space<vmem>>, vector<32x128xf32>,
    %20 = arith.addf %6, %18 : vector<32x128xf32>
    %c1 = arith.constant 1 : index
    %c0_7 = arith.constant 0 : index
    %21 = vector.load %arg1[%c1, %c0_7] : memref<25x128xf32, #tpu.memory_space<vmem>>, vector<1x128xf32>
    %22 = vector.broadcast %21 : vector<1x128xf32> to vector<32x128xf32>
    %23 = arith.subf %22, %5 : vector<32x128xf32>
    %24 = arith.mulf %23, %23 : vector<32x128xf32>
    %cst_8 = arith.constant -4.805000e+02 : f32
    %25 = vector.broadcast %cst_8 : f32 to vector<32x128xf32>
    %26 = arith.mulf %25, %24 : vector<32x128xf32>
    %27 = math.exp %26 : vector<32x128xf32>
    %cst_9 = arith.constant dense<0.000000e+00> : vector<128xf32>
    %28 = vector.multi_reduction <add>, %27, %cst_9 [0] : vector<32x128xf32> to vector<128xf32>
    %29 = vector.shape_cast %28 : vector<128xf32> to vector<1x128xf32>
    %30 = tpu.reciprocal %29 {approx = true} : vector<1x128xf32> -> vector<1x128xf32>
    %31 = vector.broadcast %30 : vector<1x128xf32> to vector<32x128xf32>
    %32 = arith.mulf %27, %31 : vector<32x128xf32>
    %c32 = arith.constant 32 : index
    %c0_10 = arith.constant 0 : index
    %33 = vector.load %arg4[%c32, %c0_10] : memref<800x128xf32, #tpu.memory_space<vmem>>, vector<32x128xf32>
    tpu.vector_store %arg4[%c32, %c0_10], %32 {strides = array<i32>} : memref<800x128xf32, #tpu.memory_space<vmem>>, vector<32x128xf32>,
    %34 = arith.addf %20, %32 : vector<32x128xf32>
    %c2 = arith.constant 2 : index
    %c0_11 = arith.constant 0 : index
    %35 = vector.load %arg1[%c2, %c0_11] : memref<25x128xf32, #tpu.memory_space<vmem>>, vector<1x128xf32>
    %36 = vector.broadcast %35 : vector<1x128xf32> to vector<32x128xf32>
    %37 = arith.subf %36, %5 : vector<32x128xf32>
    %38 = arith.mulf %37, %37 : vector<32x128xf32>
    %cst_12 = arith.constant -4.805000e+02 : f32
    %39 = vector.broadcast %cst_12 : f32 to vector<32x128xf32>
    %40 = arith.mulf %39, %38 : vector<32x128xf32>
    %41 = math.exp %40 : vector<32x128xf32>
    %cst_13 = arith.constant dense<0.000000e+00> : vector<128xf32>
    %42 = vector.multi_reduction <add>, %41, %cst_13 [0] : vector<32x128xf32> to vector<128xf32>
    %43 = vector.shape_cast %42 : vector<128xf32> to vector<1x128xf32>
    %44 = tpu.reciprocal %43 {approx = true} : vector<1x128xf32> -> vector<1x128xf32>
    %45 = vector.broadcast %44 : vector<1x128xf32> to vector<32x128xf32>
    %46 = arith.mulf %41, %45 : vector<32x128xf32>
    %c64 = arith.constant 64 : index
    %c0_14 = arith.constant 0 : index
    %47 = vector.load %arg4[%c64, %c0_14] : memref<800x128xf32, #tpu.memory_space<vmem>>, vector<32x128xf32>
    tpu.vector_store %arg4[%c64, %c0_14], %46 {strides = array<i32>} : memref<800x128xf32, #tpu.memory_space<vmem>>, vector<32x128xf32>,
    %48 = arith.addf %34, %46 : vector<32x128xf32>
    %c3 = arith.constant 3 : index
    %c0_15 = arith.constant 0 : index
    %49 = vector.load %arg1[%c3, %c0_15] : memref<25x128xf32, #tpu.memory_space<vmem>>, vector<1x128xf32>
    %50 = vector.broadcast %49 : vector<1x128xf32> to vector<32x128xf32>
    %51 = arith.subf %50, %5 : vector<32x128xf32>
    %52 = arith.mulf %51, %51 : vector<32x128xf32>
    %cst_16 = arith.constant -4.805000e+02 : f32
    %53 = vector.broadcast %cst_16 : f32 to vector<32x128xf32>
    %54 = arith.mulf %53, %52 : vector<32x128xf32>
    %55 = math.exp %54 : vector<32x128xf32>
    %cst_17 = arith.constant dense<0.000000e+00> : vector<128xf32>
    %56 = vector.multi_reduction <add>, %55, %cst_17 [0] : vector<32x128xf32> to vector<128xf32>
    %57 = vector.shape_cast %56 : vector<128xf32> to vector<1x128xf32>
    %58 = tpu.reciprocal %57 {approx = true} : vector<1x128xf32> -> vector<1x128xf32>
    %59 = vector.broadcast %58 : vector<1x128xf32> to vector<32x128xf32>
    %60 = arith.mulf %55, %59 : vector<32x128xf32>
    %c96 = arith.constant 96 : index
    %c0_18 = arith.constant 0 : index
    %61 = vector.load %arg4[%c96, %c0_18] : memref<800x128xf32, #tpu.memory_space<vmem>>, vector<32x128xf32>
    tpu.vector_store %arg4[%c96, %c0_18], %60 {strides = array<i32>} : memref<800x128xf32, #tpu.memory_space<vmem>>, vector<32x128xf32>,
    %62 = arith.addf %48, %60 : vector<32x128xf32>
    %c4 = arith.constant 4 : index
    %c0_19 = arith.constant 0 : index
    %63 = vector.load %arg1[%c4, %c0_19] : memref<25x128xf32, #tpu.memory_space<vmem>>, vector<1x128xf32>
    %64 = vector.broadcast %63 : vector<1x128xf32> to vector<32x128xf32>
    %65 = arith.subf %64, %5 : vector<32x128xf32>
    %66 = arith.mulf %65, %65 : vector<32x128xf32>
    %cst_20 = arith.constant -4.805000e+02 : f32
    %67 = vector.broadcast %cst_20 : f32 to vector<32x128xf32>
    %68 = arith.mulf %67, %66 : vector<32x128xf32>
    %69 = math.exp %68 : vector<32x128xf32>
    %cst_21 = arith.constant dense<0.000000e+00> : vector<128xf32>
    %70 = vector.multi_reduction <add>, %69, %cst_21 [0] : vector<32x128xf32> to vector<128xf32>
    %71 = vector.shape_cast %70 : vector<128xf32> to vector<1x128xf32>
    %72 = tpu.reciprocal %71 {approx = true} : vector<1x128xf32> -> vector<1x128xf32>
    %73 = vector.broadcast %72 : vector<1x128xf32> to vector<32x128xf32>
    %74 = arith.mulf %69, %73 : vector<32x128xf32>
    %c128 = arith.constant 128 : index
    %c0_22 = arith.constant 0 : index
    %75 = vector.load %arg4[%c128, %c0_22] : memref<800x128xf32, #tpu.memory_space<vmem>>, vector<32x128xf32>
    tpu.vector_store %arg4[%c128, %c0_22], %74 {strides = array<i32>} : memref<800x128xf32, #tpu.memory_space<vmem>>, vector<32x128xf32>,
    %76 = arith.addf %62, %74 : vector<32x128xf32>
    %c5 = arith.constant 5 : index
    %c0_23 = arith.constant 0 : index
    %77 = vector.load %arg1[%c5, %c0_23] : memref<25x128xf32, #tpu.memory_space<vmem>>, vector<1x128xf32>
    %78 = vector.broadcast %77 : vector<1x128xf32> to vector<32x128xf32>
    %79 = arith.subf %78, %5 : vector<32x128xf32>
    %80 = arith.mulf %79, %79 : vector<32x128xf32>
    %cst_24 = arith.constant -4.805000e+02 : f32
    %81 = vector.broadcast %cst_24 : f32 to vector<32x128xf32>
    %82 = arith.mulf %81, %80 : vector<32x128xf32>
    %83 = math.exp %82 : vector<32x128xf32>
    %cst_25 = arith.constant dense<0.000000e+00> : vector<128xf32>
    %84 = vector.multi_reduction <add>, %83, %cst_25 [0] : vector<32x128xf32> to vector<128xf32>
    %85 = vector.shape_cast %84 : vector<128xf32> to vector<1x128xf32>
    %86 = tpu.reciprocal %85 {approx = true} : vector<1x128xf32> -> vector<1x128xf32>
    %87 = vector.broadcast %86 : vector<1x128xf32> to vector<32x128xf32>
    %88 = arith.mulf %83, %87 : vector<32x128xf32>
    %c160 = arith.constant 160 : index
    %c0_26 = arith.constant 0 : index
    %89 = vector.load %arg4[%c160, %c0_26] : memref<800x128xf32, #tpu.memory_space<vmem>>, vector<32x128xf32>
    tpu.vector_store %arg4[%c160, %c0_26], %88 {strides = array<i32>} : memref<800x128xf32, #tpu.memory_space<vmem>>, vector<32x128xf32>,
    %90 = arith.addf %76, %88 : vector<32x128xf32>
    %c6 = arith.constant 6 : index
    %c0_27 = arith.constant 0 : index
    %91 = vector.load %arg1[%c6, %c0_27] : memref<25x128xf32, #tpu.memory_space<vmem>>, vector<1x128xf32>
    %92 = vector.broadcast %91 : vector<1x128xf32> to vector<32x128xf32>
    %93 = arith.subf %92, %5 : vector<32x128xf32>
    %94 = arith.mulf %93, %93 : vector<32x128xf32>
    %cst_28 = arith.constant -4.805000e+02 : f32
    %95 = vector.broadcast %cst_28 : f32 to vector<32x128xf32>
    %96 = arith.mulf %95, %94 : vector<32x128xf32>
    %97 = math.exp %96 : vector<32x128xf32>
    %cst_29 = arith.constant dense<0.000000e+00> : vector<128xf32>
    %98 = vector.multi_reduction <add>, %97, %cst_29 [0] : vector<32x128xf32> to vector<128xf32>
    %99 = vector.shape_cast %98 : vector<128xf32> to vector<1x128xf32>
    %100 = tpu.reciprocal %99 {approx = true} : vector<1x128xf32> -> vector<1x128xf32>
    %101 = vector.broadcast %100 : vector<1x128xf32> to vector<32x128xf32>
    %102 = arith.mulf %97, %101 : vector<32x128xf32>
    %c192 = arith.constant 192 : index
    %c0_30 = arith.constant 0 : index
    %103 = vector.load %arg4[%c192, %c0_30] : memref<800x128xf32, #tpu.memory_space<vmem>>, vector<32x128xf32>
    tpu.vector_store %arg4[%c192, %c0_30], %102 {strides = array<i32>} : memref<800x128xf32, #tpu.memory_space<vmem>>, vector<32x128xf32>,
    %104 = arith.addf %90, %102 : vector<32x128xf32>
    %c7 = arith.constant 7 : index
    %c0_31 = arith.constant 0 : index
    %105 = vector.load %arg1[%c7, %c0_31] : memref<25x128xf32, #tpu.memory_space<vmem>>, vector<1x128xf32>
    %106 = vector.broadcast %105 : vector<1x128xf32> to vector<32x128xf32>
    %107 = arith.subf %106, %5 : vector<32x128xf32>
    %108 = arith.mulf %107, %107 : vector<32x128xf32>
    %cst_32 = arith.constant -4.805000e+02 : f32
    %109 = vector.broadcast %cst_32 : f32 to vector<32x128xf32>
    %110 = arith.mulf %109, %108 : vector<32x128xf32>
    %111 = math.exp %110 : vector<32x128xf32>
    %cst_33 = arith.constant dense<0.000000e+00> : vector<128xf32>
    %112 = vector.multi_reduction <add>, %111, %cst_33 [0] : vector<32x128xf32> to vector<128xf32>
    %113 = vector.shape_cast %112 : vector<128xf32> to vector<1x128xf32>
    %114 = tpu.reciprocal %113 {approx = true} : vector<1x128xf32> -> vector<1x128xf32>
    %115 = vector.broadcast %114 : vector<1x128xf32> to vector<32x128xf32>
    %116 = arith.mulf %111, %115 : vector<32x128xf32>
    %c224 = arith.constant 224 : index
    %c0_34 = arith.constant 0 : index
    %117 = vector.load %arg4[%c224, %c0_34] : memref<800x128xf32, #tpu.memory_space<vmem>>, vector<32x128xf32>
    tpu.vector_store %arg4[%c224, %c0_34], %116 {strides = array<i32>} : memref<800x128xf32, #tpu.memory_space<vmem>>, vector<32x128xf32>,
    %118 = arith.addf %104, %116 : vector<32x128xf32>
    %c8 = arith.constant 8 : index
    %c0_35 = arith.constant 0 : index
    %119 = vector.load %arg1[%c8, %c0_35] : memref<25x128xf32, #tpu.memory_space<vmem>>, vector<1x128xf32>
    %120 = vector.broadcast %119 : vector<1x128xf32> to vector<32x128xf32>
    %121 = arith.subf %120, %5 : vector<32x128xf32>
    %122 = arith.mulf %121, %121 : vector<32x128xf32>
    %cst_36 = arith.constant -4.805000e+02 : f32
    %123 = vector.broadcast %cst_36 : f32 to vector<32x128xf32>
    %124 = arith.mulf %123, %122 : vector<32x128xf32>
    %125 = math.exp %124 : vector<32x128xf32>
    %cst_37 = arith.constant dense<0.000000e+00> : vector<128xf32>
    %126 = vector.multi_reduction <add>, %125, %cst_37 [0] : vector<32x128xf32> to vector<128xf32>
    %127 = vector.shape_cast %126 : vector<128xf32> to vector<1x128xf32>
    %128 = tpu.reciprocal %127 {approx = true} : vector<1x128xf32> -> vector<1x128xf32>
    %129 = vector.broadcast %128 : vector<1x128xf32> to vector<32x128xf32>
    %130 = arith.mulf %125, %129 : vector<32x128xf32>
    %c256 = arith.constant 256 : index
    %c0_38 = arith.constant 0 : index
    %131 = vector.load %arg4[%c256, %c0_38] : memref<800x128xf32, #tpu.memory_space<vmem>>, vector<32x128xf32>
    tpu.vector_store %arg4[%c256, %c0_38], %130 {strides = array<i32>} : memref<800x128xf32, #tpu.memory_space<vmem>>, vector<32x128xf32>,
    %132 = arith.addf %118, %130 : vector<32x128xf32>
    %c9 = arith.constant 9 : index
    %c0_39 = arith.constant 0 : index
    %133 = vector.load %arg1[%c9, %c0_39] : memref<25x128xf32, #tpu.memory_space<vmem>>, vector<1x128xf32>
    %134 = vector.broadcast %133 : vector<1x128xf32> to vector<32x128xf32>
    %135 = arith.subf %134, %5 : vector<32x128xf32>
    %136 = arith.mulf %135, %135 : vector<32x128xf32>
    %cst_40 = arith.constant -4.805000e+02 : f32
    %137 = vector.broadcast %cst_40 : f32 to vector<32x128xf32>
    %138 = arith.mulf %137, %136 : vector<32x128xf32>
    %139 = math.exp %138 : vector<32x128xf32>
    %cst_41 = arith.constant dense<0.000000e+00> : vector<128xf32>
    %140 = vector.multi_reduction <add>, %139, %cst_41 [0] : vector<32x128xf32> to vector<128xf32>
    %141 = vector.shape_cast %140 : vector<128xf32> to vector<1x128xf32>
    %142 = tpu.reciprocal %141 {approx = true} : vector<1x128xf32> -> vector<1x128xf32>
    %143 = vector.broadcast %142 : vector<1x128xf32> to vector<32x128xf32>
    %144 = arith.mulf %139, %143 : vector<32x128xf32>
    %c288 = arith.constant 288 : index
    %c0_42 = arith.constant 0 : index
    %145 = vector.load %arg4[%c288, %c0_42] : memref<800x128xf32, #tpu.memory_space<vmem>>, vector<32x128xf32>
    tpu.vector_store %arg4[%c288, %c0_42], %144 {strides = array<i32>} : memref<800x128xf32, #tpu.memory_space<vmem>>, vector<32x128xf32>,
    %146 = arith.addf %132, %144 : vector<32x128xf32>
    %c10 = arith.constant 10 : index
    %c0_43 = arith.constant 0 : index
    %147 = vector.load %arg1[%c10, %c0_43] : memref<25x128xf32, #tpu.memory_space<vmem>>, vector<1x128xf32>
    %148 = vector.broadcast %147 : vector<1x128xf32> to vector<32x128xf32>
    %149 = arith.subf %148, %5 : vector<32x128xf32>
    %150 = arith.mulf %149, %149 : vector<32x128xf32>
    %cst_44 = arith.constant -4.805000e+02 : f32
    %151 = vector.broadcast %cst_44 : f32 to vector<32x128xf32>
    %152 = arith.mulf %151, %150 : vector<32x128xf32>
    %153 = math.exp %152 : vector<32x128xf32>
    %cst_45 = arith.constant dense<0.000000e+00> : vector<128xf32>
    %154 = vector.multi_reduction <add>, %153, %cst_45 [0] : vector<32x128xf32> to vector<128xf32>
    %155 = vector.shape_cast %154 : vector<128xf32> to vector<1x128xf32>
    %156 = tpu.reciprocal %155 {approx = true} : vector<1x128xf32> -> vector<1x128xf32>
    %157 = vector.broadcast %156 : vector<1x128xf32> to vector<32x128xf32>
    %158 = arith.mulf %153, %157 : vector<32x128xf32>
    %c320 = arith.constant 320 : index
    %c0_46 = arith.constant 0 : index
    %159 = vector.load %arg4[%c320, %c0_46] : memref<800x128xf32, #tpu.memory_space<vmem>>, vector<32x128xf32>
    tpu.vector_store %arg4[%c320, %c0_46], %158 {strides = array<i32>} : memref<800x128xf32, #tpu.memory_space<vmem>>, vector<32x128xf32>,
    %160 = arith.addf %146, %158 : vector<32x128xf32>
    %c11 = arith.constant 11 : index
    %c0_47 = arith.constant 0 : index
    %161 = vector.load %arg1[%c11, %c0_47] : memref<25x128xf32, #tpu.memory_space<vmem>>, vector<1x128xf32>
    %162 = vector.broadcast %161 : vector<1x128xf32> to vector<32x128xf32>
    %163 = arith.subf %162, %5 : vector<32x128xf32>
    %164 = arith.mulf %163, %163 : vector<32x128xf32>
    %cst_48 = arith.constant -4.805000e+02 : f32
    %165 = vector.broadcast %cst_48 : f32 to vector<32x128xf32>
    %166 = arith.mulf %165, %164 : vector<32x128xf32>
    %167 = math.exp %166 : vector<32x128xf32>
    %cst_49 = arith.constant dense<0.000000e+00> : vector<128xf32>
    %168 = vector.multi_reduction <add>, %167, %cst_49 [0] : vector<32x128xf32> to vector<128xf32>
    %169 = vector.shape_cast %168 : vector<128xf32> to vector<1x128xf32>
    %170 = tpu.reciprocal %169 {approx = true} : vector<1x128xf32> -> vector<1x128xf32>
    %171 = vector.broadcast %170 : vector<1x128xf32> to vector<32x128xf32>
    %172 = arith.mulf %167, %171 : vector<32x128xf32>
    %c352 = arith.constant 352 : index
    %c0_50 = arith.constant 0 : index
    %173 = vector.load %arg4[%c352, %c0_50] : memref<800x128xf32, #tpu.memory_space<vmem>>, vector<32x128xf32>
    tpu.vector_store %arg4[%c352, %c0_50], %172 {strides = array<i32>} : memref<800x128xf32, #tpu.memory_space<vmem>>, vector<32x128xf32>,
    %174 = arith.addf %160, %172 : vector<32x128xf32>
    %c12 = arith.constant 12 : index
    %c0_51 = arith.constant 0 : index
    %175 = vector.load %arg1[%c12, %c0_51] : memref<25x128xf32, #tpu.memory_space<vmem>>, vector<1x128xf32>
    %176 = vector.broadcast %175 : vector<1x128xf32> to vector<32x128xf32>
    %177 = arith.subf %176, %5 : vector<32x128xf32>
    %178 = arith.mulf %177, %177 : vector<32x128xf32>
    %cst_52 = arith.constant -4.805000e+02 : f32
    %179 = vector.broadcast %cst_52 : f32 to vector<32x128xf32>
    %180 = arith.mulf %179, %178 : vector<32x128xf32>
    %181 = math.exp %180 : vector<32x128xf32>
    %cst_53 = arith.constant dense<0.000000e+00> : vector<128xf32>
    %182 = vector.multi_reduction <add>, %181, %cst_53 [0] : vector<32x128xf32> to vector<128xf32>
    %183 = vector.shape_cast %182 : vector<128xf32> to vector<1x128xf32>
    %184 = tpu.reciprocal %183 {approx = true} : vector<1x128xf32> -> vector<1x128xf32>
    %185 = vector.broadcast %184 : vector<1x128xf32> to vector<32x128xf32>
    %186 = arith.mulf %181, %185 : vector<32x128xf32>
    %c384 = arith.constant 384 : index
    %c0_54 = arith.constant 0 : index
    %187 = vector.load %arg4[%c384, %c0_54] : memref<800x128xf32, #tpu.memory_space<vmem>>, vector<32x128xf32>
    tpu.vector_store %arg4[%c384, %c0_54], %186 {strides = array<i32>} : memref<800x128xf32, #tpu.memory_space<vmem>>, vector<32x128xf32>,
    %188 = arith.addf %174, %186 : vector<32x128xf32>
    %c13 = arith.constant 13 : index
    %c0_55 = arith.constant 0 : index
    %189 = vector.load %arg1[%c13, %c0_55] : memref<25x128xf32, #tpu.memory_space<vmem>>, vector<1x128xf32>
    %190 = vector.broadcast %189 : vector<1x128xf32> to vector<32x128xf32>
    %191 = arith.subf %190, %5 : vector<32x128xf32>
    %192 = arith.mulf %191, %191 : vector<32x128xf32>
    %cst_56 = arith.constant -4.805000e+02 : f32
    %193 = vector.broadcast %cst_56 : f32 to vector<32x128xf32>
    %194 = arith.mulf %193, %192 : vector<32x128xf32>
    %195 = math.exp %194 : vector<32x128xf32>
    %cst_57 = arith.constant dense<0.000000e+00> : vector<128xf32>
    %196 = vector.multi_reduction <add>, %195, %cst_57 [0] : vector<32x128xf32> to vector<128xf32>
    %197 = vector.shape_cast %196 : vector<128xf32> to vector<1x128xf32>
    %198 = tpu.reciprocal %197 {approx = true} : vector<1x128xf32> -> vector<1x128xf32>
    %199 = vector.broadcast %198 : vector<1x128xf32> to vector<32x128xf32>
    %200 = arith.mulf %195, %199 : vector<32x128xf32>
    %c416 = arith.constant 416 : index
    %c0_58 = arith.constant 0 : index
    %201 = vector.load %arg4[%c416, %c0_58] : memref<800x128xf32, #tpu.memory_space<vmem>>, vector<32x128xf32>
    tpu.vector_store %arg4[%c416, %c0_58], %200 {strides = array<i32>} : memref<800x128xf32, #tpu.memory_space<vmem>>, vector<32x128xf32>,
    %202 = arith.addf %188, %200 : vector<32x128xf32>
    %c14 = arith.constant 14 : index
    %c0_59 = arith.constant 0 : index
    %203 = vector.load %arg1[%c14, %c0_59] : memref<25x128xf32, #tpu.memory_space<vmem>>, vector<1x128xf32>
    %204 = vector.broadcast %203 : vector<1x128xf32> to vector<32x128xf32>
    %205 = arith.subf %204, %5 : vector<32x128xf32>
    %206 = arith.mulf %205, %205 : vector<32x128xf32>
    %cst_60 = arith.constant -4.805000e+02 : f32
    %207 = vector.broadcast %cst_60 : f32 to vector<32x128xf32>
    %208 = arith.mulf %207, %206 : vector<32x128xf32>
    %209 = math.exp %208 : vector<32x128xf32>
    %cst_61 = arith.constant dense<0.000000e+00> : vector<128xf32>
    %210 = vector.multi_reduction <add>, %209, %cst_61 [0] : vector<32x128xf32> to vector<128xf32>
    %211 = vector.shape_cast %210 : vector<128xf32> to vector<1x128xf32>
    %212 = tpu.reciprocal %211 {approx = true} : vector<1x128xf32> -> vector<1x128xf32>
    %213 = vector.broadcast %212 : vector<1x128xf32> to vector<32x128xf32>
    %214 = arith.mulf %209, %213 : vector<32x128xf32>
    %c448 = arith.constant 448 : index
    %c0_62 = arith.constant 0 : index
    %215 = vector.load %arg4[%c448, %c0_62] : memref<800x128xf32, #tpu.memory_space<vmem>>, vector<32x128xf32>
    tpu.vector_store %arg4[%c448, %c0_62], %214 {strides = array<i32>} : memref<800x128xf32, #tpu.memory_space<vmem>>, vector<32x128xf32>,
    %216 = arith.addf %202, %214 : vector<32x128xf32>
    %c15 = arith.constant 15 : index
    %c0_63 = arith.constant 0 : index
    %217 = vector.load %arg1[%c15, %c0_63] : memref<25x128xf32, #tpu.memory_space<vmem>>, vector<1x128xf32>
    %218 = vector.broadcast %217 : vector<1x128xf32> to vector<32x128xf32>
    %219 = arith.subf %218, %5 : vector<32x128xf32>
    %220 = arith.mulf %219, %219 : vector<32x128xf32>
    %cst_64 = arith.constant -4.805000e+02 : f32
    %221 = vector.broadcast %cst_64 : f32 to vector<32x128xf32>
    %222 = arith.mulf %221, %220 : vector<32x128xf32>
    %223 = math.exp %222 : vector<32x128xf32>
    %cst_65 = arith.constant dense<0.000000e+00> : vector<128xf32>
    %224 = vector.multi_reduction <add>, %223, %cst_65 [0] : vector<32x128xf32> to vector<128xf32>
    %225 = vector.shape_cast %224 : vector<128xf32> to vector<1x128xf32>
    %226 = tpu.reciprocal %225 {approx = true} : vector<1x128xf32> -> vector<1x128xf32>
    %227 = vector.broadcast %226 : vector<1x128xf32> to vector<32x128xf32>
    %228 = arith.mulf %223, %227 : vector<32x128xf32>
    %c480 = arith.constant 480 : index
    %c0_66 = arith.constant 0 : index
    %229 = vector.load %arg4[%c480, %c0_66] : memref<800x128xf32, #tpu.memory_space<vmem>>, vector<32x128xf32>
    tpu.vector_store %arg4[%c480, %c0_66], %228 {strides = array<i32>} : memref<800x128xf32, #tpu.memory_space<vmem>>, vector<32x128xf32>,
    %230 = arith.addf %216, %228 : vector<32x128xf32>
    %c16 = arith.constant 16 : index
    %c0_67 = arith.constant 0 : index
    %231 = vector.load %arg1[%c16, %c0_67] : memref<25x128xf32, #tpu.memory_space<vmem>>, vector<1x128xf32>
    %232 = vector.broadcast %231 : vector<1x128xf32> to vector<32x128xf32>
    %233 = arith.subf %232, %5 : vector<32x128xf32>
    %234 = arith.mulf %233, %233 : vector<32x128xf32>
    %cst_68 = arith.constant -4.805000e+02 : f32
    %235 = vector.broadcast %cst_68 : f32 to vector<32x128xf32>
    %236 = arith.mulf %235, %234 : vector<32x128xf32>
    %237 = math.exp %236 : vector<32x128xf32>
    %cst_69 = arith.constant dense<0.000000e+00> : vector<128xf32>
    %238 = vector.multi_reduction <add>, %237, %cst_69 [0] : vector<32x128xf32> to vector<128xf32>
    %239 = vector.shape_cast %238 : vector<128xf32> to vector<1x128xf32>
    %240 = tpu.reciprocal %239 {approx = true} : vector<1x128xf32> -> vector<1x128xf32>
    %241 = vector.broadcast %240 : vector<1x128xf32> to vector<32x128xf32>
    %242 = arith.mulf %237, %241 : vector<32x128xf32>
    %c512 = arith.constant 512 : index
    %c0_70 = arith.constant 0 : index
    %243 = vector.load %arg4[%c512, %c0_70] : memref<800x128xf32, #tpu.memory_space<vmem>>, vector<32x128xf32>
    tpu.vector_store %arg4[%c512, %c0_70], %242 {strides = array<i32>} : memref<800x128xf32, #tpu.memory_space<vmem>>, vector<32x128xf32>,
    %244 = arith.addf %230, %242 : vector<32x128xf32>
    %c17 = arith.constant 17 : index
    %c0_71 = arith.constant 0 : index
    %245 = vector.load %arg1[%c17, %c0_71] : memref<25x128xf32, #tpu.memory_space<vmem>>, vector<1x128xf32>
    %246 = vector.broadcast %245 : vector<1x128xf32> to vector<32x128xf32>
    %247 = arith.subf %246, %5 : vector<32x128xf32>
    %248 = arith.mulf %247, %247 : vector<32x128xf32>
    %cst_72 = arith.constant -4.805000e+02 : f32
    %249 = vector.broadcast %cst_72 : f32 to vector<32x128xf32>
    %250 = arith.mulf %249, %248 : vector<32x128xf32>
    %251 = math.exp %250 : vector<32x128xf32>
    %cst_73 = arith.constant dense<0.000000e+00> : vector<128xf32>
    %252 = vector.multi_reduction <add>, %251, %cst_73 [0] : vector<32x128xf32> to vector<128xf32>
    %253 = vector.shape_cast %252 : vector<128xf32> to vector<1x128xf32>
    %254 = tpu.reciprocal %253 {approx = true} : vector<1x128xf32> -> vector<1x128xf32>
    %255 = vector.broadcast %254 : vector<1x128xf32> to vector<32x128xf32>
    %256 = arith.mulf %251, %255 : vector<32x128xf32>
    %c544 = arith.constant 544 : index
    %c0_74 = arith.constant 0 : index
    %257 = vector.load %arg4[%c544, %c0_74] : memref<800x128xf32, #tpu.memory_space<vmem>>, vector<32x128xf32>
    tpu.vector_store %arg4[%c544, %c0_74], %256 {strides = array<i32>} : memref<800x128xf32, #tpu.memory_space<vmem>>, vector<32x128xf32>,
    %258 = arith.addf %244, %256 : vector<32x128xf32>
    %c18 = arith.constant 18 : index
    %c0_75 = arith.constant 0 : index
    %259 = vector.load %arg1[%c18, %c0_75] : memref<25x128xf32, #tpu.memory_space<vmem>>, vector<1x128xf32>
    %260 = vector.broadcast %259 : vector<1x128xf32> to vector<32x128xf32>
    %261 = arith.subf %260, %5 : vector<32x128xf32>
    %262 = arith.mulf %261, %261 : vector<32x128xf32>
    %cst_76 = arith.constant -4.805000e+02 : f32
    %263 = vector.broadcast %cst_76 : f32 to vector<32x128xf32>
    %264 = arith.mulf %263, %262 : vector<32x128xf32>
    %265 = math.exp %264 : vector<32x128xf32>
    %cst_77 = arith.constant dense<0.000000e+00> : vector<128xf32>
    %266 = vector.multi_reduction <add>, %265, %cst_77 [0] : vector<32x128xf32> to vector<128xf32>
    %267 = vector.shape_cast %266 : vector<128xf32> to vector<1x128xf32>
    %268 = tpu.reciprocal %267 {approx = true} : vector<1x128xf32> -> vector<1x128xf32>
    %269 = vector.broadcast %268 : vector<1x128xf32> to vector<32x128xf32>
    %270 = arith.mulf %265, %269 : vector<32x128xf32>
    %c576 = arith.constant 576 : index
    %c0_78 = arith.constant 0 : index
    %271 = vector.load %arg4[%c576, %c0_78] : memref<800x128xf32, #tpu.memory_space<vmem>>, vector<32x128xf32>
    tpu.vector_store %arg4[%c576, %c0_78], %270 {strides = array<i32>} : memref<800x128xf32, #tpu.memory_space<vmem>>, vector<32x128xf32>,
    %272 = arith.addf %258, %270 : vector<32x128xf32>
    %c19 = arith.constant 19 : index
    %c0_79 = arith.constant 0 : index
    %273 = vector.load %arg1[%c19, %c0_79] : memref<25x128xf32, #tpu.memory_space<vmem>>, vector<1x128xf32>
    %274 = vector.broadcast %273 : vector<1x128xf32> to vector<32x128xf32>
    %275 = arith.subf %274, %5 : vector<32x128xf32>
    %276 = arith.mulf %275, %275 : vector<32x128xf32>
    %cst_80 = arith.constant -4.805000e+02 : f32
    %277 = vector.broadcast %cst_80 : f32 to vector<32x128xf32>
    %278 = arith.mulf %277, %276 : vector<32x128xf32>
    %279 = math.exp %278 : vector<32x128xf32>
    %cst_81 = arith.constant dense<0.000000e+00> : vector<128xf32>
    %280 = vector.multi_reduction <add>, %279, %cst_81 [0] : vector<32x128xf32> to vector<128xf32>
    %281 = vector.shape_cast %280 : vector<128xf32> to vector<1x128xf32>
    %282 = tpu.reciprocal %281 {approx = true} : vector<1x128xf32> -> vector<1x128xf32>
    %283 = vector.broadcast %282 : vector<1x128xf32> to vector<32x128xf32>
    %284 = arith.mulf %279, %283 : vector<32x128xf32>
    %c608 = arith.constant 608 : index
    %c0_82 = arith.constant 0 : index
    %285 = vector.load %arg4[%c608, %c0_82] : memref<800x128xf32, #tpu.memory_space<vmem>>, vector<32x128xf32>
    tpu.vector_store %arg4[%c608, %c0_82], %284 {strides = array<i32>} : memref<800x128xf32, #tpu.memory_space<vmem>>, vector<32x128xf32>,
    %286 = arith.addf %272, %284 : vector<32x128xf32>
    %c20 = arith.constant 20 : index
    %c0_83 = arith.constant 0 : index
    %287 = vector.load %arg1[%c20, %c0_83] : memref<25x128xf32, #tpu.memory_space<vmem>>, vector<1x128xf32>
    %288 = vector.broadcast %287 : vector<1x128xf32> to vector<32x128xf32>
    %289 = arith.subf %288, %5 : vector<32x128xf32>
    %290 = arith.mulf %289, %289 : vector<32x128xf32>
    %cst_84 = arith.constant -4.805000e+02 : f32
    %291 = vector.broadcast %cst_84 : f32 to vector<32x128xf32>
    %292 = arith.mulf %291, %290 : vector<32x128xf32>
    %293 = math.exp %292 : vector<32x128xf32>
    %cst_85 = arith.constant dense<0.000000e+00> : vector<128xf32>
    %294 = vector.multi_reduction <add>, %293, %cst_85 [0] : vector<32x128xf32> to vector<128xf32>
    %295 = vector.shape_cast %294 : vector<128xf32> to vector<1x128xf32>
    %296 = tpu.reciprocal %295 {approx = true} : vector<1x128xf32> -> vector<1x128xf32>
    %297 = vector.broadcast %296 : vector<1x128xf32> to vector<32x128xf32>
    %298 = arith.mulf %293, %297 : vector<32x128xf32>
    %c640 = arith.constant 640 : index
    %c0_86 = arith.constant 0 : index
    %299 = vector.load %arg4[%c640, %c0_86] : memref<800x128xf32, #tpu.memory_space<vmem>>, vector<32x128xf32>
    tpu.vector_store %arg4[%c640, %c0_86], %298 {strides = array<i32>} : memref<800x128xf32, #tpu.memory_space<vmem>>, vector<32x128xf32>,
    %300 = arith.addf %286, %298 : vector<32x128xf32>
    %c21 = arith.constant 21 : index
    %c0_87 = arith.constant 0 : index
    %301 = vector.load %arg1[%c21, %c0_87] : memref<25x128xf32, #tpu.memory_space<vmem>>, vector<1x128xf32>
    %302 = vector.broadcast %301 : vector<1x128xf32> to vector<32x128xf32>
    %303 = arith.subf %302, %5 : vector<32x128xf32>
    %304 = arith.mulf %303, %303 : vector<32x128xf32>
    %cst_88 = arith.constant -4.805000e+02 : f32
    %305 = vector.broadcast %cst_88 : f32 to vector<32x128xf32>
    %306 = arith.mulf %305, %304 : vector<32x128xf32>
    %307 = math.exp %306 : vector<32x128xf32>
    %cst_89 = arith.constant dense<0.000000e+00> : vector<128xf32>
    %308 = vector.multi_reduction <add>, %307, %cst_89 [0] : vector<32x128xf32> to vector<128xf32>
    %309 = vector.shape_cast %308 : vector<128xf32> to vector<1x128xf32>
    %310 = tpu.reciprocal %309 {approx = true} : vector<1x128xf32> -> vector<1x128xf32>
    %311 = vector.broadcast %310 : vector<1x128xf32> to vector<32x128xf32>
    %312 = arith.mulf %307, %311 : vector<32x128xf32>
    %c672 = arith.constant 672 : index
    %c0_90 = arith.constant 0 : index
    %313 = vector.load %arg4[%c672, %c0_90] : memref<800x128xf32, #tpu.memory_space<vmem>>, vector<32x128xf32>
    tpu.vector_store %arg4[%c672, %c0_90], %312 {strides = array<i32>} : memref<800x128xf32, #tpu.memory_space<vmem>>, vector<32x128xf32>,
    %314 = arith.addf %300, %312 : vector<32x128xf32>
    %c22 = arith.constant 22 : index
    %c0_91 = arith.constant 0 : index
    %315 = vector.load %arg1[%c22, %c0_91] : memref<25x128xf32, #tpu.memory_space<vmem>>, vector<1x128xf32>
    %316 = vector.broadcast %315 : vector<1x128xf32> to vector<32x128xf32>
    %317 = arith.subf %316, %5 : vector<32x128xf32>
    %318 = arith.mulf %317, %317 : vector<32x128xf32>
    %cst_92 = arith.constant -4.805000e+02 : f32
    %319 = vector.broadcast %cst_92 : f32 to vector<32x128xf32>
    %320 = arith.mulf %319, %318 : vector<32x128xf32>
    %321 = math.exp %320 : vector<32x128xf32>
    %cst_93 = arith.constant dense<0.000000e+00> : vector<128xf32>
    %322 = vector.multi_reduction <add>, %321, %cst_93 [0] : vector<32x128xf32> to vector<128xf32>
    %323 = vector.shape_cast %322 : vector<128xf32> to vector<1x128xf32>
    %324 = tpu.reciprocal %323 {approx = true} : vector<1x128xf32> -> vector<1x128xf32>
    %325 = vector.broadcast %324 : vector<1x128xf32> to vector<32x128xf32>
    %326 = arith.mulf %321, %325 : vector<32x128xf32>
    %c704 = arith.constant 704 : index
    %c0_94 = arith.constant 0 : index
    %327 = vector.load %arg4[%c704, %c0_94] : memref<800x128xf32, #tpu.memory_space<vmem>>, vector<32x128xf32>
    tpu.vector_store %arg4[%c704, %c0_94], %326 {strides = array<i32>} : memref<800x128xf32, #tpu.memory_space<vmem>>, vector<32x128xf32>,
    %328 = arith.addf %314, %326 : vector<32x128xf32>
    %c23 = arith.constant 23 : index
    %c0_95 = arith.constant 0 : index
    %329 = vector.load %arg1[%c23, %c0_95] : memref<25x128xf32, #tpu.memory_space<vmem>>, vector<1x128xf32>
    %330 = vector.broadcast %329 : vector<1x128xf32> to vector<32x128xf32>
    %331 = arith.subf %330, %5 : vector<32x128xf32>
    %332 = arith.mulf %331, %331 : vector<32x128xf32>
    %cst_96 = arith.constant -4.805000e+02 : f32
    %333 = vector.broadcast %cst_96 : f32 to vector<32x128xf32>
    %334 = arith.mulf %333, %332 : vector<32x128xf32>
    %335 = math.exp %334 : vector<32x128xf32>
    %cst_97 = arith.constant dense<0.000000e+00> : vector<128xf32>
    %336 = vector.multi_reduction <add>, %335, %cst_97 [0] : vector<32x128xf32> to vector<128xf32>
    %337 = vector.shape_cast %336 : vector<128xf32> to vector<1x128xf32>
    %338 = tpu.reciprocal %337 {approx = true} : vector<1x128xf32> -> vector<1x128xf32>
    %339 = vector.broadcast %338 : vector<1x128xf32> to vector<32x128xf32>
    %340 = arith.mulf %335, %339 : vector<32x128xf32>
    %c736 = arith.constant 736 : index
    %c0_98 = arith.constant 0 : index
    %341 = vector.load %arg4[%c736, %c0_98] : memref<800x128xf32, #tpu.memory_space<vmem>>, vector<32x128xf32>
    tpu.vector_store %arg4[%c736, %c0_98], %340 {strides = array<i32>} : memref<800x128xf32, #tpu.memory_space<vmem>>, vector<32x128xf32>,
    %342 = arith.addf %328, %340 : vector<32x128xf32>
    %c24 = arith.constant 24 : index
    %c0_99 = arith.constant 0 : index
    %343 = vector.load %arg1[%c24, %c0_99] : memref<25x128xf32, #tpu.memory_space<vmem>>, vector<1x128xf32>
    %344 = vector.broadcast %343 : vector<1x128xf32> to vector<32x128xf32>
    %345 = arith.subf %344, %5 : vector<32x128xf32>
    %346 = arith.mulf %345, %345 : vector<32x128xf32>
    %cst_100 = arith.constant -4.805000e+02 : f32
    %347 = vector.broadcast %cst_100 : f32 to vector<32x128xf32>
    %348 = arith.mulf %347, %346 : vector<32x128xf32>
    %349 = math.exp %348 : vector<32x128xf32>
    %cst_101 = arith.constant dense<0.000000e+00> : vector<128xf32>
    %350 = vector.multi_reduction <add>, %349, %cst_101 [0] : vector<32x128xf32> to vector<128xf32>
    %351 = vector.shape_cast %350 : vector<128xf32> to vector<1x128xf32>
    %352 = tpu.reciprocal %351 {approx = true} : vector<1x128xf32> -> vector<1x128xf32>
    %353 = vector.broadcast %352 : vector<1x128xf32> to vector<32x128xf32>
    %354 = arith.mulf %349, %353 : vector<32x128xf32>
    %c768 = arith.constant 768 : index
    %c0_102 = arith.constant 0 : index
    %355 = vector.load %arg4[%c768, %c0_102] : memref<800x128xf32, #tpu.memory_space<vmem>>, vector<32x128xf32>
    tpu.vector_store %arg4[%c768, %c0_102], %354 {strides = array<i32>} : memref<800x128xf32, #tpu.memory_space<vmem>>, vector<32x128xf32>,
    %356 = arith.addf %342, %354 : vector<32x128xf32>
    %cst_103 = arith.constant 4.000000e-02 : f32
    %357 = vector.broadcast %cst_103 : f32 to vector<32x128xf32>
    %358 = arith.mulf %356, %357 : vector<32x128xf32>
    %c0_104 = arith.constant 0 : index
    %c0_105 = arith.constant 0 : index
    %359 = vector.load %arg6[%c0_104, %c0_105] : memref<32x128xf32, #tpu.memory_space<vmem>>, vector<32x128xf32>
    tpu.vector_store %arg6[%c0_104, %c0_105], %358 {strides = array<i32>} : memref<32x128xf32, #tpu.memory_space<vmem>>, vector<32x128xf32>,
    %cst_106 = arith.constant 0.000000e+00 : f32
    %360 = vector.broadcast %cst_106 : f32 to vector<32x128xf32>
    %c0_107 = arith.constant 0 : index
    %c0_108 = arith.constant 0 : index
    %361 = vector.load %arg2[%c0_107, %c0_108] : memref<25x128xf32, #tpu.memory_space<vmem>>, vector<1x128xf32>
    %362 = vector.broadcast %361 : vector<1x128xf32> to vector<32x128xf32>
    %363 = arith.subf %362, %5 : vector<32x128xf32>
    %364 = arith.mulf %363, %363 : vector<32x128xf32>
    %cst_109 = arith.constant -4.805000e+02 : f32
    %365 = vector.broadcast %cst_109 : f32 to vector<32x128xf32>
    %366 = arith.mulf %365, %364 : vector<32x128xf32>
    %367 = math.exp %366 : vector<32x128xf32>
    %cst_110 = arith.constant dense<0.000000e+00> : vector<128xf32>
    %368 = vector.multi_reduction <add>, %367, %cst_110 [0] : vector<32x128xf32> to vector<128xf32>
    %369 = vector.shape_cast %368 : vector<128xf32> to vector<1x128xf32>
    %370 = tpu.reciprocal %369 {approx = true} : vector<1x128xf32> -> vector<1x128xf32>
    %371 = vector.broadcast %370 : vector<1x128xf32> to vector<32x128xf32>
    %372 = arith.mulf %367, %371 : vector<32x128xf32>
    %c0_111 = arith.constant 0 : index
    %c0_112 = arith.constant 0 : index
    %373 = vector.load %arg5[%c0_111, %c0_112] : memref<800x128xf32, #tpu.memory_space<vmem>>, vector<32x128xf32>
    tpu.vector_store %arg5[%c0_111, %c0_112], %372 {strides = array<i32>} : memref<800x128xf32, #tpu.memory_space<vmem>>, vector<32x128xf32>,
    %374 = arith.addf %360, %372 : vector<32x128xf32>
    %c1_113 = arith.constant 1 : index
    %c0_114 = arith.constant 0 : index
    %375 = vector.load %arg2[%c1_113, %c0_114] : memref<25x128xf32, #tpu.memory_space<vmem>>, vector<1x128xf32>
    %376 = vector.broadcast %375 : vector<1x128xf32> to vector<32x128xf32>
    %377 = arith.subf %376, %5 : vector<32x128xf32>
    %378 = arith.mulf %377, %377 : vector<32x128xf32>
    %cst_115 = arith.constant -4.805000e+02 : f32
    %379 = vector.broadcast %cst_115 : f32 to vector<32x128xf32>
    %380 = arith.mulf %379, %378 : vector<32x128xf32>
    %381 = math.exp %380 : vector<32x128xf32>
    %cst_116 = arith.constant dense<0.000000e+00> : vector<128xf32>
    %382 = vector.multi_reduction <add>, %381, %cst_116 [0] : vector<32x128xf32> to vector<128xf32>
    %383 = vector.shape_cast %382 : vector<128xf32> to vector<1x128xf32>
    %384 = tpu.reciprocal %383 {approx = true} : vector<1x128xf32> -> vector<1x128xf32>
    %385 = vector.broadcast %384 : vector<1x128xf32> to vector<32x128xf32>
    %386 = arith.mulf %381, %385 : vector<32x128xf32>
    %c32_117 = arith.constant 32 : index
    %c0_118 = arith.constant 0 : index
    %387 = vector.load %arg5[%c32_117, %c0_118] : memref<800x128xf32, #tpu.memory_space<vmem>>, vector<32x128xf32>
    tpu.vector_store %arg5[%c32_117, %c0_118], %386 {strides = array<i32>} : memref<800x128xf32, #tpu.memory_space<vmem>>, vector<32x128xf32>,
    %388 = arith.addf %374, %386 : vector<32x128xf32>
    %c2_119 = arith.constant 2 : index
    %c0_120 = arith.constant 0 : index
    %389 = vector.load %arg2[%c2_119, %c0_120] : memref<25x128xf32, #tpu.memory_space<vmem>>, vector<1x128xf32>
    %390 = vector.broadcast %389 : vector<1x128xf32> to vector<32x128xf32>
    %391 = arith.subf %390, %5 : vector<32x128xf32>
    %392 = arith.mulf %391, %391 : vector<32x128xf32>
    %cst_121 = arith.constant -4.805000e+02 : f32
    %393 = vector.broadcast %cst_121 : f32 to vector<32x128xf32>
    %394 = arith.mulf %393, %392 : vector<32x128xf32>
    %395 = math.exp %394 : vector<32x128xf32>
    %cst_122 = arith.constant dense<0.000000e+00> : vector<128xf32>
    %396 = vector.multi_reduction <add>, %395, %cst_122 [0] : vector<32x128xf32> to vector<128xf32>
    %397 = vector.shape_cast %396 : vector<128xf32> to vector<1x128xf32>
    %398 = tpu.reciprocal %397 {approx = true} : vector<1x128xf32> -> vector<1x128xf32>
    %399 = vector.broadcast %398 : vector<1x128xf32> to vector<32x128xf32>
    %400 = arith.mulf %395, %399 : vector<32x128xf32>
    %c64_123 = arith.constant 64 : index
    %c0_124 = arith.constant 0 : index
    %401 = vector.load %arg5[%c64_123, %c0_124] : memref<800x128xf32, #tpu.memory_space<vmem>>, vector<32x128xf32>
    tpu.vector_store %arg5[%c64_123, %c0_124], %400 {strides = array<i32>} : memref<800x128xf32, #tpu.memory_space<vmem>>, vector<32x128xf32>,
    %402 = arith.addf %388, %400 : vector<32x128xf32>
    %c3_125 = arith.constant 3 : index
    %c0_126 = arith.constant 0 : index
    %403 = vector.load %arg2[%c3_125, %c0_126] : memref<25x128xf32, #tpu.memory_space<vmem>>, vector<1x128xf32>
    %404 = vector.broadcast %403 : vector<1x128xf32> to vector<32x128xf32>
    %405 = arith.subf %404, %5 : vector<32x128xf32>
    %406 = arith.mulf %405, %405 : vector<32x128xf32>
    %cst_127 = arith.constant -4.805000e+02 : f32
    %407 = vector.broadcast %cst_127 : f32 to vector<32x128xf32>
    %408 = arith.mulf %407, %406 : vector<32x128xf32>
    %409 = math.exp %408 : vector<32x128xf32>
    %cst_128 = arith.constant dense<0.000000e+00> : vector<128xf32>
    %410 = vector.multi_reduction <add>, %409, %cst_128 [0] : vector<32x128xf32> to vector<128xf32>
    %411 = vector.shape_cast %410 : vector<128xf32> to vector<1x128xf32>
    %412 = tpu.reciprocal %411 {approx = true} : vector<1x128xf32> -> vector<1x128xf32>
    %413 = vector.broadcast %412 : vector<1x128xf32> to vector<32x128xf32>
    %414 = arith.mulf %409, %413 : vector<32x128xf32>
    %c96_129 = arith.constant 96 : index
    %c0_130 = arith.constant 0 : index
    %415 = vector.load %arg5[%c96_129, %c0_130] : memref<800x128xf32, #tpu.memory_space<vmem>>, vector<32x128xf32>
    tpu.vector_store %arg5[%c96_129, %c0_130], %414 {strides = array<i32>} : memref<800x128xf32, #tpu.memory_space<vmem>>, vector<32x128xf32>,
    %416 = arith.addf %402, %414 : vector<32x128xf32>
    %c4_131 = arith.constant 4 : index
    %c0_132 = arith.constant 0 : index
    %417 = vector.load %arg2[%c4_131, %c0_132] : memref<25x128xf32, #tpu.memory_space<vmem>>, vector<1x128xf32>
    %418 = vector.broadcast %417 : vector<1x128xf32> to vector<32x128xf32>
    %419 = arith.subf %418, %5 : vector<32x128xf32>
    %420 = arith.mulf %419, %419 : vector<32x128xf32>
    %cst_133 = arith.constant -4.805000e+02 : f32
    %421 = vector.broadcast %cst_133 : f32 to vector<32x128xf32>
    %422 = arith.mulf %421, %420 : vector<32x128xf32>
    %423 = math.exp %422 : vector<32x128xf32>
    %cst_134 = arith.constant dense<0.000000e+00> : vector<128xf32>
    %424 = vector.multi_reduction <add>, %423, %cst_134 [0] : vector<32x128xf32> to vector<128xf32>
    %425 = vector.shape_cast %424 : vector<128xf32> to vector<1x128xf32>
    %426 = tpu.reciprocal %425 {approx = true} : vector<1x128xf32> -> vector<1x128xf32>
    %427 = vector.broadcast %426 : vector<1x128xf32> to vector<32x128xf32>
    %428 = arith.mulf %423, %427 : vector<32x128xf32>
    %c128_135 = arith.constant 128 : index
    %c0_136 = arith.constant 0 : index
    %429 = vector.load %arg5[%c128_135, %c0_136] : memref<800x128xf32, #tpu.memory_space<vmem>>, vector<32x128xf32>
    tpu.vector_store %arg5[%c128_135, %c0_136], %428 {strides = array<i32>} : memref<800x128xf32, #tpu.memory_space<vmem>>, vector<32x128xf32>,
    %430 = arith.addf %416, %428 : vector<32x128xf32>
    %c5_137 = arith.constant 5 : index
    %c0_138 = arith.constant 0 : index
    %431 = vector.load %arg2[%c5_137, %c0_138] : memref<25x128xf32, #tpu.memory_space<vmem>>, vector<1x128xf32>
    %432 = vector.broadcast %431 : vector<1x128xf32> to vector<32x128xf32>
    %433 = arith.subf %432, %5 : vector<32x128xf32>
    %434 = arith.mulf %433, %433 : vector<32x128xf32>
    %cst_139 = arith.constant -4.805000e+02 : f32
    %435 = vector.broadcast %cst_139 : f32 to vector<32x128xf32>
    %436 = arith.mulf %435, %434 : vector<32x128xf32>
    %437 = math.exp %436 : vector<32x128xf32>
    %cst_140 = arith.constant dense<0.000000e+00> : vector<128xf32>
    %438 = vector.multi_reduction <add>, %437, %cst_140 [0] : vector<32x128xf32> to vector<128xf32>
    %439 = vector.shape_cast %438 : vector<128xf32> to vector<1x128xf32>
    %440 = tpu.reciprocal %439 {approx = true} : vector<1x128xf32> -> vector<1x128xf32>
    %441 = vector.broadcast %440 : vector<1x128xf32> to vector<32x128xf32>
    %442 = arith.mulf %437, %441 : vector<32x128xf32>
    %c160_141 = arith.constant 160 : index
    %c0_142 = arith.constant 0 : index
    %443 = vector.load %arg5[%c160_141, %c0_142] : memref<800x128xf32, #tpu.memory_space<vmem>>, vector<32x128xf32>
    tpu.vector_store %arg5[%c160_141, %c0_142], %442 {strides = array<i32>} : memref<800x128xf32, #tpu.memory_space<vmem>>, vector<32x128xf32>,
    %444 = arith.addf %430, %442 : vector<32x128xf32>
    %c6_143 = arith.constant 6 : index
    %c0_144 = arith.constant 0 : index
    %445 = vector.load %arg2[%c6_143, %c0_144] : memref<25x128xf32, #tpu.memory_space<vmem>>, vector<1x128xf32>
    %446 = vector.broadcast %445 : vector<1x128xf32> to vector<32x128xf32>
    %447 = arith.subf %446, %5 : vector<32x128xf32>
    %448 = arith.mulf %447, %447 : vector<32x128xf32>
    %cst_145 = arith.constant -4.805000e+02 : f32
    %449 = vector.broadcast %cst_145 : f32 to vector<32x128xf32>
    %450 = arith.mulf %449, %448 : vector<32x128xf32>
    %451 = math.exp %450 : vector<32x128xf32>
    %cst_146 = arith.constant dense<0.000000e+00> : vector<128xf32>
    %452 = vector.multi_reduction <add>, %451, %cst_146 [0] : vector<32x128xf32> to vector<128xf32>
    %453 = vector.shape_cast %452 : vector<128xf32> to vector<1x128xf32>
    %454 = tpu.reciprocal %453 {approx = true} : vector<1x128xf32> -> vector<1x128xf32>
    %455 = vector.broadcast %454 : vector<1x128xf32> to vector<32x128xf32>
    %456 = arith.mulf %451, %455 : vector<32x128xf32>
    %c192_147 = arith.constant 192 : index
    %c0_148 = arith.constant 0 : index
    %457 = vector.load %arg5[%c192_147, %c0_148] : memref<800x128xf32, #tpu.memory_space<vmem>>, vector<32x128xf32>
    tpu.vector_store %arg5[%c192_147, %c0_148], %456 {strides = array<i32>} : memref<800x128xf32, #tpu.memory_space<vmem>>, vector<32x128xf32>,
    %458 = arith.addf %444, %456 : vector<32x128xf32>
    %c7_149 = arith.constant 7 : index
    %c0_150 = arith.constant 0 : index
    %459 = vector.load %arg2[%c7_149, %c0_150] : memref<25x128xf32, #tpu.memory_space<vmem>>, vector<1x128xf32>
    %460 = vector.broadcast %459 : vector<1x128xf32> to vector<32x128xf32>
    %461 = arith.subf %460, %5 : vector<32x128xf32>
    %462 = arith.mulf %461, %461 : vector<32x128xf32>
    %cst_151 = arith.constant -4.805000e+02 : f32
    %463 = vector.broadcast %cst_151 : f32 to vector<32x128xf32>
    %464 = arith.mulf %463, %462 : vector<32x128xf32>
    %465 = math.exp %464 : vector<32x128xf32>
    %cst_152 = arith.constant dense<0.000000e+00> : vector<128xf32>
    %466 = vector.multi_reduction <add>, %465, %cst_152 [0] : vector<32x128xf32> to vector<128xf32>
    %467 = vector.shape_cast %466 : vector<128xf32> to vector<1x128xf32>
    %468 = tpu.reciprocal %467 {approx = true} : vector<1x128xf32> -> vector<1x128xf32>
    %469 = vector.broadcast %468 : vector<1x128xf32> to vector<32x128xf32>
    %470 = arith.mulf %465, %469 : vector<32x128xf32>
    %c224_153 = arith.constant 224 : index
    %c0_154 = arith.constant 0 : index
    %471 = vector.load %arg5[%c224_153, %c0_154] : memref<800x128xf32, #tpu.memory_space<vmem>>, vector<32x128xf32>
    tpu.vector_store %arg5[%c224_153, %c0_154], %470 {strides = array<i32>} : memref<800x128xf32, #tpu.memory_space<vmem>>, vector<32x128xf32>,
    %472 = arith.addf %458, %470 : vector<32x128xf32>
    %c8_155 = arith.constant 8 : index
    %c0_156 = arith.constant 0 : index
    %473 = vector.load %arg2[%c8_155, %c0_156] : memref<25x128xf32, #tpu.memory_space<vmem>>, vector<1x128xf32>
    %474 = vector.broadcast %473 : vector<1x128xf32> to vector<32x128xf32>
    %475 = arith.subf %474, %5 : vector<32x128xf32>
    %476 = arith.mulf %475, %475 : vector<32x128xf32>
    %cst_157 = arith.constant -4.805000e+02 : f32
    %477 = vector.broadcast %cst_157 : f32 to vector<32x128xf32>
    %478 = arith.mulf %477, %476 : vector<32x128xf32>
    %479 = math.exp %478 : vector<32x128xf32>
    %cst_158 = arith.constant dense<0.000000e+00> : vector<128xf32>
    %480 = vector.multi_reduction <add>, %479, %cst_158 [0] : vector<32x128xf32> to vector<128xf32>
    %481 = vector.shape_cast %480 : vector<128xf32> to vector<1x128xf32>
    %482 = tpu.reciprocal %481 {approx = true} : vector<1x128xf32> -> vector<1x128xf32>
    %483 = vector.broadcast %482 : vector<1x128xf32> to vector<32x128xf32>
    %484 = arith.mulf %479, %483 : vector<32x128xf32>
    %c256_159 = arith.constant 256 : index
    %c0_160 = arith.constant 0 : index
    %485 = vector.load %arg5[%c256_159, %c0_160] : memref<800x128xf32, #tpu.memory_space<vmem>>, vector<32x128xf32>
    tpu.vector_store %arg5[%c256_159, %c0_160], %484 {strides = array<i32>} : memref<800x128xf32, #tpu.memory_space<vmem>>, vector<32x128xf32>,
    %486 = arith.addf %472, %484 : vector<32x128xf32>
    %c9_161 = arith.constant 9 : index
    %c0_162 = arith.constant 0 : index
    %487 = vector.load %arg2[%c9_161, %c0_162] : memref<25x128xf32, #tpu.memory_space<vmem>>, vector<1x128xf32>
    %488 = vector.broadcast %487 : vector<1x128xf32> to vector<32x128xf32>
    %489 = arith.subf %488, %5 : vector<32x128xf32>
    %490 = arith.mulf %489, %489 : vector<32x128xf32>
    %cst_163 = arith.constant -4.805000e+02 : f32
    %491 = vector.broadcast %cst_163 : f32 to vector<32x128xf32>
    %492 = arith.mulf %491, %490 : vector<32x128xf32>
    %493 = math.exp %492 : vector<32x128xf32>
    %cst_164 = arith.constant dense<0.000000e+00> : vector<128xf32>
    %494 = vector.multi_reduction <add>, %493, %cst_164 [0] : vector<32x128xf32> to vector<128xf32>
    %495 = vector.shape_cast %494 : vector<128xf32> to vector<1x128xf32>
    %496 = tpu.reciprocal %495 {approx = true} : vector<1x128xf32> -> vector<1x128xf32>
    %497 = vector.broadcast %496 : vector<1x128xf32> to vector<32x128xf32>
    %498 = arith.mulf %493, %497 : vector<32x128xf32>
    %c288_165 = arith.constant 288 : index
    %c0_166 = arith.constant 0 : index
    %499 = vector.load %arg5[%c288_165, %c0_166] : memref<800x128xf32, #tpu.memory_space<vmem>>, vector<32x128xf32>
    tpu.vector_store %arg5[%c288_165, %c0_166], %498 {strides = array<i32>} : memref<800x128xf32, #tpu.memory_space<vmem>>, vector<32x128xf32>,
    %500 = arith.addf %486, %498 : vector<32x128xf32>
    %c10_167 = arith.constant 10 : index
    %c0_168 = arith.constant 0 : index
    %501 = vector.load %arg2[%c10_167, %c0_168] : memref<25x128xf32, #tpu.memory_space<vmem>>, vector<1x128xf32>
    %502 = vector.broadcast %501 : vector<1x128xf32> to vector<32x128xf32>
    %503 = arith.subf %502, %5 : vector<32x128xf32>
    %504 = arith.mulf %503, %503 : vector<32x128xf32>
    %cst_169 = arith.constant -4.805000e+02 : f32
    %505 = vector.broadcast %cst_169 : f32 to vector<32x128xf32>
    %506 = arith.mulf %505, %504 : vector<32x128xf32>
    %507 = math.exp %506 : vector<32x128xf32>
    %cst_170 = arith.constant dense<0.000000e+00> : vector<128xf32>
    %508 = vector.multi_reduction <add>, %507, %cst_170 [0] : vector<32x128xf32> to vector<128xf32>
    %509 = vector.shape_cast %508 : vector<128xf32> to vector<1x128xf32>
    %510 = tpu.reciprocal %509 {approx = true} : vector<1x128xf32> -> vector<1x128xf32>
    %511 = vector.broadcast %510 : vector<1x128xf32> to vector<32x128xf32>
    %512 = arith.mulf %507, %511 : vector<32x128xf32>
    %c320_171 = arith.constant 320 : index
    %c0_172 = arith.constant 0 : index
    %513 = vector.load %arg5[%c320_171, %c0_172] : memref<800x128xf32, #tpu.memory_space<vmem>>, vector<32x128xf32>
    tpu.vector_store %arg5[%c320_171, %c0_172], %512 {strides = array<i32>} : memref<800x128xf32, #tpu.memory_space<vmem>>, vector<32x128xf32>,
    %514 = arith.addf %500, %512 : vector<32x128xf32>
    %c11_173 = arith.constant 11 : index
    %c0_174 = arith.constant 0 : index
    %515 = vector.load %arg2[%c11_173, %c0_174] : memref<25x128xf32, #tpu.memory_space<vmem>>, vector<1x128xf32>
    %516 = vector.broadcast %515 : vector<1x128xf32> to vector<32x128xf32>
    %517 = arith.subf %516, %5 : vector<32x128xf32>
    %518 = arith.mulf %517, %517 : vector<32x128xf32>
    %cst_175 = arith.constant -4.805000e+02 : f32
    %519 = vector.broadcast %cst_175 : f32 to vector<32x128xf32>
    %520 = arith.mulf %519, %518 : vector<32x128xf32>
    %521 = math.exp %520 : vector<32x128xf32>
    %cst_176 = arith.constant dense<0.000000e+00> : vector<128xf32>
    %522 = vector.multi_reduction <add>, %521, %cst_176 [0] : vector<32x128xf32> to vector<128xf32>
    %523 = vector.shape_cast %522 : vector<128xf32> to vector<1x128xf32>
    %524 = tpu.reciprocal %523 {approx = true} : vector<1x128xf32> -> vector<1x128xf32>
    %525 = vector.broadcast %524 : vector<1x128xf32> to vector<32x128xf32>
    %526 = arith.mulf %521, %525 : vector<32x128xf32>
    %c352_177 = arith.constant 352 : index
    %c0_178 = arith.constant 0 : index
    %527 = vector.load %arg5[%c352_177, %c0_178] : memref<800x128xf32, #tpu.memory_space<vmem>>, vector<32x128xf32>
    tpu.vector_store %arg5[%c352_177, %c0_178], %526 {strides = array<i32>} : memref<800x128xf32, #tpu.memory_space<vmem>>, vector<32x128xf32>,
    %528 = arith.addf %514, %526 : vector<32x128xf32>
    %c12_179 = arith.constant 12 : index
    %c0_180 = arith.constant 0 : index
    %529 = vector.load %arg2[%c12_179, %c0_180] : memref<25x128xf32, #tpu.memory_space<vmem>>, vector<1x128xf32>
    %530 = vector.broadcast %529 : vector<1x128xf32> to vector<32x128xf32>
    %531 = arith.subf %530, %5 : vector<32x128xf32>
    %532 = arith.mulf %531, %531 : vector<32x128xf32>
    %cst_181 = arith.constant -4.805000e+02 : f32
    %533 = vector.broadcast %cst_181 : f32 to vector<32x128xf32>
    %534 = arith.mulf %533, %532 : vector<32x128xf32>
    %535 = math.exp %534 : vector<32x128xf32>
    %cst_182 = arith.constant dense<0.000000e+00> : vector<128xf32>
    %536 = vector.multi_reduction <add>, %535, %cst_182 [0] : vector<32x128xf32> to vector<128xf32>
    %537 = vector.shape_cast %536 : vector<128xf32> to vector<1x128xf32>
    %538 = tpu.reciprocal %537 {approx = true} : vector<1x128xf32> -> vector<1x128xf32>
    %539 = vector.broadcast %538 : vector<1x128xf32> to vector<32x128xf32>
    %540 = arith.mulf %535, %539 : vector<32x128xf32>
    %c384_183 = arith.constant 384 : index
    %c0_184 = arith.constant 0 : index
    %541 = vector.load %arg5[%c384_183, %c0_184] : memref<800x128xf32, #tpu.memory_space<vmem>>, vector<32x128xf32>
    tpu.vector_store %arg5[%c384_183, %c0_184], %540 {strides = array<i32>} : memref<800x128xf32, #tpu.memory_space<vmem>>, vector<32x128xf32>,
    %542 = arith.addf %528, %540 : vector<32x128xf32>
    %c13_185 = arith.constant 13 : index
    %c0_186 = arith.constant 0 : index
    %543 = vector.load %arg2[%c13_185, %c0_186] : memref<25x128xf32, #tpu.memory_space<vmem>>, vector<1x128xf32>
    %544 = vector.broadcast %543 : vector<1x128xf32> to vector<32x128xf32>
    %545 = arith.subf %544, %5 : vector<32x128xf32>
    %546 = arith.mulf %545, %545 : vector<32x128xf32>
    %cst_187 = arith.constant -4.805000e+02 : f32
    %547 = vector.broadcast %cst_187 : f32 to vector<32x128xf32>
    %548 = arith.mulf %547, %546 : vector<32x128xf32>
    %549 = math.exp %548 : vector<32x128xf32>
    %cst_188 = arith.constant dense<0.000000e+00> : vector<128xf32>
    %550 = vector.multi_reduction <add>, %549, %cst_188 [0] : vector<32x128xf32> to vector<128xf32>
    %551 = vector.shape_cast %550 : vector<128xf32> to vector<1x128xf32>
    %552 = tpu.reciprocal %551 {approx = true} : vector<1x128xf32> -> vector<1x128xf32>
    %553 = vector.broadcast %552 : vector<1x128xf32> to vector<32x128xf32>
    %554 = arith.mulf %549, %553 : vector<32x128xf32>
    %c416_189 = arith.constant 416 : index
    %c0_190 = arith.constant 0 : index
    %555 = vector.load %arg5[%c416_189, %c0_190] : memref<800x128xf32, #tpu.memory_space<vmem>>, vector<32x128xf32>
    tpu.vector_store %arg5[%c416_189, %c0_190], %554 {strides = array<i32>} : memref<800x128xf32, #tpu.memory_space<vmem>>, vector<32x128xf32>,
    %556 = arith.addf %542, %554 : vector<32x128xf32>
    %c14_191 = arith.constant 14 : index
    %c0_192 = arith.constant 0 : index
    %557 = vector.load %arg2[%c14_191, %c0_192] : memref<25x128xf32, #tpu.memory_space<vmem>>, vector<1x128xf32>
    %558 = vector.broadcast %557 : vector<1x128xf32> to vector<32x128xf32>
    %559 = arith.subf %558, %5 : vector<32x128xf32>
    %560 = arith.mulf %559, %559 : vector<32x128xf32>
    %cst_193 = arith.constant -4.805000e+02 : f32
    %561 = vector.broadcast %cst_193 : f32 to vector<32x128xf32>
    %562 = arith.mulf %561, %560 : vector<32x128xf32>
    %563 = math.exp %562 : vector<32x128xf32>
    %cst_194 = arith.constant dense<0.000000e+00> : vector<128xf32>
    %564 = vector.multi_reduction <add>, %563, %cst_194 [0] : vector<32x128xf32> to vector<128xf32>
    %565 = vector.shape_cast %564 : vector<128xf32> to vector<1x128xf32>
    %566 = tpu.reciprocal %565 {approx = true} : vector<1x128xf32> -> vector<1x128xf32>
    %567 = vector.broadcast %566 : vector<1x128xf32> to vector<32x128xf32>
    %568 = arith.mulf %563, %567 : vector<32x128xf32>
    %c448_195 = arith.constant 448 : index
    %c0_196 = arith.constant 0 : index
    %569 = vector.load %arg5[%c448_195, %c0_196] : memref<800x128xf32, #tpu.memory_space<vmem>>, vector<32x128xf32>
    tpu.vector_store %arg5[%c448_195, %c0_196], %568 {strides = array<i32>} : memref<800x128xf32, #tpu.memory_space<vmem>>, vector<32x128xf32>,
    %570 = arith.addf %556, %568 : vector<32x128xf32>
    %c15_197 = arith.constant 15 : index
    %c0_198 = arith.constant 0 : index
    %571 = vector.load %arg2[%c15_197, %c0_198] : memref<25x128xf32, #tpu.memory_space<vmem>>, vector<1x128xf32>
    %572 = vector.broadcast %571 : vector<1x128xf32> to vector<32x128xf32>
    %573 = arith.subf %572, %5 : vector<32x128xf32>
    %574 = arith.mulf %573, %573 : vector<32x128xf32>
    %cst_199 = arith.constant -4.805000e+02 : f32
    %575 = vector.broadcast %cst_199 : f32 to vector<32x128xf32>
    %576 = arith.mulf %575, %574 : vector<32x128xf32>
    %577 = math.exp %576 : vector<32x128xf32>
    %cst_200 = arith.constant dense<0.000000e+00> : vector<128xf32>
    %578 = vector.multi_reduction <add>, %577, %cst_200 [0] : vector<32x128xf32> to vector<128xf32>
    %579 = vector.shape_cast %578 : vector<128xf32> to vector<1x128xf32>
    %580 = tpu.reciprocal %579 {approx = true} : vector<1x128xf32> -> vector<1x128xf32>
    %581 = vector.broadcast %580 : vector<1x128xf32> to vector<32x128xf32>
    %582 = arith.mulf %577, %581 : vector<32x128xf32>
    %c480_201 = arith.constant 480 : index
    %c0_202 = arith.constant 0 : index
    %583 = vector.load %arg5[%c480_201, %c0_202] : memref<800x128xf32, #tpu.memory_space<vmem>>, vector<32x128xf32>
    tpu.vector_store %arg5[%c480_201, %c0_202], %582 {strides = array<i32>} : memref<800x128xf32, #tpu.memory_space<vmem>>, vector<32x128xf32>,
    %584 = arith.addf %570, %582 : vector<32x128xf32>
    %c16_203 = arith.constant 16 : index
    %c0_204 = arith.constant 0 : index
    %585 = vector.load %arg2[%c16_203, %c0_204] : memref<25x128xf32, #tpu.memory_space<vmem>>, vector<1x128xf32>
    %586 = vector.broadcast %585 : vector<1x128xf32> to vector<32x128xf32>
    %587 = arith.subf %586, %5 : vector<32x128xf32>
    %588 = arith.mulf %587, %587 : vector<32x128xf32>
    %cst_205 = arith.constant -4.805000e+02 : f32
    %589 = vector.broadcast %cst_205 : f32 to vector<32x128xf32>
    %590 = arith.mulf %589, %588 : vector<32x128xf32>
    %591 = math.exp %590 : vector<32x128xf32>
    %cst_206 = arith.constant dense<0.000000e+00> : vector<128xf32>
    %592 = vector.multi_reduction <add>, %591, %cst_206 [0] : vector<32x128xf32> to vector<128xf32>
    %593 = vector.shape_cast %592 : vector<128xf32> to vector<1x128xf32>
    %594 = tpu.reciprocal %593 {approx = true} : vector<1x128xf32> -> vector<1x128xf32>
    %595 = vector.broadcast %594 : vector<1x128xf32> to vector<32x128xf32>
    %596 = arith.mulf %591, %595 : vector<32x128xf32>
    %c512_207 = arith.constant 512 : index
    %c0_208 = arith.constant 0 : index
    %597 = vector.load %arg5[%c512_207, %c0_208] : memref<800x128xf32, #tpu.memory_space<vmem>>, vector<32x128xf32>
    tpu.vector_store %arg5[%c512_207, %c0_208], %596 {strides = array<i32>} : memref<800x128xf32, #tpu.memory_space<vmem>>, vector<32x128xf32>,
    %598 = arith.addf %584, %596 : vector<32x128xf32>
    %c17_209 = arith.constant 17 : index
    %c0_210 = arith.constant 0 : index
    %599 = vector.load %arg2[%c17_209, %c0_210] : memref<25x128xf32, #tpu.memory_space<vmem>>, vector<1x128xf32>
    %600 = vector.broadcast %599 : vector<1x128xf32> to vector<32x128xf32>
    %601 = arith.subf %600, %5 : vector<32x128xf32>
    %602 = arith.mulf %601, %601 : vector<32x128xf32>
    %cst_211 = arith.constant -4.805000e+02 : f32
    %603 = vector.broadcast %cst_211 : f32 to vector<32x128xf32>
    %604 = arith.mulf %603, %602 : vector<32x128xf32>
    %605 = math.exp %604 : vector<32x128xf32>
    %cst_212 = arith.constant dense<0.000000e+00> : vector<128xf32>
    %606 = vector.multi_reduction <add>, %605, %cst_212 [0] : vector<32x128xf32> to vector<128xf32>
    %607 = vector.shape_cast %606 : vector<128xf32> to vector<1x128xf32>
    %608 = tpu.reciprocal %607 {approx = true} : vector<1x128xf32> -> vector<1x128xf32>
    %609 = vector.broadcast %608 : vector<1x128xf32> to vector<32x128xf32>
    %610 = arith.mulf %605, %609 : vector<32x128xf32>
    %c544_213 = arith.constant 544 : index
    %c0_214 = arith.constant 0 : index
    %611 = vector.load %arg5[%c544_213, %c0_214] : memref<800x128xf32, #tpu.memory_space<vmem>>, vector<32x128xf32>
    tpu.vector_store %arg5[%c544_213, %c0_214], %610 {strides = array<i32>} : memref<800x128xf32, #tpu.memory_space<vmem>>, vector<32x128xf32>,
    %612 = arith.addf %598, %610 : vector<32x128xf32>
    %c18_215 = arith.constant 18 : index
    %c0_216 = arith.constant 0 : index
    %613 = vector.load %arg2[%c18_215, %c0_216] : memref<25x128xf32, #tpu.memory_space<vmem>>, vector<1x128xf32>
    %614 = vector.broadcast %613 : vector<1x128xf32> to vector<32x128xf32>
    %615 = arith.subf %614, %5 : vector<32x128xf32>
    %616 = arith.mulf %615, %615 : vector<32x128xf32>
    %cst_217 = arith.constant -4.805000e+02 : f32
    %617 = vector.broadcast %cst_217 : f32 to vector<32x128xf32>
    %618 = arith.mulf %617, %616 : vector<32x128xf32>
    %619 = math.exp %618 : vector<32x128xf32>
    %cst_218 = arith.constant dense<0.000000e+00> : vector<128xf32>
    %620 = vector.multi_reduction <add>, %619, %cst_218 [0] : vector<32x128xf32> to vector<128xf32>
    %621 = vector.shape_cast %620 : vector<128xf32> to vector<1x128xf32>
    %622 = tpu.reciprocal %621 {approx = true} : vector<1x128xf32> -> vector<1x128xf32>
    %623 = vector.broadcast %622 : vector<1x128xf32> to vector<32x128xf32>
    %624 = arith.mulf %619, %623 : vector<32x128xf32>
    %c576_219 = arith.constant 576 : index
    %c0_220 = arith.constant 0 : index
    %625 = vector.load %arg5[%c576_219, %c0_220] : memref<800x128xf32, #tpu.memory_space<vmem>>, vector<32x128xf32>
    tpu.vector_store %arg5[%c576_219, %c0_220], %624 {strides = array<i32>} : memref<800x128xf32, #tpu.memory_space<vmem>>, vector<32x128xf32>,
    %626 = arith.addf %612, %624 : vector<32x128xf32>
    %c19_221 = arith.constant 19 : index
    %c0_222 = arith.constant 0 : index
    %627 = vector.load %arg2[%c19_221, %c0_222] : memref<25x128xf32, #tpu.memory_space<vmem>>, vector<1x128xf32>
    %628 = vector.broadcast %627 : vector<1x128xf32> to vector<32x128xf32>
    %629 = arith.subf %628, %5 : vector<32x128xf32>
    %630 = arith.mulf %629, %629 : vector<32x128xf32>
    %cst_223 = arith.constant -4.805000e+02 : f32
    %631 = vector.broadcast %cst_223 : f32 to vector<32x128xf32>
    %632 = arith.mulf %631, %630 : vector<32x128xf32>
    %633 = math.exp %632 : vector<32x128xf32>
    %cst_224 = arith.constant dense<0.000000e+00> : vector<128xf32>
    %634 = vector.multi_reduction <add>, %633, %cst_224 [0] : vector<32x128xf32> to vector<128xf32>
    %635 = vector.shape_cast %634 : vector<128xf32> to vector<1x128xf32>
    %636 = tpu.reciprocal %635 {approx = true} : vector<1x128xf32> -> vector<1x128xf32>
    %637 = vector.broadcast %636 : vector<1x128xf32> to vector<32x128xf32>
    %638 = arith.mulf %633, %637 : vector<32x128xf32>
    %c608_225 = arith.constant 608 : index
    %c0_226 = arith.constant 0 : index
    %639 = vector.load %arg5[%c608_225, %c0_226] : memref<800x128xf32, #tpu.memory_space<vmem>>, vector<32x128xf32>
    tpu.vector_store %arg5[%c608_225, %c0_226], %638 {strides = array<i32>} : memref<800x128xf32, #tpu.memory_space<vmem>>, vector<32x128xf32>,
    %640 = arith.addf %626, %638 : vector<32x128xf32>
    %c20_227 = arith.constant 20 : index
    %c0_228 = arith.constant 0 : index
    %641 = vector.load %arg2[%c20_227, %c0_228] : memref<25x128xf32, #tpu.memory_space<vmem>>, vector<1x128xf32>
    %642 = vector.broadcast %641 : vector<1x128xf32> to vector<32x128xf32>
    %643 = arith.subf %642, %5 : vector<32x128xf32>
    %644 = arith.mulf %643, %643 : vector<32x128xf32>
    %cst_229 = arith.constant -4.805000e+02 : f32
    %645 = vector.broadcast %cst_229 : f32 to vector<32x128xf32>
    %646 = arith.mulf %645, %644 : vector<32x128xf32>
    %647 = math.exp %646 : vector<32x128xf32>
    %cst_230 = arith.constant dense<0.000000e+00> : vector<128xf32>
    %648 = vector.multi_reduction <add>, %647, %cst_230 [0] : vector<32x128xf32> to vector<128xf32>
    %649 = vector.shape_cast %648 : vector<128xf32> to vector<1x128xf32>
    %650 = tpu.reciprocal %649 {approx = true} : vector<1x128xf32> -> vector<1x128xf32>
    %651 = vector.broadcast %650 : vector<1x128xf32> to vector<32x128xf32>
    %652 = arith.mulf %647, %651 : vector<32x128xf32>
    %c640_231 = arith.constant 640 : index
    %c0_232 = arith.constant 0 : index
    %653 = vector.load %arg5[%c640_231, %c0_232] : memref<800x128xf32, #tpu.memory_space<vmem>>, vector<32x128xf32>
    tpu.vector_store %arg5[%c640_231, %c0_232], %652 {strides = array<i32>} : memref<800x128xf32, #tpu.memory_space<vmem>>, vector<32x128xf32>,
    %654 = arith.addf %640, %652 : vector<32x128xf32>
    %c21_233 = arith.constant 21 : index
    %c0_234 = arith.constant 0 : index
    %655 = vector.load %arg2[%c21_233, %c0_234] : memref<25x128xf32, #tpu.memory_space<vmem>>, vector<1x128xf32>
    %656 = vector.broadcast %655 : vector<1x128xf32> to vector<32x128xf32>
    %657 = arith.subf %656, %5 : vector<32x128xf32>
    %658 = arith.mulf %657, %657 : vector<32x128xf32>
    %cst_235 = arith.constant -4.805000e+02 : f32
    %659 = vector.broadcast %cst_235 : f32 to vector<32x128xf32>
    %660 = arith.mulf %659, %658 : vector<32x128xf32>
    %661 = math.exp %660 : vector<32x128xf32>
    %cst_236 = arith.constant dense<0.000000e+00> : vector<128xf32>
    %662 = vector.multi_reduction <add>, %661, %cst_236 [0] : vector<32x128xf32> to vector<128xf32>
    %663 = vector.shape_cast %662 : vector<128xf32> to vector<1x128xf32>
    %664 = tpu.reciprocal %663 {approx = true} : vector<1x128xf32> -> vector<1x128xf32>
    %665 = vector.broadcast %664 : vector<1x128xf32> to vector<32x128xf32>
    %666 = arith.mulf %661, %665 : vector<32x128xf32>
    %c672_237 = arith.constant 672 : index
    %c0_238 = arith.constant 0 : index
    %667 = vector.load %arg5[%c672_237, %c0_238] : memref<800x128xf32, #tpu.memory_space<vmem>>, vector<32x128xf32>
    tpu.vector_store %arg5[%c672_237, %c0_238], %666 {strides = array<i32>} : memref<800x128xf32, #tpu.memory_space<vmem>>, vector<32x128xf32>,
    %668 = arith.addf %654, %666 : vector<32x128xf32>
    %c22_239 = arith.constant 22 : index
    %c0_240 = arith.constant 0 : index
    %669 = vector.load %arg2[%c22_239, %c0_240] : memref<25x128xf32, #tpu.memory_space<vmem>>, vector<1x128xf32>
    %670 = vector.broadcast %669 : vector<1x128xf32> to vector<32x128xf32>
    %671 = arith.subf %670, %5 : vector<32x128xf32>
    %672 = arith.mulf %671, %671 : vector<32x128xf32>
    %cst_241 = arith.constant -4.805000e+02 : f32
    %673 = vector.broadcast %cst_241 : f32 to vector<32x128xf32>
    %674 = arith.mulf %673, %672 : vector<32x128xf32>
    %675 = math.exp %674 : vector<32x128xf32>
    %cst_242 = arith.constant dense<0.000000e+00> : vector<128xf32>
    %676 = vector.multi_reduction <add>, %675, %cst_242 [0] : vector<32x128xf32> to vector<128xf32>
    %677 = vector.shape_cast %676 : vector<128xf32> to vector<1x128xf32>
    %678 = tpu.reciprocal %677 {approx = true} : vector<1x128xf32> -> vector<1x128xf32>
    %679 = vector.broadcast %678 : vector<1x128xf32> to vector<32x128xf32>
    %680 = arith.mulf %675, %679 : vector<32x128xf32>
    %c704_243 = arith.constant 704 : index
    %c0_244 = arith.constant 0 : index
    %681 = vector.load %arg5[%c704_243, %c0_244] : memref<800x128xf32, #tpu.memory_space<vmem>>, vector<32x128xf32>
    tpu.vector_store %arg5[%c704_243, %c0_244], %680 {strides = array<i32>} : memref<800x128xf32, #tpu.memory_space<vmem>>, vector<32x128xf32>,
    %682 = arith.addf %668, %680 : vector<32x128xf32>
    %c23_245 = arith.constant 23 : index
    %c0_246 = arith.constant 0 : index
    %683 = vector.load %arg2[%c23_245, %c0_246] : memref<25x128xf32, #tpu.memory_space<vmem>>, vector<1x128xf32>
    %684 = vector.broadcast %683 : vector<1x128xf32> to vector<32x128xf32>
    %685 = arith.subf %684, %5 : vector<32x128xf32>
    %686 = arith.mulf %685, %685 : vector<32x128xf32>
    %cst_247 = arith.constant -4.805000e+02 : f32
    %687 = vector.broadcast %cst_247 : f32 to vector<32x128xf32>
    %688 = arith.mulf %687, %686 : vector<32x128xf32>
    %689 = math.exp %688 : vector<32x128xf32>
    %cst_248 = arith.constant dense<0.000000e+00> : vector<128xf32>
    %690 = vector.multi_reduction <add>, %689, %cst_248 [0] : vector<32x128xf32> to vector<128xf32>
    %691 = vector.shape_cast %690 : vector<128xf32> to vector<1x128xf32>
    %692 = tpu.reciprocal %691 {approx = true} : vector<1x128xf32> -> vector<1x128xf32>
    %693 = vector.broadcast %692 : vector<1x128xf32> to vector<32x128xf32>
    %694 = arith.mulf %689, %693 : vector<32x128xf32>
    %c736_249 = arith.constant 736 : index
    %c0_250 = arith.constant 0 : index
    %695 = vector.load %arg5[%c736_249, %c0_250] : memref<800x128xf32, #tpu.memory_space<vmem>>, vector<32x128xf32>
    tpu.vector_store %arg5[%c736_249, %c0_250], %694 {strides = array<i32>} : memref<800x128xf32, #tpu.memory_space<vmem>>, vector<32x128xf32>,
    %696 = arith.addf %682, %694 : vector<32x128xf32>
    %c24_251 = arith.constant 24 : index
    %c0_252 = arith.constant 0 : index
    %697 = vector.load %arg2[%c24_251, %c0_252] : memref<25x128xf32, #tpu.memory_space<vmem>>, vector<1x128xf32>
    %698 = vector.broadcast %697 : vector<1x128xf32> to vector<32x128xf32>
    %699 = arith.subf %698, %5 : vector<32x128xf32>
    %700 = arith.mulf %699, %699 : vector<32x128xf32>
    %cst_253 = arith.constant -4.805000e+02 : f32
    %701 = vector.broadcast %cst_253 : f32 to vector<32x128xf32>
    %702 = arith.mulf %701, %700 : vector<32x128xf32>
    %703 = math.exp %702 : vector<32x128xf32>
    %cst_254 = arith.constant dense<0.000000e+00> : vector<128xf32>
    %704 = vector.multi_reduction <add>, %703, %cst_254 [0] : vector<32x128xf32> to vector<128xf32>
    %705 = vector.shape_cast %704 : vector<128xf32> to vector<1x128xf32>
    %706 = tpu.reciprocal %705 {approx = true} : vector<1x128xf32> -> vector<1x128xf32>
    %707 = vector.broadcast %706 : vector<1x128xf32> to vector<32x128xf32>
    %708 = arith.mulf %703, %707 : vector<32x128xf32>
    %c768_255 = arith.constant 768 : index
    %c0_256 = arith.constant 0 : index
    %709 = vector.load %arg5[%c768_255, %c0_256] : memref<800x128xf32, #tpu.memory_space<vmem>>, vector<32x128xf32>
    tpu.vector_store %arg5[%c768_255, %c0_256], %708 {strides = array<i32>} : memref<800x128xf32, #tpu.memory_space<vmem>>, vector<32x128xf32>,
    %710 = arith.addf %696, %708 : vector<32x128xf32>
    %cst_257 = arith.constant 4.000000e-02 : f32
    %711 = vector.broadcast %cst_257 : f32 to vector<32x128xf32>
    %712 = arith.mulf %710, %711 : vector<32x128xf32>
    %c0_258 = arith.constant 0 : index
    %c0_259 = arith.constant 0 : index
    %713 = vector.load %arg7[%c0_258, %c0_259] : memref<32x128xf32, #tpu.memory_space<vmem>>, vector<32x128xf32>
    tpu.vector_store %arg7[%c0_258, %c0_259], %712 {strides = array<i32>} : memref<32x128xf32, #tpu.memory_space<vmem>>, vector<32x128xf32>,
    %cst_260 = arith.constant 0.000000e+00 : f32
    %714 = vector.broadcast %cst_260 : f32 to vector<1x128xf32>
    %c0_i32 = arith.constant 0 : i32
    %c32_i32 = arith.constant 32 : i32
    %715 = arith.addi %c0_i32, %c32_i32 : i32
    %c1_i32 = arith.constant 1 : i32
    %716 = scf.for %arg8 = %c0_i32 to %715 step %c1_i32 iter_args(%arg9 = %714) -> (vector<1x128xf32>)  : i32 {
      %cst_264 = arith.constant 0.000000e+00 : f32
      %718 = vector.broadcast %cst_264 : f32 to vector<32x128xf32>
      %c0_i32_265 = arith.constant 0 : i32
      %719 = arith.addi %c0_i32_265, %arg8 : i32
      %720 = arith.index_cast %719 : i32 to index
      %c0_266 = arith.constant 0 : index
      %721 = vector.load %arg5[%720, %c0_266] : memref<800x128xf32, #tpu.memory_space<vmem>>, vector<1x128xf32>
      %c0_267 = arith.constant 0 : index
      %c0_268 = arith.constant 0 : index
      %722 = vector.load %arg4[%c0_267, %c0_268] : memref<800x128xf32, #tpu.memory_space<vmem>>, vector<32x128xf32>
      %723 = vector.broadcast %721 : vector<1x128xf32> to vector<32x128xf32>
      %724 = arith.mulf %722, %723 : vector<32x128xf32>
      %725 = arith.addf %718, %724 : vector<32x128xf32>
      %c32_i32_269 = arith.constant 32 : i32
      %726 = arith.addi %c32_i32_269, %arg8 : i32
      %727 = arith.index_cast %726 : i32 to index
      %c0_270 = arith.constant 0 : index
      %728 = vector.load %arg5[%727, %c0_270] : memref<800x128xf32, #tpu.memory_space<vmem>>, vector<1x128xf32>
      %c32_271 = arith.constant 32 : index
      %c0_272 = arith.constant 0 : index
      %729 = vector.load %arg4[%c32_271, %c0_272] : memref<800x128xf32, #tpu.memory_space<vmem>>, vector<32x128xf32>
      %730 = vector.broadcast %728 : vector<1x128xf32> to vector<32x128xf32>
      %731 = arith.mulf %729, %730 : vector<32x128xf32>
      %732 = arith.addf %725, %731 : vector<32x128xf32>
      %c64_i32 = arith.constant 64 : i32
      %733 = arith.addi %c64_i32, %arg8 : i32
      %734 = arith.index_cast %733 : i32 to index
      %c0_273 = arith.constant 0 : index
      %735 = vector.load %arg5[%734, %c0_273] : memref<800x128xf32, #tpu.memory_space<vmem>>, vector<1x128xf32>
      %c64_274 = arith.constant 64 : index
      %c0_275 = arith.constant 0 : index
      %736 = vector.load %arg4[%c64_274, %c0_275] : memref<800x128xf32, #tpu.memory_space<vmem>>, vector<32x128xf32>
      %737 = vector.broadcast %735 : vector<1x128xf32> to vector<32x128xf32>
      %738 = arith.mulf %736, %737 : vector<32x128xf32>
      %739 = arith.addf %732, %738 : vector<32x128xf32>
      %c96_i32 = arith.constant 96 : i32
      %740 = arith.addi %c96_i32, %arg8 : i32
      %741 = arith.index_cast %740 : i32 to index
      %c0_276 = arith.constant 0 : index
      %742 = vector.load %arg5[%741, %c0_276] : memref<800x128xf32, #tpu.memory_space<vmem>>, vector<1x128xf32>
      %c96_277 = arith.constant 96 : index
      %c0_278 = arith.constant 0 : index
      %743 = vector.load %arg4[%c96_277, %c0_278] : memref<800x128xf32, #tpu.memory_space<vmem>>, vector<32x128xf32>
      %744 = vector.broadcast %742 : vector<1x128xf32> to vector<32x128xf32>
      %745 = arith.mulf %743, %744 : vector<32x128xf32>
      %746 = arith.addf %739, %745 : vector<32x128xf32>
      %c128_i32 = arith.constant 128 : i32
      %747 = arith.addi %c128_i32, %arg8 : i32
      %748 = arith.index_cast %747 : i32 to index
      %c0_279 = arith.constant 0 : index
      %749 = vector.load %arg5[%748, %c0_279] : memref<800x128xf32, #tpu.memory_space<vmem>>, vector<1x128xf32>
      %c128_280 = arith.constant 128 : index
      %c0_281 = arith.constant 0 : index
      %750 = vector.load %arg4[%c128_280, %c0_281] : memref<800x128xf32, #tpu.memory_space<vmem>>, vector<32x128xf32>
      %751 = vector.broadcast %749 : vector<1x128xf32> to vector<32x128xf32>
      %752 = arith.mulf %750, %751 : vector<32x128xf32>
      %753 = arith.addf %746, %752 : vector<32x128xf32>
      %c160_i32 = arith.constant 160 : i32
      %754 = arith.addi %c160_i32, %arg8 : i32
      %755 = arith.index_cast %754 : i32 to index
      %c0_282 = arith.constant 0 : index
      %756 = vector.load %arg5[%755, %c0_282] : memref<800x128xf32, #tpu.memory_space<vmem>>, vector<1x128xf32>
      %c160_283 = arith.constant 160 : index
      %c0_284 = arith.constant 0 : index
      %757 = vector.load %arg4[%c160_283, %c0_284] : memref<800x128xf32, #tpu.memory_space<vmem>>, vector<32x128xf32>
      %758 = vector.broadcast %756 : vector<1x128xf32> to vector<32x128xf32>
      %759 = arith.mulf %757, %758 : vector<32x128xf32>
      %760 = arith.addf %753, %759 : vector<32x128xf32>
      %c192_i32 = arith.constant 192 : i32
      %761 = arith.addi %c192_i32, %arg8 : i32
      %762 = arith.index_cast %761 : i32 to index
      %c0_285 = arith.constant 0 : index
      %763 = vector.load %arg5[%762, %c0_285] : memref<800x128xf32, #tpu.memory_space<vmem>>, vector<1x128xf32>
      %c192_286 = arith.constant 192 : index
      %c0_287 = arith.constant 0 : index
      %764 = vector.load %arg4[%c192_286, %c0_287] : memref<800x128xf32, #tpu.memory_space<vmem>>, vector<32x128xf32>
      %765 = vector.broadcast %763 : vector<1x128xf32> to vector<32x128xf32>
      %766 = arith.mulf %764, %765 : vector<32x128xf32>
      %767 = arith.addf %760, %766 : vector<32x128xf32>
      %c224_i32 = arith.constant 224 : i32
      %768 = arith.addi %c224_i32, %arg8 : i32
      %769 = arith.index_cast %768 : i32 to index
      %c0_288 = arith.constant 0 : index
      %770 = vector.load %arg5[%769, %c0_288] : memref<800x128xf32, #tpu.memory_space<vmem>>, vector<1x128xf32>
      %c224_289 = arith.constant 224 : index
      %c0_290 = arith.constant 0 : index
      %771 = vector.load %arg4[%c224_289, %c0_290] : memref<800x128xf32, #tpu.memory_space<vmem>>, vector<32x128xf32>
      %772 = vector.broadcast %770 : vector<1x128xf32> to vector<32x128xf32>
      %773 = arith.mulf %771, %772 : vector<32x128xf32>
      %774 = arith.addf %767, %773 : vector<32x128xf32>
      %c256_i32 = arith.constant 256 : i32
      %775 = arith.addi %c256_i32, %arg8 : i32
      %776 = arith.index_cast %775 : i32 to index
      %c0_291 = arith.constant 0 : index
      %777 = vector.load %arg5[%776, %c0_291] : memref<800x128xf32, #tpu.memory_space<vmem>>, vector<1x128xf32>
      %c256_292 = arith.constant 256 : index
      %c0_293 = arith.constant 0 : index
      %778 = vector.load %arg4[%c256_292, %c0_293] : memref<800x128xf32, #tpu.memory_space<vmem>>, vector<32x128xf32>
      %779 = vector.broadcast %777 : vector<1x128xf32> to vector<32x128xf32>
      %780 = arith.mulf %778, %779 : vector<32x128xf32>
      %781 = arith.addf %774, %780 : vector<32x128xf32>
      %c288_i32 = arith.constant 288 : i32
      %782 = arith.addi %c288_i32, %arg8 : i32
      %783 = arith.index_cast %782 : i32 to index
      %c0_294 = arith.constant 0 : index
      %784 = vector.load %arg5[%783, %c0_294] : memref<800x128xf32, #tpu.memory_space<vmem>>, vector<1x128xf32>
      %c288_295 = arith.constant 288 : index
      %c0_296 = arith.constant 0 : index
      %785 = vector.load %arg4[%c288_295, %c0_296] : memref<800x128xf32, #tpu.memory_space<vmem>>, vector<32x128xf32>
      %786 = vector.broadcast %784 : vector<1x128xf32> to vector<32x128xf32>
      %787 = arith.mulf %785, %786 : vector<32x128xf32>
      %788 = arith.addf %781, %787 : vector<32x128xf32>
      %c320_i32 = arith.constant 320 : i32
      %789 = arith.addi %c320_i32, %arg8 : i32
      %790 = arith.index_cast %789 : i32 to index
      %c0_297 = arith.constant 0 : index
      %791 = vector.load %arg5[%790, %c0_297] : memref<800x128xf32, #tpu.memory_space<vmem>>, vector<1x128xf32>
      %c320_298 = arith.constant 320 : index
      %c0_299 = arith.constant 0 : index
      %792 = vector.load %arg4[%c320_298, %c0_299] : memref<800x128xf32, #tpu.memory_space<vmem>>, vector<32x128xf32>
      %793 = vector.broadcast %791 : vector<1x128xf32> to vector<32x128xf32>
      %794 = arith.mulf %792, %793 : vector<32x128xf32>
      %795 = arith.addf %788, %794 : vector<32x128xf32>
      %c352_i32 = arith.constant 352 : i32
      %796 = arith.addi %c352_i32, %arg8 : i32
      %797 = arith.index_cast %796 : i32 to index
      %c0_300 = arith.constant 0 : index
      %798 = vector.load %arg5[%797, %c0_300] : memref<800x128xf32, #tpu.memory_space<vmem>>, vector<1x128xf32>
      %c352_301 = arith.constant 352 : index
      %c0_302 = arith.constant 0 : index
      %799 = vector.load %arg4[%c352_301, %c0_302] : memref<800x128xf32, #tpu.memory_space<vmem>>, vector<32x128xf32>
      %800 = vector.broadcast %798 : vector<1x128xf32> to vector<32x128xf32>
      %801 = arith.mulf %799, %800 : vector<32x128xf32>
      %802 = arith.addf %795, %801 : vector<32x128xf32>
      %c384_i32 = arith.constant 384 : i32
      %803 = arith.addi %c384_i32, %arg8 : i32
      %804 = arith.index_cast %803 : i32 to index
      %c0_303 = arith.constant 0 : index
      %805 = vector.load %arg5[%804, %c0_303] : memref<800x128xf32, #tpu.memory_space<vmem>>, vector<1x128xf32>
      %c384_304 = arith.constant 384 : index
      %c0_305 = arith.constant 0 : index
      %806 = vector.load %arg4[%c384_304, %c0_305] : memref<800x128xf32, #tpu.memory_space<vmem>>, vector<32x128xf32>
      %807 = vector.broadcast %805 : vector<1x128xf32> to vector<32x128xf32>
      %808 = arith.mulf %806, %807 : vector<32x128xf32>
      %809 = arith.addf %802, %808 : vector<32x128xf32>
      %c416_i32 = arith.constant 416 : i32
      %810 = arith.addi %c416_i32, %arg8 : i32
      %811 = arith.index_cast %810 : i32 to index
      %c0_306 = arith.constant 0 : index
      %812 = vector.load %arg5[%811, %c0_306] : memref<800x128xf32, #tpu.memory_space<vmem>>, vector<1x128xf32>
      %c416_307 = arith.constant 416 : index
      %c0_308 = arith.constant 0 : index
      %813 = vector.load %arg4[%c416_307, %c0_308] : memref<800x128xf32, #tpu.memory_space<vmem>>, vector<32x128xf32>
      %814 = vector.broadcast %812 : vector<1x128xf32> to vector<32x128xf32>
      %815 = arith.mulf %813, %814 : vector<32x128xf32>
      %816 = arith.addf %809, %815 : vector<32x128xf32>
      %c448_i32 = arith.constant 448 : i32
      %817 = arith.addi %c448_i32, %arg8 : i32
      %818 = arith.index_cast %817 : i32 to index
      %c0_309 = arith.constant 0 : index
      %819 = vector.load %arg5[%818, %c0_309] : memref<800x128xf32, #tpu.memory_space<vmem>>, vector<1x128xf32>
      %c448_310 = arith.constant 448 : index
      %c0_311 = arith.constant 0 : index
      %820 = vector.load %arg4[%c448_310, %c0_311] : memref<800x128xf32, #tpu.memory_space<vmem>>, vector<32x128xf32>
      %821 = vector.broadcast %819 : vector<1x128xf32> to vector<32x128xf32>
      %822 = arith.mulf %820, %821 : vector<32x128xf32>
      %823 = arith.addf %816, %822 : vector<32x128xf32>
      %c480_i32 = arith.constant 480 : i32
      %824 = arith.addi %c480_i32, %arg8 : i32
      %825 = arith.index_cast %824 : i32 to index
      %c0_312 = arith.constant 0 : index
      %826 = vector.load %arg5[%825, %c0_312] : memref<800x128xf32, #tpu.memory_space<vmem>>, vector<1x128xf32>
      %c480_313 = arith.constant 480 : index
      %c0_314 = arith.constant 0 : index
      %827 = vector.load %arg4[%c480_313, %c0_314] : memref<800x128xf32, #tpu.memory_space<vmem>>, vector<32x128xf32>
      %828 = vector.broadcast %826 : vector<1x128xf32> to vector<32x128xf32>
      %829 = arith.mulf %827, %828 : vector<32x128xf32>
      %830 = arith.addf %823, %829 : vector<32x128xf32>
      %c512_i32 = arith.constant 512 : i32
      %831 = arith.addi %c512_i32, %arg8 : i32
      %832 = arith.index_cast %831 : i32 to index
      %c0_315 = arith.constant 0 : index
      %833 = vector.load %arg5[%832, %c0_315] : memref<800x128xf32, #tpu.memory_space<vmem>>, vector<1x128xf32>
      %c512_316 = arith.constant 512 : index
      %c0_317 = arith.constant 0 : index
      %834 = vector.load %arg4[%c512_316, %c0_317] : memref<800x128xf32, #tpu.memory_space<vmem>>, vector<32x128xf32>
      %835 = vector.broadcast %833 : vector<1x128xf32> to vector<32x128xf32>
      %836 = arith.mulf %834, %835 : vector<32x128xf32>
      %837 = arith.addf %830, %836 : vector<32x128xf32>
      %c544_i32 = arith.constant 544 : i32
      %838 = arith.addi %c544_i32, %arg8 : i32
      %839 = arith.index_cast %838 : i32 to index
      %c0_318 = arith.constant 0 : index
      %840 = vector.load %arg5[%839, %c0_318] : memref<800x128xf32, #tpu.memory_space<vmem>>, vector<1x128xf32>
      %c544_319 = arith.constant 544 : index
      %c0_320 = arith.constant 0 : index
      %841 = vector.load %arg4[%c544_319, %c0_320] : memref<800x128xf32, #tpu.memory_space<vmem>>, vector<32x128xf32>
      %842 = vector.broadcast %840 : vector<1x128xf32> to vector<32x128xf32>
      %843 = arith.mulf %841, %842 : vector<32x128xf32>
      %844 = arith.addf %837, %843 : vector<32x128xf32>
      %c576_i32 = arith.constant 576 : i32
      %845 = arith.addi %c576_i32, %arg8 : i32
      %846 = arith.index_cast %845 : i32 to index
      %c0_321 = arith.constant 0 : index
      %847 = vector.load %arg5[%846, %c0_321] : memref<800x128xf32, #tpu.memory_space<vmem>>, vector<1x128xf32>
      %c576_322 = arith.constant 576 : index
      %c0_323 = arith.constant 0 : index
      %848 = vector.load %arg4[%c576_322, %c0_323] : memref<800x128xf32, #tpu.memory_space<vmem>>, vector<32x128xf32>
      %849 = vector.broadcast %847 : vector<1x128xf32> to vector<32x128xf32>
      %850 = arith.mulf %848, %849 : vector<32x128xf32>
      %851 = arith.addf %844, %850 : vector<32x128xf32>
      %c608_i32 = arith.constant 608 : i32
      %852 = arith.addi %c608_i32, %arg8 : i32
      %853 = arith.index_cast %852 : i32 to index
      %c0_324 = arith.constant 0 : index
      %854 = vector.load %arg5[%853, %c0_324] : memref<800x128xf32, #tpu.memory_space<vmem>>, vector<1x128xf32>
      %c608_325 = arith.constant 608 : index
      %c0_326 = arith.constant 0 : index
      %855 = vector.load %arg4[%c608_325, %c0_326] : memref<800x128xf32, #tpu.memory_space<vmem>>, vector<32x128xf32>
      %856 = vector.broadcast %854 : vector<1x128xf32> to vector<32x128xf32>
      %857 = arith.mulf %855, %856 : vector<32x128xf32>
      %858 = arith.addf %851, %857 : vector<32x128xf32>
      %c640_i32 = arith.constant 640 : i32
      %859 = arith.addi %c640_i32, %arg8 : i32
      %860 = arith.index_cast %859 : i32 to index
      %c0_327 = arith.constant 0 : index
      %861 = vector.load %arg5[%860, %c0_327] : memref<800x128xf32, #tpu.memory_space<vmem>>, vector<1x128xf32>
      %c640_328 = arith.constant 640 : index
      %c0_329 = arith.constant 0 : index
      %862 = vector.load %arg4[%c640_328, %c0_329] : memref<800x128xf32, #tpu.memory_space<vmem>>, vector<32x128xf32>
      %863 = vector.broadcast %861 : vector<1x128xf32> to vector<32x128xf32>
      %864 = arith.mulf %862, %863 : vector<32x128xf32>
      %865 = arith.addf %858, %864 : vector<32x128xf32>
      %c672_i32 = arith.constant 672 : i32
      %866 = arith.addi %c672_i32, %arg8 : i32
      %867 = arith.index_cast %866 : i32 to index
      %c0_330 = arith.constant 0 : index
      %868 = vector.load %arg5[%867, %c0_330] : memref<800x128xf32, #tpu.memory_space<vmem>>, vector<1x128xf32>
      %c672_331 = arith.constant 672 : index
      %c0_332 = arith.constant 0 : index
      %869 = vector.load %arg4[%c672_331, %c0_332] : memref<800x128xf32, #tpu.memory_space<vmem>>, vector<32x128xf32>
      %870 = vector.broadcast %868 : vector<1x128xf32> to vector<32x128xf32>
      %871 = arith.mulf %869, %870 : vector<32x128xf32>
      %872 = arith.addf %865, %871 : vector<32x128xf32>
      %c704_i32 = arith.constant 704 : i32
      %873 = arith.addi %c704_i32, %arg8 : i32
      %874 = arith.index_cast %873 : i32 to index
      %c0_333 = arith.constant 0 : index
      %875 = vector.load %arg5[%874, %c0_333] : memref<800x128xf32, #tpu.memory_space<vmem>>, vector<1x128xf32>
      %c704_334 = arith.constant 704 : index
      %c0_335 = arith.constant 0 : index
      %876 = vector.load %arg4[%c704_334, %c0_335] : memref<800x128xf32, #tpu.memory_space<vmem>>, vector<32x128xf32>
      %877 = vector.broadcast %875 : vector<1x128xf32> to vector<32x128xf32>
      %878 = arith.mulf %876, %877 : vector<32x128xf32>
      %879 = arith.addf %872, %878 : vector<32x128xf32>
      %c736_i32 = arith.constant 736 : i32
      %880 = arith.addi %c736_i32, %arg8 : i32
      %881 = arith.index_cast %880 : i32 to index
      %c0_336 = arith.constant 0 : index
      %882 = vector.load %arg5[%881, %c0_336] : memref<800x128xf32, #tpu.memory_space<vmem>>, vector<1x128xf32>
      %c736_337 = arith.constant 736 : index
      %c0_338 = arith.constant 0 : index
      %883 = vector.load %arg4[%c736_337, %c0_338] : memref<800x128xf32, #tpu.memory_space<vmem>>, vector<32x128xf32>
      %884 = vector.broadcast %882 : vector<1x128xf32> to vector<32x128xf32>
      %885 = arith.mulf %883, %884 : vector<32x128xf32>
      %886 = arith.addf %879, %885 : vector<32x128xf32>
      %c768_i32 = arith.constant 768 : i32
      %887 = arith.addi %c768_i32, %arg8 : i32
      %888 = arith.index_cast %887 : i32 to index
      %c0_339 = arith.constant 0 : index
      %889 = vector.load %arg5[%888, %c0_339] : memref<800x128xf32, #tpu.memory_space<vmem>>, vector<1x128xf32>
      %c768_340 = arith.constant 768 : index
      %c0_341 = arith.constant 0 : index
      %890 = vector.load %arg4[%c768_340, %c0_341] : memref<800x128xf32, #tpu.memory_space<vmem>>, vector<32x128xf32>
      %891 = vector.broadcast %889 : vector<1x128xf32> to vector<32x128xf32>
      %892 = arith.mulf %890, %891 : vector<32x128xf32>
      %893 = arith.addf %886, %892 : vector<32x128xf32>
      %cst_342 = arith.constant 4.000000e-02 : f32
      %894 = vector.broadcast %cst_342 : f32 to vector<32x128xf32>
      %895 = arith.mulf %893, %894 : vector<32x128xf32>
      %896 = arith.index_cast %arg8 : i32 to index
      %c0_343 = arith.constant 0 : index
      %897 = vector.load %arg7[%896, %c0_343] : memref<32x128xf32, #tpu.memory_space<vmem>>, vector<1x128xf32>
      %c0_344 = arith.constant 0 : index
      %c0_345 = arith.constant 0 : index
      %898 = vector.load %arg6[%c0_344, %c0_345] : memref<32x128xf32, #tpu.memory_space<vmem>>, vector<32x128xf32>
      %899 = vector.broadcast %897 : vector<1x128xf32> to vector<32x128xf32>
      %900 = arith.mulf %898, %899 : vector<32x128xf32>
      %cst_346 = arith.constant 9.99999997E-7 : f32
      %901 = vector.broadcast %cst_346 : f32 to vector<32x128xf32>
      %902 = arith.addf %900, %901 : vector<32x128xf32>
      %903 = arith.divf %895, %902 : vector<32x128xf32>
      %cst_347 = arith.constant 9.99999997E-7 : f32
      %904 = vector.broadcast %cst_347 : f32 to vector<32x128xf32>
      %905 = arith.addf %903, %904 : vector<32x128xf32>
      %906 = math.log %905 : vector<32x128xf32>
      %907 = arith.mulf %895, %906 : vector<32x128xf32>
      %cst_348 = arith.constant dense<0.000000e+00> : vector<128xf32>
      %908 = vector.multi_reduction <add>, %907, %cst_348 [0] : vector<32x128xf32> to vector<128xf32>
      %909 = vector.shape_cast %908 : vector<128xf32> to vector<1x128xf32>
      %910 = arith.addf %arg9, %909 : vector<1x128xf32>
      scf.yield %910 : vector<1x128xf32>
    }
    %c32_i32_261 = arith.constant 32 : i32
    %c0_262 = arith.constant 0 : index
    %c0_263 = arith.constant 0 : index
    %717 = vector.load %arg3[%c0_262, %c0_263] : memref<1x128xf32, #tpu.memory_space<vmem>>, vector<1x128xf32>
    tpu.vector_store %arg3[%c0_262, %c0_263], %716 {strides = array<i32>} : memref<1x128xf32, #tpu.memory_space<vmem>>, vector<1x128xf32>,
    return
  }
  func.func @transform_0(%arg0: i32) -> (i32, i32) {
    %c0_i32 = arith.constant 0 : i32
    %c0_i32_0 = arith.constant 0 : i32
    return %c0_i32, %arg0 : i32, i32
  }
  func.func @transform_1(%arg0: i32) -> (i32, i32) {
    %c0_i32 = arith.constant 0 : i32
    %c0_i32_0 = arith.constant 0 : i32
    return %c0_i32, %arg0 : i32, i32
  }
  func.func @transform_2(%arg0: i32) -> (i32, i32) {
    %c0_i32 = arith.constant 0 : i32
    %c0_i32_0 = arith.constant 0 : i32
    return %c0_i32, %arg0 : i32, i32
  }
}

</mosaic_0001>

<llo_original>
// kernel: local_mutual_information.1
$region0: #{local_mutual_information.1}
  #allocation0 [shape = 'u32[]', space=smem, size = 0x4, offset = 0x4, fixed_abs, tag = 'smem constant byte address 0x4 - core index']
  #allocation1 [shape = 'u32[144,128]{1,0:T(1,128)}', space=vmem, size = 0x12000, scoped, tag = 'internal scratch']
  #allocation2 [shape = 'f32[800,128]{1,0:T(8,128)}', space=vmem, size = 0x64000, scoped, tag = 'scratch operand']
  #allocation3 [shape = 'f32[800,128]{1,0:T(8,128)}', space=vmem, size = 0x64000, scoped, tag = 'scratch operand']
  #allocation4 [shape = 'f32[32,128]{1,0:T(8,128)}', space=vmem, size = 0x4000, scoped, tag = 'scratch operand']
  #allocation5 [shape = 'f32[32,128]{1,0:T(8,128)}', space=vmem, size = 0x4000, scoped, tag = 'scratch operand']
  %s0 = inlined_call_operand.vmem [shape: f32[25,128], index: 0, kind: input, shape index: {}]
  %s1 = inlined_call_operand.vmem [shape: f32[25,128], index: 1, kind: input, shape index: {}]
  %s2 = inlined_call_operand.vmem [shape: f32[1,128], index: 2, kind: output, shape index: {}]
  %s3 = sld [smem:[#allocation0]]
  $region25: #{local_mutual_information.1} parent=0
    _
  %s5 = ssub.s32 1, %s3
  %s6 = scalar_select 0, %s5, %s3
  // Predicated region
  $region2: #{local_mutual_information.1} parent=0 // pred_check
    _
  $region3: #{local_mutual_information.1} parent=0 // pred_check_branch
    %8 = sbr.rel (0) target = $region5
  $region4: #{local_mutual_information.1} parent=0 // pred_region
    _
  $region5: #{local_mutual_information.1} parent=0 // pred_fallthru
    _
  // Predicated region
  $region6: #{local_mutual_information.1} parent=0 // pred_check
    _
  $region7: #{local_mutual_information.1} parent=0 // pred_check_branch
    %10 = sbr.rel (0) target = $region9
  $region8: #{local_mutual_information.1} parent=0 // pred_region
    _
  $region9: #{local_mutual_information.1} parent=0 // pred_fallthru
    _
  %v11 = vlaneseq
  %v12 = vshrl.u32 %v11, 7
  %v13 = vadd.s32 %v12, 8
  %v14 = vadd.s32 %v12, 16
  %v15 = vadd.s32 %v12, 24
  %v16 = vcvt.s32.f32 %v12
  %v17 = vcvt.s32.f32 %v13
  %v18 = vcvt.s32.f32 %v14
  %v19 = vcvt.s32.f32 %v15
  %v20 = vmul.f32 %v16, 0.032258064
  %v21 = vmul.f32 %v17, 0.032258064
  %v22 = vmul.f32 %v18, 0.032258064
  %v23 = vmul.f32 %v19, 0.032258064
  %v24 = vadd.f32 %v20, 0.0
  %v25 = vadd.f32 %v21, 0.0
  %v26 = vadd.f32 %v22, 0.0
  %v27 = vadd.f32 %v23, 0.0
  %v28 = vld [vmem:[%s0] sm:$0x1]
  %v29 = vlaneseq
  %v30 = vshrl.u32 %v29, 7
  %v31 = vsub.s32 0, %v30
  %v32 = vrot.slane %v28, %v31
  %v33 = vsub.f32 %v32, %v24
  %v34 = vsub.f32 %v32, %v25
  %v35 = vsub.f32 %v32, %v26
  %v36 = vsub.f32 %v32, %v27
  %v37 = vmul.f32 %v33, %v33
  %v38 = vmul.f32 %v34, %v34
  %v39 = vmul.f32 %v35, %v35
  %v40 = vmul.f32 %v36, %v36
  %v41 = vmul.f32 %v37, -480.5
  %v42 = vmul.f32 %v38, -480.5
  %v43 = vmul.f32 %v39, -480.5
  %v44 = vmul.f32 %v40, -480.5
  %v45 = vmul.f32 %v41, 1.442695
  %v46 = vpow.pop %v45
  %v47 = vmul.f32 %v42, 1.442695
  %v48 = vpow.pop %v47
  %v49 = vmul.f32 %v43, 1.442695
  %v50 = vpow.pop %v49
  %v51 = vmul.f32 %v44, 1.442695
  %v52 = vpow.pop %v51
  %v53 = vadd.f32 %v46, %v48
  %v54 = vadd.f32 %v53, %v50
  %v55 = vadd.f32 %v54, %v52
  %v56 = vrot.slane %v55, 4
  %v57 = vadd.f32 %v55, %v56
  %v58 = vrot.slane %v57, 2
  %v59 = vadd.f32 %v57, %v58
  %v60 = vrot.slane %v59, 1
  %v61 = vadd.f32 %v59, %v60
  %v62 = vrcp.pop %v61
  %v63 = vmul.f32 %v46, %v62
  %v64 = vmul.f32 %v48, %v62
  %v65 = vmul.f32 %v50, %v62
  %v66 = vmul.f32 %v52, %v62
  %67 = vst [vmem:[#allocation2] sm:$0xff] %v63
  %68 = vst [vmem:[#allocation2 + $0x8] sm:$0xff] %v64
  %69 = vst [vmem:[#allocation2 + $0x10] sm:$0xff] %v65
  %70 = vst [vmem:[#allocation2 + $0x18] sm:$0xff] %v66
  %v71 = vadd.f32 %v63, 0.0
  %v72 = vadd.f32 %v64, 0.0
  %v73 = vadd.f32 %v65, 0.0
  %v74 = vadd.f32 %v66, 0.0
  %v75 = vld [vmem:[%s0 + $0x1] sm:$0x1]
  %v76 = vlaneseq
  %v77 = vshrl.u32 %v76, 7
  %v78 = vsub.s32 0, %v77
  %v79 = vrot.slane %v75, %v78
  %v80 = vsub.f32 %v79, %v24
  %v81 = vsub.f32 %v79, %v25
  %v82 = vsub.f32 %v79, %v26
  %v83 = vsub.f32 %v79, %v27
  %v84 = vmul.f32 %v80, %v80
  %v85 = vmul.f32 %v81, %v81
  %v86 = vmul.f32 %v82, %v82
  %v87 = vmul.f32 %v83, %v83
  %v88 = vmul.f32 %v84, -480.5
  %v89 = vmul.f32 %v85, -480.5
  %v90 = vmul.f32 %v86, -480.5
  %v91 = vmul.f32 %v87, -480.5
  %v92 = vmul.f32 %v88, 1.442695
  %v93 = vpow.pop %v92
  %v94 = vmul.f32 %v89, 1.442695
  %v95 = vpow.pop %v94
  %v96 = vmul.f32 %v90, 1.442695
  %v97 = vpow.pop %v96
  %v98 = vmul.f32 %v91, 1.442695
  %v99 = vpow.pop %v98
  %v100 = vadd.f32 %v93, %v95
  %v101 = vadd.f32 %v100, %v97
  %v102 = vadd.f32 %v101, %v99
  %v103 = vrot.slane %v102, 4
  %v104 = vadd.f32 %v102, %v103
  %v105 = vrot.slane %v104, 2
  %v106 = vadd.f32 %v104, %v105
  %v107 = vrot.slane %v106, 1
  %v108 = vadd.f32 %v106, %v107
  %v109 = vrcp.pop %v108
  %v110 = vmul.f32 %v93, %v109
  %v111 = vmul.f32 %v95, %v109
  %v112 = vmul.f32 %v97, %v109
  %v113 = vmul.f32 %v99, %v109
  %114 = vst [vmem:[#allocation2 + $0x20] sm:$0xff] %v110
  %115 = vst [vmem:[#allocation2 + $0x28] sm:$0xff] %v111
  %116 = vst [vmem:[#allocation2 + $0x30] sm:$0xff] %v112
  %117 = vst [vmem:[#allocation2 + $0x38] sm:$0xff] %v113
  %v118 = vadd.f32 %v71, %v110
  %v119 = vadd.f32 %v72, %v111
  %v120 = vadd.f32 %v73, %v112
  %v121 = vadd.f32 %v74, %v113
  %v122 = vld [vmem:[%s0 + $0x2] sm:$0x1]
  %v123 = vlaneseq
  %v124 = vshrl.u32 %v123, 7
  %v125 = vsub.s32 0, %v124
  %v126 = vrot.slane %v122, %v125
  %v127 = vsub.f32 %v126, %v24
  %v128 = vsub.f32 %v126, %v25
  %v129 = vsub.f32 %v126, %v26
  %v130 = vsub.f32 %v126, %v27
  %v131 = vmul.f32 %v127, %v127
  %v132 = vmul.f32 %v128, %v128
  %v133 = vmul.f32 %v129, %v129
  %v134 = vmul.f32 %v130, %v130
  %v135 = vmul.f32 %v131, -480.5
  %v136 = vmul.f32 %v132, -480.5
  %v137 = vmul.f32 %v133, -480.5
  %v138 = vmul.f32 %v134, -480.5
  %v139 = vmul.f32 %v135, 1.442695
  %v140 = vpow.pop %v139
  %v141 = vmul.f32 %v136, 1.442695
  %v142 = vpow.pop %v141
  %v143 = vmul.f32 %v137, 1.442695
  %v144 = vpow.pop %v143
  %v145 = vmul.f32 %v138, 1.442695
  %v146 = vpow.pop %v145
  %v147 = vadd.f32 %v140, %v142
  %v148 = vadd.f32 %v147, %v144
  %v149 = vadd.f32 %v148, %v146
  %v150 = vrot.slane %v149, 4
  %v151 = vadd.f32 %v149, %v150
  %v152 = vrot.slane %v151, 2
  %v153 = vadd.f32 %v151, %v152
  %v154 = vrot.slane %v153, 1
  %v155 = vadd.f32 %v153, %v154
  %v156 = vrcp.pop %v155
  %v157 = vmul.f32 %v140, %v156
  %v158 = vmul.f32 %v142, %v156
  %v159 = vmul.f32 %v144, %v156
  %v160 = vmul.f32 %v146, %v156
  %161 = vst [vmem:[#allocation2 + $0x40] sm:$0xff] %v157
  %162 = vst [vmem:[#allocation2 + $0x48] sm:$0xff] %v158
  %163 = vst [vmem:[#allocation2 + $0x50] sm:$0xff] %v159
  %164 = vst [vmem:[#allocation2 + $0x58] sm:$0xff] %v160
  %v165 = vadd.f32 %v118, %v157
  %v166 = vadd.f32 %v119, %v158
  %v167 = vadd.f32 %v120, %v159
  %v168 = vadd.f32 %v121, %v160
  %v169 = vld [vmem:[%s0 + $0x3] sm:$0x1]
  %v170 = vlaneseq
  %v171 = vshrl.u32 %v170, 7
  %v172 = vsub.s32 0, %v171
  %v173 = vrot.slane %v169, %v172
  %v174 = vsub.f32 %v173, %v24
  %v175 = vsub.f32 %v173, %v25
  %v176 = vsub.f32 %v173, %v26
  %v177 = vsub.f32 %v173, %v27
  %v178 = vmul.f32 %v174, %v174
  %v179 = vmul.f32 %v175, %v175
  %v180 = vmul.f32 %v176, %v176
  %v181 = vmul.f32 %v177, %v177
  %v182 = vmul.f32 %v178, -480.5
  %v183 = vmul.f32 %v179, -480.5
  %v184 = vmul.f32 %v180, -480.5
  %v185 = vmul.f32 %v181, -480.5
  %v186 = vmul.f32 %v182, 1.442695
  %v187 = vpow.pop %v186
  %v188 = vmul.f32 %v183, 1.442695
  %v189 = vpow.pop %v188
  %v190 = vmul.f32 %v184, 1.442695
  %v191 = vpow.pop %v190
  %v192 = vmul.f32 %v185, 1.442695
  %v193 = vpow.pop %v192
  %v194 = vadd.f32 %v187, %v189
  %v195 = vadd.f32 %v194, %v191
  %v196 = vadd.f32 %v195, %v193
  %v197 = vrot.slane %v196, 4
  %v198 = vadd.f32 %v196, %v197
  %v199 = vrot.slane %v198, 2
  %v200 = vadd.f32 %v198, %v199
  %v201 = vrot.slane %v200, 1
  %v202 = vadd.f32 %v200, %v201
  %v203 = vrcp.pop %v202
  %v204 = vmul.f32 %v187, %v203
  %v205 = vmul.f32 %v189, %v203
  %v206 = vmul.f32 %v191, %v203
  %v207 = vmul.f32 %v193, %v203
  %208 = vst [vmem:[#allocation2 + $0x60] sm:$0xff] %v204
  %209 = vst [vmem:[#allocation2 + $0x68] sm:$0xff] %v205
  %210 = vst [vmem:[#allocation2 + $0x70] sm:$0xff] %v206
  %211 = vst [vmem:[#allocation2 + $0x78] sm:$0xff] %v207
  %v212 = vadd.f32 %v165, %v204
  %v213 = vadd.f32 %v166, %v205
  %v214 = vadd.f32 %v167, %v206
  %v215 = vadd.f32 %v168, %v207
  %v216 = vld [vmem:[%s0 + $0x4] sm:$0x1]
  %v217 = vlaneseq
  %v218 = vshrl.u32 %v217, 7
  %v219 = vsub.s32 0, %v218
  %v220 = vrot.slane %v216, %v219
  %v221 = vsub.f32 %v220, %v24
  %v222 = vsub.f32 %v220, %v25
  %v223 = vsub.f32 %v220, %v26
  %v224 = vsub.f32 %v220, %v27
  %v225 = vmul.f32 %v221, %v221
  %v226 = vmul.f32 %v222, %v222
  %v227 = vmul.f32 %v223, %v223
  %v228 = vmul.f32 %v224, %v224
  %v229 = vmul.f32 %v225, -480.5
  %v230 = vmul.f32 %v226, -480.5
  %v231 = vmul.f32 %v227, -480.5
  %v232 = vmul.f32 %v228, -480.5
  %v233 = vmul.f32 %v229, 1.442695
  %v234 = vpow.pop %v233
  %v235 = vmul.f32 %v230, 1.442695
  %v236 = vpow.pop %v235
  %v237 = vmul.f32 %v231, 1.442695
  %v238 = vpow.pop %v237
  %v239 = vmul.f32 %v232, 1.442695
  %v240 = vpow.pop %v239
  %v241 = vadd.f32 %v234, %v236
  %v242 = vadd.f32 %v241, %v238
  %v243 = vadd.f32 %v242, %v240
  %v244 = vrot.slane %v243, 4
  %v245 = vadd.f32 %v243, %v244
  %v246 = vrot.slane %v245, 2
  %v247 = vadd.f32 %v245, %v246
  %v248 = vrot.slane %v247, 1
  %v249 = vadd.f32 %v247, %v248
  %v250 = vrcp.pop %v249
  %v251 = vmul.f32 %v234, %v250
  %v252 = vmul.f32 %v236, %v250
  %v253 = vmul.f32 %v238, %v250
  %v254 = vmul.f32 %v240, %v250
  %255 = vst [vmem:[#allocation2 + $0x80] sm:$0xff] %v251
  %256 = vst [vmem:[#allocation2 + $0x88] sm:$0xff] %v252
  %257 = vst [vmem:[#allocation2 + $0x90] sm:$0xff] %v253
  %258 = vst [vmem:[#allocation2 + $0x98] sm:$0xff] %v254
  %v259 = vadd.f32 %v212, %v251
  %v260 = vadd.f32 %v213, %v252
  %v261 = vadd.f32 %v214, %v253
  %v262 = vadd.f32 %v215, %v254
  %v263 = vld [vmem:[%s0 + $0x5] sm:$0x1]
  %v264 = vlaneseq
  %v265 = vshrl.u32 %v264, 7
  %v266 = vsub.s32 0, %v265
  %v267 = vrot.slane %v263, %v266
  %v268 = vsub.f32 %v267, %v24
  %v269 = vsub.f32 %v267, %v25
  %v270 = vsub.f32 %v267, %v26
  %v271 = vsub.f32 %v267, %v27
  %v272 = vmul.f32 %v268, %v268
  %v273 = vmul.f32 %v269, %v269
  %v274 = vmul.f32 %v270, %v270
  %v275 = vmul.f32 %v271, %v271
  %v276 = vmul.f32 %v272, -480.5
  %v277 = vmul.f32 %v273, -480.5
  %v278 = vmul.f32 %v274, -480.5
  %v279 = vmul.f32 %v275, -480.5
  %v280 = vmul.f32 %v276, 1.442695
  %v281 = vpow.pop %v280
  %v282 = vmul.f32 %v277, 1.442695
  %v283 = vpow.pop %v282
  %v284 = vmul.f32 %v278, 1.442695
  %v285 = vpow.pop %v284
  %v286 = vmul.f32 %v279, 1.442695
  %v287 = vpow.pop %v286
  %v288 = vadd.f32 %v281, %v283
  %v289 = vadd.f32 %v288, %v285
  %v290 = vadd.f32 %v289, %v287
  %v291 = vrot.slane %v290, 4
  %v292 = vadd.f32 %v290, %v291
  %v293 = vrot.slane %v292, 2
  %v294 = vadd.f32 %v292, %v293
  %v295 = vrot.slane %v294, 1
  %v296 = vadd.f32 %v294, %v295
  %v297 = vrcp.pop %v296
  %v298 = vmul.f32 %v281, %v297
  %v299 = vmul.f32 %v283, %v297
  %v300 = vmul.f32 %v285, %v297
  %v301 = vmul.f32 %v287, %v297
  %302 = vst [vmem:[#allocation2 + $0xa0] sm:$0xff] %v298
  %303 = vst [vmem:[#allocation2 + $0xa8] sm:$0xff] %v299
  %304 = vst [vmem:[#allocation2 + $0xb0] sm:$0xff] %v300
  %305 = vst [vmem:[#allocation2 + $0xb8] sm:$0xff] %v301
  %v306 = vadd.f32 %v259, %v298
  %v307 = vadd.f32 %v260, %v299
  %v308 = vadd.f32 %v261, %v300
  %v309 = vadd.f32 %v262, %v301
  %v310 = vld [vmem:[%s0 + $0x6] sm:$0x1]
  %v311 = vlaneseq
  %v312 = vshrl.u32 %v311, 7
  %v313 = vsub.s32 0, %v312
  %v314 = vrot.slane %v310, %v313
  %v315 = vsub.f32 %v314, %v24
  %v316 = vsub.f32 %v314, %v25
  %v317 = vsub.f32 %v314, %v26
  %v318 = vsub.f32 %v314, %v27
  %v319 = vmul.f32 %v315, %v315
  %v320 = vmul.f32 %v316, %v316
  %v321 = vmul.f32 %v317, %v317
  %v322 = vmul.f32 %v318, %v318
  %v323 = vmul.f32 %v319, -480.5
  %v324 = vmul.f32 %v320, -480.5
  %v325 = vmul.f32 %v321, -480.5
  %v326 = vmul.f32 %v322, -480.5
  %v327 = vmul.f32 %v323, 1.442695
  %v328 = vpow.pop %v327
  %v329 = vmul.f32 %v324, 1.442695
  %v330 = vpow.pop %v329
  %v331 = vmul.f32 %v325, 1.442695
  %v332 = vpow.pop %v331
  %v333 = vmul.f32 %v326, 1.442695
  %v334 = vpow.pop %v333
  %v335 = vadd.f32 %v328, %v330
  %v336 = vadd.f32 %v335, %v332
  %v337 = vadd.f32 %v336, %v334
  %v338 = vrot.slane %v337, 4
  %v339 = vadd.f32 %v337, %v338
  %v340 = vrot.slane %v339, 2
  %v341 = vadd.f32 %v339, %v340
  %v342 = vrot.slane %v341, 1
  %v343 = vadd.f32 %v341, %v342
  %v344 = vrcp.pop %v343
  %v345 = vmul.f32 %v328, %v344
  %v346 = vmul.f32 %v330, %v344
  %v347 = vmul.f32 %v332, %v344
  %v348 = vmul.f32 %v334, %v344
  %349 = vst [vmem:[#allocation2 + $0xc0] sm:$0xff] %v345
  %350 = vst [vmem:[#allocation2 + $0xc8] sm:$0xff] %v346
  %351 = vst [vmem:[#allocation2 + $0xd0] sm:$0xff] %v347
  %352 = vst [vmem:[#allocation2 + $0xd8] sm:$0xff] %v348
  %v353 = vadd.f32 %v306, %v345
  %v354 = vadd.f32 %v307, %v346
  %v355 = vadd.f32 %v308, %v347
  %v356 = vadd.f32 %v309, %v348
  %v357 = vld [vmem:[%s0 + $0x7] sm:$0x1]
  %v358 = vlaneseq
  %v359 = vshrl.u32 %v358, 7
  %v360 = vsub.s32 0, %v359
  %v361 = vrot.slane %v357, %v360
  %v362 = vsub.f32 %v361, %v24
  %v363 = vsub.f32 %v361, %v25
  %v364 = vsub.f32 %v361, %v26
  %v365 = vsub.f32 %v361, %v27
  %v366 = vmul.f32 %v362, %v362
  %v367 = vmul.f32 %v363, %v363
  %v368 = vmul.f32 %v364, %v364
  %v369 = vmul.f32 %v365, %v365
  %v370 = vmul.f32 %v366, -480.5
  %v371 = vmul.f32 %v367, -480.5
  %v372 = vmul.f32 %v368, -480.5
  %v373 = vmul.f32 %v369, -480.5
  %v374 = vmul.f32 %v370, 1.442695
  %v375 = vpow.pop %v374
  %v376 = vmul.f32 %v371, 1.442695
  %v377 = vpow.pop %v376
  %v378 = vmul.f32 %v372, 1.442695
  %v379 = vpow.pop %v378
  %v380 = vmul.f32 %v373, 1.442695
  %v381 = vpow.pop %v380
  %v382 = vadd.f32 %v375, %v377
  %v383 = vadd.f32 %v382, %v379
  %v384 = vadd.f32 %v383, %v381
  %v385 = vrot.slane %v384, 4
  %v386 = vadd.f32 %v384, %v385
  %v387 = vrot.slane %v386, 2
  %v388 = vadd.f32 %v386, %v387
  %v389 = vrot.slane %v388, 1
  %v390 = vadd.f32 %v388, %v389
  %v391 = vrcp.pop %v390
  %v392 = vmul.f32 %v375, %v391
  %v393 = vmul.f32 %v377, %v391
  %v394 = vmul.f32 %v379, %v391
  %v395 = vmul.f32 %v381, %v391
  %396 = vst [vmem:[#allocation2 + $0xe0] sm:$0xff] %v392
  %397 = vst [vmem:[#allocation2 + $0xe8] sm:$0xff] %v393
  %398 = vst [vmem:[#allocation2 + $0xf0] sm:$0xff] %v394
  %399 = vst [vmem:[#allocation2 + $0xf8] sm:$0xff] %v395
  %v400 = vadd.f32 %v353, %v392
  %v401 = vadd.f32 %v354, %v393
  %v402 = vadd.f32 %v355, %v394
  %v403 = vadd.f32 %v356, %v395
  %v404 = vld [vmem:[%s0 + $0x8] sm:$0x1]
  %v405 = vlaneseq
  %v406 = vshrl.u32 %v405, 7
  %v407 = vsub.s32 0, %v406
  %v408 = vrot.slane %v404, %v407
  %v409 = vsub.f32 %v408, %v24
  %v410 = vsub.f32 %v408, %v25
  %v411 = vsub.f32 %v408, %v26
  %v412 = vsub.f32 %v408, %v27
  %v413 = vmul.f32 %v409, %v409
  %v414 = vmul.f32 %v410, %v410
  %v415 = vmul.f32 %v411, %v411
  %v416 = vmul.f32 %v412, %v412
  %v417 = vmul.f32 %v413, -480.5
  %v418 = vmul.f32 %v414, -480.5
  %v419 = vmul.f32 %v415, -480.5
  %v420 = vmul.f32 %v416, -480.5
  %v421 = vmul.f32 %v417, 1.442695
  %v422 = vpow.pop %v421
  %v423 = vmul.f32 %v418, 1.442695
  %v424 = vpow.pop %v423
  %v425 = vmul.f32 %v419, 1.442695
  %v426 = vpow.pop %v425
  %v427 = vmul.f32 %v420, 1.442695
  %v428 = vpow.pop %v427
  %v429 = vadd.f32 %v422, %v424
  %v430 = vadd.f32 %v429, %v426
  %v431 = vadd.f32 %v430, %v428
  %v432 = vrot.slane %v431, 4
  %v433 = vadd.f32 %v431, %v432
  %v434 = vrot.slane %v433, 2
  %v435 = vadd.f32 %v433, %v434
  %v436 = vrot.slane %v435, 1
  %v437 = vadd.f32 %v435, %v436
  %v438 = vrcp.pop %v437
  %v439 = vmul.f32 %v422, %v438
  %v440 = vmul.f32 %v424, %v438
  %v441 = vmul.f32 %v426, %v438
  %v442 = vmul.f32 %v428, %v438
  %443 = vst [vmem:[#allocation2 + $0x100] sm:$0xff] %v439
  %444 = vst [vmem:[#allocation2 + $0x108] sm:$0xff] %v440
  %445 = vst [vmem:[#allocation2 + $0x110] sm:$0xff] %v441
  %446 = vst [vmem:[#allocation2 + $0x118] sm:$0xff] %v442
  %v447 = vadd.f32 %v400, %v439
  %v448 = vadd.f32 %v401, %v440
  %v449 = vadd.f32 %v402, %v441
  %v450 = vadd.f32 %v403, %v442
  %v451 = vld [vmem:[%s0 + $0x9] sm:$0x1]
  %v452 = vlaneseq
  %v453 = vshrl.u32 %v452, 7
  %v454 = vsub.s32 0, %v453
  %v455 = vrot.slane %v451, %v454
  %v456 = vsub.f32 %v455, %v24
  %v457 = vsub.f32 %v455, %v25
  %v458 = vsub.f32 %v455, %v26
  %v459 = vsub.f32 %v455, %v27
  %v460 = vmul.f32 %v456, %v456
  %v461 = vmul.f32 %v457, %v457
  %v462 = vmul.f32 %v458, %v458
  %v463 = vmul.f32 %v459, %v459
  %v464 = vmul.f32 %v460, -480.5
  %v465 = vmul.f32 %v461, -480.5
  %v466 = vmul.f32 %v462, -480.5
  %v467 = vmul.f32 %v463, -480.5
  %v468 = vmul.f32 %v464, 1.442695
  %v469 = vpow.pop %v468
  %v470 = vmul.f32 %v465, 1.442695
  %v471 = vpow.pop %v470
  %v472 = vmul.f32 %v466, 1.442695
  %v473 = vpow.pop %v472
  %v474 = vmul.f32 %v467, 1.442695
  %v475 = vpow.pop %v474
  %v476 = vadd.f32 %v469, %v471
  %v477 = vadd.f32 %v476, %v473
  %v478 = vadd.f32 %v477, %v475
  %v479 = vrot.slane %v478, 4
  %v480 = vadd.f32 %v478, %v479
  %v481 = vrot.slane %v480, 2
  %v482 = vadd.f32 %v480, %v481
  %v483 = vrot.slane %v482, 1
  %v484 = vadd.f32 %v482, %v483
  %v485 = vrcp.pop %v484
  %v486 = vmul.f32 %v469, %v485
  %v487 = vmul.f32 %v471, %v485
  %v488 = vmul.f32 %v473, %v485
  %v489 = vmul.f32 %v475, %v485
  %490 = vst [vmem:[#allocation2 + $0x120] sm:$0xff] %v486
  %491 = vst [vmem:[#allocation2 + $0x128] sm:$0xff] %v487
  %492 = vst [vmem:[#allocation2 + $0x130] sm:$0xff] %v488
  %493 = vst [vmem:[#allocation2 + $0x138] sm:$0xff] %v489
  %v494 = vadd.f32 %v447, %v486
  %v495 = vadd.f32 %v448, %v487
  %v496 = vadd.f32 %v449, %v488
  %v497 = vadd.f32 %v450, %v489
  %v498 = vld [vmem:[%s0 + $0xa] sm:$0x1]
  %v499 = vlaneseq
  %v500 = vshrl.u32 %v499, 7
  %v501 = vsub.s32 0, %v500
  %v502 = vrot.slane %v498, %v501
  %v503 = vsub.f32 %v502, %v24
  %v504 = vsub.f32 %v502, %v25
  %v505 = vsub.f32 %v502, %v26
  %v506 = vsub.f32 %v502, %v27
  %v507 = vmul.f32 %v503, %v503
  %v508 = vmul.f32 %v504, %v504
  %v509 = vmul.f32 %v505, %v505
  %v510 = vmul.f32 %v506, %v506
  %v511 = vmul.f32 %v507, -480.5
  %v512 = vmul.f32 %v508, -480.5
  %v513 = vmul.f32 %v509, -480.5
  %v514 = vmul.f32 %v510, -480.5
  %v515 = vmul.f32 %v511, 1.442695
  %v516 = vpow.pop %v515
  %v517 = vmul.f32 %v512, 1.442695
  %v518 = vpow.pop %v517
  %v519 = vmul.f32 %v513, 1.442695
  %v520 = vpow.pop %v519
  %v521 = vmul.f32 %v514, 1.442695
  %v522 = vpow.pop %v521
  %v523 = vadd.f32 %v516, %v518
  %v524 = vadd.f32 %v523, %v520
  %v525 = vadd.f32 %v524, %v522
  %v526 = vrot.slane %v525, 4
  %v527 = vadd.f32 %v525, %v526
  %v528 = vrot.slane %v527, 2
  %v529 = vadd.f32 %v527, %v528
  %v530 = vrot.slane %v529, 1
  %v531 = vadd.f32 %v529, %v530
  %v532 = vrcp.pop %v531
  %v533 = vmul.f32 %v516, %v532
  %v534 = vmul.f32 %v518, %v532
  %v535 = vmul.f32 %v520, %v532
  %v536 = vmul.f32 %v522, %v532
  %537 = vst [vmem:[#allocation2 + $0x140] sm:$0xff] %v533
  %538 = vst [vmem:[#allocation2 + $0x148] sm:$0xff] %v534
  %539 = vst [vmem:[#allocation2 + $0x150] sm:$0xff] %v535
  %540 = vst [vmem:[#allocation2 + $0x158] sm:$0xff] %v536
  %v541 = vadd.f32 %v494, %v533
  %v542 = vadd.f32 %v495, %v534
  %v543 = vadd.f32 %v496, %v535
  %v544 = vadd.f32 %v497, %v536
  %v545 = vld [vmem:[%s0 + $0xb] sm:$0x1]
  %v546 = vlaneseq
  %v547 = vshrl.u32 %v546, 7
  %v548 = vsub.s32 0, %v547
  %v549 = vrot.slane %v545, %v548
  %v550 = vsub.f32 %v549, %v24
  %v551 = vsub.f32 %v549, %v25
  %v552 = vsub.f32 %v549, %v26
  %v553 = vsub.f32 %v549, %v27
  %v554 = vmul.f32 %v550, %v550
  %v555 = vmul.f32 %v551, %v551
  %v556 = vmul.f32 %v552, %v552
  %v557 = vmul.f32 %v553, %v553
  %v558 = vmul.f32 %v554, -480.5
  %v559 = vmul.f32 %v555, -480.5
  %v560 = vmul.f32 %v556, -480.5
  %v561 = vmul.f32 %v557, -480.5
  %v562 = vmul.f32 %v558, 1.442695
  %v563 = vpow.pop %v562
  %v564 = vmul.f32 %v559, 1.442695
  %v565 = vpow.pop %v564
  %v566 = vmul.f32 %v560, 1.442695
  %v567 = vpow.pop %v566
  %v568 = vmul.f32 %v561, 1.442695
  %v569 = vpow.pop %v568
  %v570 = vadd.f32 %v563, %v565
  %v571 = vadd.f32 %v570, %v567
  %v572 = vadd.f32 %v571, %v569
  %v573 = vrot.slane %v572, 4
  %v574 = vadd.f32 %v572, %v573
  %v575 = vrot.slane %v574, 2
  %v576 = vadd.f32 %v574, %v575
  %v577 = vrot.slane %v576, 1
  %v578 = vadd.f32 %v576, %v577
  %v579 = vrcp.pop %v578
  %v580 = vmul.f32 %v563, %v579
  %v581 = vmul.f32 %v565, %v579
  %v582 = vmul.f32 %v567, %v579
  %v583 = vmul.f32 %v569, %v579
  %584 = vst [vmem:[#allocation2 + $0x160] sm:$0xff] %v580
  %585 = vst [vmem:[#allocation2 + $0x168] sm:$0xff] %v581
  %586 = vst [vmem:[#allocation2 + $0x170] sm:$0xff] %v582
  %587 = vst [vmem:[#allocation2 + $0x178] sm:$0xff] %v583
  %v588 = vadd.f32 %v541, %v580
  %v589 = vadd.f32 %v542, %v581
  %v590 = vadd.f32 %v543, %v582
  %v591 = vadd.f32 %v544, %v583
  %v592 = vld [vmem:[%s0 + $0xc] sm:$0x1]
  %v593 = vlaneseq
  %v594 = vshrl.u32 %v593, 7
  %v595 = vsub.s32 0, %v594
  %v596 = vrot.slane %v592, %v595
  %v597 = vsub.f32 %v596, %v24
  %v598 = vsub.f32 %v596, %v25
  %v599 = vsub.f32 %v596, %v26
  %v600 = vsub.f32 %v596, %v27
  %v601 = vmul.f32 %v597, %v597
  %v602 = vmul.f32 %v598, %v598
  %v603 = vmul.f32 %v599, %v599
  %v604 = vmul.f32 %v600, %v600
  %v605 = vmul.f32 %v601, -480.5
  %v606 = vmul.f32 %v602, -480.5
  %v607 = vmul.f32 %v603, -480.5
  %v608 = vmul.f32 %v604, -480.5
  %v609 = vmul.f32 %v605, 1.442695
  %v610 = vpow.pop %v609
  %v611 = vmul.f32 %v606, 1.442695
  %v612 = vpow.pop %v611
  %v613 = vmul.f32 %v607, 1.442695
  %v614 = vpow.pop %v613
  %v615 = vmul.f32 %v608, 1.442695
  %v616 = vpow.pop %v615
  %v617 = vadd.f32 %v610, %v612
  %v618 = vadd.f32 %v617, %v614
  %v619 = vadd.f32 %v618, %v616
  %v620 = vrot.slane %v619, 4
  %v621 = vadd.f32 %v619, %v620
  %v622 = vrot.slane %v621, 2
  %v623 = vadd.f32 %v621, %v622
  %v624 = vrot.slane %v623, 1
  %v625 = vadd.f32 %v623, %v624
  %v626 = vrcp.pop %v625
  %v627 = vmul.f32 %v610, %v626
  %v628 = vmul.f32 %v612, %v626
  %v629 = vmul.f32 %v614, %v626
  %v630 = vmul.f32 %v616, %v626
  %631 = vst [vmem:[#allocation2 + $0x180] sm:$0xff] %v627
  %632 = vst [vmem:[#allocation2 + $0x188] sm:$0xff] %v628
  %633 = vst [vmem:[#allocation2 + $0x190] sm:$0xff] %v629
  %634 = vst [vmem:[#allocation2 + $0x198] sm:$0xff] %v630
  %v635 = vadd.f32 %v588, %v627
  %v636 = vadd.f32 %v589, %v628
  %v637 = vadd.f32 %v590, %v629
  %v638 = vadd.f32 %v591, %v630
  %v639 = vld [vmem:[%s0 + $0xd] sm:$0x1]
  %v640 = vlaneseq
  %v641 = vshrl.u32 %v640, 7
  %v642 = vsub.s32 0, %v641
  %v643 = vrot.slane %v639, %v642
  %v644 = vsub.f32 %v643, %v24
  %v645 = vsub.f32 %v643, %v25
  %v646 = vsub.f32 %v643, %v26
  %v647 = vsub.f32 %v643, %v27
  %v648 = vmul.f32 %v644, %v644
  %v649 = vmul.f32 %v645, %v645
  %v650 = vmul.f32 %v646, %v646
  %v651 = vmul.f32 %v647, %v647
  %v652 = vmul.f32 %v648, -480.5
  %v653 = vmul.f32 %v649, -480.5
  %v654 = vmul.f32 %v650, -480.5
  %v655 = vmul.f32 %v651, -480.5
  %v656 = vmul.f32 %v652, 1.442695
  %v657 = vpow.pop %v656
  %v658 = vmul.f32 %v653, 1.442695
  %v659 = vpow.pop %v658
  %v660 = vmul.f32 %v654, 1.442695
  %v661 = vpow.pop %v660
  %v662 = vmul.f32 %v655, 1.442695
  %v663 = vpow.pop %v662
  %v664 = vadd.f32 %v657, %v659
  %v665 = vadd.f32 %v664, %v661
  %v666 = vadd.f32 %v665, %v663
  %v667 = vrot.slane %v666, 4
  %v668 = vadd.f32 %v666, %v667
  %v669 = vrot.slane %v668, 2
  %v670 = vadd.f32 %v668, %v669
  %v671 = vrot.slane %v670, 1
  %v672 = vadd.f32 %v670, %v671
  %v673 = vrcp.pop %v672
  %v674 = vmul.f32 %v657, %v673
  %v675 = vmul.f32 %v659, %v673
  %v676 = vmul.f32 %v661, %v673
  %v677 = vmul.f32 %v663, %v673
  %678 = vst [vmem:[#allocation2 + $0x1a0] sm:$0xff] %v674
  %679 = vst [vmem:[#allocation2 + $0x1a8] sm:$0xff] %v675
  %680 = vst [vmem:[#allocation2 + $0x1b0] sm:$0xff] %v676
  %681 = vst [vmem:[#allocation2 + $0x1b8] sm:$0xff] %v677
  %v682 = vadd.f32 %v635, %v674
  %v683 = vadd.f32 %v636, %v675
  %v684 = vadd.f32 %v637, %v676
  %v685 = vadd.f32 %v638, %v677
  %v686 = vld [vmem:[%s0 + $0xe] sm:$0x1]
  %v687 = vlaneseq
  %v688 = vshrl.u32 %v687, 7
  %v689 = vsub.s32 0, %v688
  %v690 = vrot.slane %v686, %v689
  %v691 = vsub.f32 %v690, %v24
  %v692 = vsub.f32 %v690, %v25
  %v693 = vsub.f32 %v690, %v26
  %v694 = vsub.f32 %v690, %v27
  %v695 = vmul.f32 %v691, %v691
  %v696 = vmul.f32 %v692, %v692
  %v697 = vmul.f32 %v693, %v693
  %v698 = vmul.f32 %v694, %v694
  %v699 = vmul.f32 %v695, -480.5
  %v700 = vmul.f32 %v696, -480.5
  %v701 = vmul.f32 %v697, -480.5
  %v702 = vmul.f32 %v698, -480.5
  %v703 = vmul.f32 %v699, 1.442695
  %v704 = vpow.pop %v703
  %v705 = vmul.f32 %v700, 1.442695
  %v706 = vpow.pop %v705
  %v707 = vmul.f32 %v701, 1.442695
  %v708 = vpow.pop %v707
  %v709 = vmul.f32 %v702, 1.442695
  %v710 = vpow.pop %v709
  %v711 = vadd.f32 %v704, %v706
  %v712 = vadd.f32 %v711, %v708
  %v713 = vadd.f32 %v712, %v710
  %v714 = vrot.slane %v713, 4
  %v715 = vadd.f32 %v713, %v714
  %v716 = vrot.slane %v715, 2
  %v717 = vadd.f32 %v715, %v716
  %v718 = vrot.slane %v717, 1
  %v719 = vadd.f32 %v717, %v718
  %v720 = vrcp.pop %v719
  %v721 = vmul.f32 %v704, %v720
  %v722 = vmul.f32 %v706, %v720
  %v723 = vmul.f32 %v708, %v720
  %v724 = vmul.f32 %v710, %v720
  %725 = vst [vmem:[#allocation2 + $0x1c0] sm:$0xff] %v721
  %726 = vst [vmem:[#allocation2 + $0x1c8] sm:$0xff] %v722
  %727 = vst [vmem:[#allocation2 + $0x1d0] sm:$0xff] %v723
  %728 = vst [vmem:[#allocation2 + $0x1d8] sm:$0xff] %v724
  %v729 = vadd.f32 %v682, %v721
  %v730 = vadd.f32 %v683, %v722
  %v731 = vadd.f32 %v684, %v723
  %v732 = vadd.f32 %v685, %v724
  %v733 = vld [vmem:[%s0 + $0xf] sm:$0x1]
  %v734 = vlaneseq
  %v735 = vshrl.u32 %v734, 7
  %v736 = vsub.s32 0, %v735
  %v737 = vrot.slane %v733, %v736
  %v738 = vsub.f32 %v737, %v24
  %v739 = vsub.f32 %v737, %v25
  %v740 = vsub.f32 %v737, %v26
  %v741 = vsub.f32 %v737, %v27
  %v742 = vmul.f32 %v738, %v738
  %v743 = vmul.f32 %v739, %v739
  %v744 = vmul.f32 %v740, %v740
  %v745 = vmul.f32 %v741, %v741
  %v746 = vmul.f32 %v742, -480.5
  %v747 = vmul.f32 %v743, -480.5
  %v748 = vmul.f32 %v744, -480.5
  %v749 = vmul.f32 %v745, -480.5
  %v750 = vmul.f32 %v746, 1.442695
  %v751 = vpow.pop %v750
  %v752 = vmul.f32 %v747, 1.442695
  %v753 = vpow.pop %v752
  %v754 = vmul.f32 %v748, 1.442695
  %v755 = vpow.pop %v754
  %v756 = vmul.f32 %v749, 1.442695
  %v757 = vpow.pop %v756
  %v758 = vadd.f32 %v751, %v753
  %v759 = vadd.f32 %v758, %v755
  %v760 = vadd.f32 %v759, %v757
  %v761 = vrot.slane %v760, 4
  %v762 = vadd.f32 %v760, %v761
  %v763 = vrot.slane %v762, 2
  %v764 = vadd.f32 %v762, %v763
  %v765 = vrot.slane %v764, 1
  %v766 = vadd.f32 %v764, %v765
  %v767 = vrcp.pop %v766
  %v768 = vmul.f32 %v751, %v767
  %v769 = vmul.f32 %v753, %v767
  %v770 = vmul.f32 %v755, %v767
  %v771 = vmul.f32 %v757, %v767
  %772 = vst [vmem:[#allocation2 + $0x1e0] sm:$0xff] %v768
  %773 = vst [vmem:[#allocation2 + $0x1e8] sm:$0xff] %v769
  %774 = vst [vmem:[#allocation2 + $0x1f0] sm:$0xff] %v770
  %775 = vst [vmem:[#allocation2 + $0x1f8] sm:$0xff] %v771
  %v776 = vadd.f32 %v729, %v768
  %v777 = vadd.f32 %v730, %v769
  %v778 = vadd.f32 %v731, %v770
  %v779 = vadd.f32 %v732, %v771
  %v780 = vld [vmem:[%s0 + $0x10] sm:$0x1]
  %v781 = vlaneseq
  %v782 = vshrl.u32 %v781, 7
  %v783 = vsub.s32 0, %v782
  %v784 = vrot.slane %v780, %v783
  %v785 = vsub.f32 %v784, %v24
  %v786 = vsub.f32 %v784, %v25
  %v787 = vsub.f32 %v784, %v26
  %v788 = vsub.f32 %v784, %v27
  %v789 = vmul.f32 %v785, %v785
  %v790 = vmul.f32 %v786, %v786
  %v791 = vmul.f32 %v787, %v787
  %v792 = vmul.f32 %v788, %v788
  %v793 = vmul.f32 %v789, -480.5
  %v794 = vmul.f32 %v790, -480.5
  %v795 = vmul.f32 %v791, -480.5
  %v796 = vmul.f32 %v792, -480.5
  %v797 = vmul.f32 %v793, 1.442695
  %v798 = vpow.pop %v797
  %v799 = vmul.f32 %v794, 1.442695
  %v800 = vpow.pop %v799
  %v801 = vmul.f32 %v795, 1.442695
  %v802 = vpow.pop %v801
  %v803 = vmul.f32 %v796, 1.442695
  %v804 = vpow.pop %v803
  %v805 = vadd.f32 %v798, %v800
  %v806 = vadd.f32 %v805, %v802
  %v807 = vadd.f32 %v806, %v804
  %v808 = vrot.slane %v807, 4
  %v809 = vadd.f32 %v807, %v808
  %v810 = vrot.slane %v809, 2
  %v811 = vadd.f32 %v809, %v810
  %v812 = vrot.slane %v811, 1
  %v813 = vadd.f32 %v811, %v812
  %v814 = vrcp.pop %v813
  %v815 = vmul.f32 %v798, %v814
  %v816 = vmul.f32 %v800, %v814
  %v817 = vmul.f32 %v802, %v814
  %v818 = vmul.f32 %v804, %v814
  %819 = vst [vmem:[#allocation2 + $0x200] sm:$0xff] %v815
  %820 = vst [vmem:[#allocation2 + $0x208] sm:$0xff] %v816
  %821 = vst [vmem:[#allocation2 + $0x210] sm:$0xff] %v817
  %822 = vst [vmem:[#allocation2 + $0x218] sm:$0xff] %v818
  %v823 = vadd.f32 %v776, %v815
  %v824 = vadd.f32 %v777, %v816
  %v825 = vadd.f32 %v778, %v817
  %v826 = vadd.f32 %v779, %v818
  %v827 = vld [vmem:[%s0 + $0x11] sm:$0x1]
  %v828 = vlaneseq
  %v829 = vshrl.u32 %v828, 7
  %v830 = vsub.s32 0, %v829
  %v831 = vrot.slane %v827, %v830
  %v832 = vsub.f32 %v831, %v24
  %v833 = vsub.f32 %v831, %v25
  %v834 = vsub.f32 %v831, %v26
  %v835 = vsub.f32 %v831, %v27
  %v836 = vmul.f32 %v832, %v832
  %v837 = vmul.f32 %v833, %v833
  %v838 = vmul.f32 %v834, %v834
  %v839 = vmul.f32 %v835, %v835
  %v840 = vmul.f32 %v836, -480.5
  %v841 = vmul.f32 %v837, -480.5
  %v842 = vmul.f32 %v838, -480.5
  %v843 = vmul.f32 %v839, -480.5
  %v844 = vmul.f32 %v840, 1.442695
  %v845 = vpow.pop %v844
  %v846 = vmul.f32 %v841, 1.442695
  %v847 = vpow.pop %v846
  %v848 = vmul.f32 %v842, 1.442695
  %v849 = vpow.pop %v848
  %v850 = vmul.f32 %v843, 1.442695
  %v851 = vpow.pop %v850
  %v852 = vadd.f32 %v845, %v847
  %v853 = vadd.f32 %v852, %v849
  %v854 = vadd.f32 %v853, %v851
  %v855 = vrot.slane %v854, 4
  %v856 = vadd.f32 %v854, %v855
  %v857 = vrot.slane %v856, 2
  %v858 = vadd.f32 %v856, %v857
  %v859 = vrot.slane %v858, 1
  %v860 = vadd.f32 %v858, %v859
  %v861 = vrcp.pop %v860
  %v862 = vmul.f32 %v845, %v861
  %v863 = vmul.f32 %v847, %v861
  %v864 = vmul.f32 %v849, %v861
  %v865 = vmul.f32 %v851, %v861
  %866 = vst [vmem:[#allocation2 + $0x220] sm:$0xff] %v862
  %867 = vst [vmem:[#allocation2 + $0x228] sm:$0xff] %v863
  %868 = vst [vmem:[#allocation2 + $0x230] sm:$0xff] %v864
  %869 = vst [vmem:[#allocation2 + $0x238] sm:$0xff] %v865
  %v870 = vadd.f32 %v823, %v862
  %v871 = vadd.f32 %v824, %v863
  %v872 = vadd.f32 %v825, %v864
  %v873 = vadd.f32 %v826, %v865
  %v874 = vld [vmem:[%s0 + $0x12] sm:$0x1]
  %v875 = vlaneseq
  %v876 = vshrl.u32 %v875, 7
  %v877 = vsub.s32 0, %v876
  %v878 = vrot.slane %v874, %v877
  %v879 = vsub.f32 %v878, %v24
  %v880 = vsub.f32 %v878, %v25
  %v881 = vsub.f32 %v878, %v26
  %v882 = vsub.f32 %v878, %v27
  %v883 = vmul.f32 %v879, %v879
  %v884 = vmul.f32 %v880, %v880
  %v885 = vmul.f32 %v881, %v881
  %v886 = vmul.f32 %v882, %v882
  %v887 = vmul.f32 %v883, -480.5
  %v888 = vmul.f32 %v884, -480.5
  %v889 = vmul.f32 %v885, -480.5
  %v890 = vmul.f32 %v886, -480.5
  %v891 = vmul.f32 %v887, 1.442695
  %v892 = vpow.pop %v891
  %v893 = vmul.f32 %v888, 1.442695
  %v894 = vpow.pop %v893
  %v895 = vmul.f32 %v889, 1.442695
  %v896 = vpow.pop %v895
  %v897 = vmul.f32 %v890, 1.442695
  %v898 = vpow.pop %v897
  %v899 = vadd.f32 %v892, %v894
  %v900 = vadd.f32 %v899, %v896
  %v901 = vadd.f32 %v900, %v898
  %v902 = vrot.slane %v901, 4
  %v903 = vadd.f32 %v901, %v902
  %v904 = vrot.slane %v903, 2
  %v905 = vadd.f32 %v903, %v904
  %v906 = vrot.slane %v905, 1
  %v907 = vadd.f32 %v905, %v906
  %v908 = vrcp.pop %v907
  %v909 = vmul.f32 %v892, %v908
  %v910 = vmul.f32 %v894, %v908
  %v911 = vmul.f32 %v896, %v908
  %v912 = vmul.f32 %v898, %v908
  %913 = vst [vmem:[#allocation2 + $0x240] sm:$0xff] %v909
  %914 = vst [vmem:[#allocation2 + $0x248] sm:$0xff] %v910
  %915 = vst [vmem:[#allocation2 + $0x250] sm:$0xff] %v911
  %916 = vst [vmem:[#allocation2 + $0x258] sm:$0xff] %v912
  %v917 = vadd.f32 %v870, %v909
  %v918 = vadd.f32 %v871, %v910
  %v919 = vadd.f32 %v872, %v911
  %v920 = vadd.f32 %v873, %v912
  %v921 = vld [vmem:[%s0 + $0x13] sm:$0x1]
  %v922 = vlaneseq
  %v923 = vshrl.u32 %v922, 7
  %v924 = vsub.s32 0, %v923
  %v925 = vrot.slane %v921, %v924
  %v926 = vsub.f32 %v925, %v24
  %v927 = vsub.f32 %v925, %v25
  %v928 = vsub.f32 %v925, %v26
  %v929 = vsub.f32 %v925, %v27
  %v930 = vmul.f32 %v926, %v926
  %v931 = vmul.f32 %v927, %v927
  %v932 = vmul.f32 %v928, %v928
  %v933 = vmul.f32 %v929, %v929
  %v934 = vmul.f32 %v930, -480.5
  %v935 = vmul.f32 %v931, -480.5
  %v936 = vmul.f32 %v932, -480.5
  %v937 = vmul.f32 %v933, -480.5
  %v938 = vmul.f32 %v934, 1.442695
  %v939 = vpow.pop %v938
  %v940 = vmul.f32 %v935, 1.442695
  %v941 = vpow.pop %v940
  %v942 = vmul.f32 %v936, 1.442695
  %v943 = vpow.pop %v942
  %v944 = vmul.f32 %v937, 1.442695
  %v945 = vpow.pop %v944
  %v946 = vadd.f32 %v939, %v941
  %v947 = vadd.f32 %v946, %v943
  %v948 = vadd.f32 %v947, %v945
  %v949 = vrot.slane %v948, 4
  %v950 = vadd.f32 %v948, %v949
  %v951 = vrot.slane %v950, 2
  %v952 = vadd.f32 %v950, %v951
  %v953 = vrot.slane %v952, 1
  %v954 = vadd.f32 %v952, %v953
  %v955 = vrcp.pop %v954
  %v956 = vmul.f32 %v939, %v955
  %v957 = vmul.f32 %v941, %v955
  %v958 = vmul.f32 %v943, %v955
  %v959 = vmul.f32 %v945, %v955
  %960 = vst [vmem:[#allocation2 + $0x260] sm:$0xff] %v956
  %961 = vst [vmem:[#allocation2 + $0x268] sm:$0xff] %v957
  %962 = vst [vmem:[#allocation2 + $0x270] sm:$0xff] %v958
  %963 = vst [vmem:[#allocation2 + $0x278] sm:$0xff] %v959
  %v964 = vadd.f32 %v917, %v956
  %v965 = vadd.f32 %v918, %v957
  %v966 = vadd.f32 %v919, %v958
  %v967 = vadd.f32 %v920, %v959
  %v968 = vld [vmem:[%s0 + $0x14] sm:$0x1]
  %v969 = vlaneseq
  %v970 = vshrl.u32 %v969, 7
  %v971 = vsub.s32 0, %v970
  %v972 = vrot.slane %v968, %v971
  %v973 = vsub.f32 %v972, %v24
  %v974 = vsub.f32 %v972, %v25
  %v975 = vsub.f32 %v972, %v26
  %v976 = vsub.f32 %v972, %v27
  %v977 = vmul.f32 %v973, %v973
  %v978 = vmul.f32 %v974, %v974
  %v979 = vmul.f32 %v975, %v975
  %v980 = vmul.f32 %v976, %v976
  %v981 = vmul.f32 %v977, -480.5
  %v982 = vmul.f32 %v978, -480.5
  %v983 = vmul.f32 %v979, -480.5
  %v984 = vmul.f32 %v980, -480.5
  %v985 = vmul.f32 %v981, 1.442695
  %v986 = vpow.pop %v985
  %v987 = vmul.f32 %v982, 1.442695
  %v988 = vpow.pop %v987
  %v989 = vmul.f32 %v983, 1.442695
  %v990 = vpow.pop %v989
  %v991 = vmul.f32 %v984, 1.442695
  %v992 = vpow.pop %v991
  %v993 = vadd.f32 %v986, %v988
  %v994 = vadd.f32 %v993, %v990
  %v995 = vadd.f32 %v994, %v992
  %v996 = vrot.slane %v995, 4
  %v997 = vadd.f32 %v995, %v996
  %v998 = vrot.slane %v997, 2
  %v999 = vadd.f32 %v997, %v998
  %v1000 = vrot.slane %v999, 1
  %v1001 = vadd.f32 %v999, %v1000
  %v1002 = vrcp.pop %v1001
  %v1003 = vmul.f32 %v986, %v1002
  %v1004 = vmul.f32 %v988, %v1002
  %v1005 = vmul.f32 %v990, %v1002
  %v1006 = vmul.f32 %v992, %v1002
  %1007 = vst [vmem:[#allocation2 + $0x280] sm:$0xff] %v1003
  %1008 = vst [vmem:[#allocation2 + $0x288] sm:$0xff] %v1004
  %1009 = vst [vmem:[#allocation2 + $0x290] sm:$0xff] %v1005
  %1010 = vst [vmem:[#allocation2 + $0x298] sm:$0xff] %v1006
  %v1011 = vadd.f32 %v964, %v1003
  %v1012 = vadd.f32 %v965, %v1004
  %v1013 = vadd.f32 %v966, %v1005
  %v1014 = vadd.f32 %v967, %v1006
  %v1015 = vld [vmem:[%s0 + $0x15] sm:$0x1]
  %v1016 = vlaneseq
  %v1017 = vshrl.u32 %v1016, 7
  %v1018 = vsub.s32 0, %v1017
  %v1019 = vrot.slane %v1015, %v1018
  %v1020 = vsub.f32 %v1019, %v24
  %v1021 = vsub.f32 %v1019, %v25
  %v1022 = vsub.f32 %v1019, %v26
  %v1023 = vsub.f32 %v1019, %v27
  %v1024 = vmul.f32 %v1020, %v1020
  %v1025 = vmul.f32 %v1021, %v1021
  %v1026 = vmul.f32 %v1022, %v1022
  %v1027 = vmul.f32 %v1023, %v1023
  %v1028 = vmul.f32 %v1024, -480.5
  %v1029 = vmul.f32 %v1025, -480.5
  %v1030 = vmul.f32 %v1026, -480.5
  %v1031 = vmul.f32 %v1027, -480.5
  %v1032 = vmul.f32 %v1028, 1.442695
  %v1033 = vpow.pop %v1032
  %v1034 = vmul.f32 %v1029, 1.442695
  %v1035 = vpow.pop %v1034
  %v1036 = vmul.f32 %v1030, 1.442695
  %v1037 = vpow.pop %v1036
  %v1038 = vmul.f32 %v1031, 1.442695
  %v1039 = vpow.pop %v1038
  %v1040 = vadd.f32 %v1033, %v1035
  %v1041 = vadd.f32 %v1040, %v1037
  %v1042 = vadd.f32 %v1041, %v1039
  %v1043 = vrot.slane %v1042, 4
  %v1044 = vadd.f32 %v1042, %v1043
  %v1045 = vrot.slane %v1044, 2
  %v1046 = vadd.f32 %v1044, %v1045
  %v1047 = vrot.slane %v1046, 1
  %v1048 = vadd.f32 %v1046, %v1047
  %v1049 = vrcp.pop %v1048
  %v1050 = vmul.f32 %v1033, %v1049
  %v1051 = vmul.f32 %v1035, %v1049
  %v1052 = vmul.f32 %v1037, %v1049
  %v1053 = vmul.f32 %v1039, %v1049
  %1054 = vst [vmem:[#allocation2 + $0x2a0] sm:$0xff] %v1050
  %1055 = vst [vmem:[#allocation2 + $0x2a8] sm:$0xff] %v1051
  %1056 = vst [vmem:[#allocation2 + $0x2b0] sm:$0xff] %v1052
  %1057 = vst [vmem:[#allocation2 + $0x2b8] sm:$0xff] %v1053
  %v1058 = vadd.f32 %v1011, %v1050
  %v1059 = vadd.f32 %v1012, %v1051
  %v1060 = vadd.f32 %v1013, %v1052
  %v1061 = vadd.f32 %v1014, %v1053
  %v1062 = vld [vmem:[%s0 + $0x16] sm:$0x1]
  %v1063 = vlaneseq
  %v1064 = vshrl.u32 %v1063, 7
  %v1065 = vsub.s32 0, %v1064
  %v1066 = vrot.slane %v1062, %v1065
  %v1067 = vsub.f32 %v1066, %v24
  %v1068 = vsub.f32 %v1066, %v25
  %v1069 = vsub.f32 %v1066, %v26
  %v1070 = vsub.f32 %v1066, %v27
  %v1071 = vmul.f32 %v1067, %v1067
  %v1072 = vmul.f32 %v1068, %v1068
  %v1073 = vmul.f32 %v1069, %v1069
  %v1074 = vmul.f32 %v1070, %v1070
  %v1075 = vmul.f32 %v1071, -480.5
  %v1076 = vmul.f32 %v1072, -480.5
  %v1077 = vmul.f32 %v1073, -480.5
  %v1078 = vmul.f32 %v1074, -480.5
  %v1079 = vmul.f32 %v1075, 1.442695
  %v1080 = vpow.pop %v1079
  %v1081 = vmul.f32 %v1076, 1.442695
  %v1082 = vpow.pop %v1081
  %v1083 = vmul.f32 %v1077, 1.442695
  %v1084 = vpow.pop %v1083
  %v1085 = vmul.f32 %v1078, 1.442695
  %v1086 = vpow.pop %v1085
  %v1087 = vadd.f32 %v1080, %v1082
  %v1088 = vadd.f32 %v1087, %v1084
  %v1089 = vadd.f32 %v1088, %v1086
  %v1090 = vrot.slane %v1089, 4
  %v1091 = vadd.f32 %v1089, %v1090
  %v1092 = vrot.slane %v1091, 2
  %v1093 = vadd.f32 %v1091, %v1092
  %v1094 = vrot.slane %v1093, 1
  %v1095 = vadd.f32 %v1093, %v1094
  %v1096 = vrcp.pop %v1095
  %v1097 = vmul.f32 %v1080, %v1096
  %v1098 = vmul.f32 %v1082, %v1096
  %v1099 = vmul.f32 %v1084, %v1096
  %v1100 = vmul.f32 %v1086, %v1096
  %1101 = vst [vmem:[#allocation2 + $0x2c0] sm:$0xff] %v1097
  %1102 = vst [vmem:[#allocation2 + $0x2c8] sm:$0xff] %v1098
  %1103 = vst [vmem:[#allocation2 + $0x2d0] sm:$0xff] %v1099
  %1104 = vst [vmem:[#allocation2 + $0x2d8] sm:$0xff] %v1100
  %v1105 = vadd.f32 %v1058, %v1097
  %v1106 = vadd.f32 %v1059, %v1098
  %v1107 = vadd.f32 %v1060, %v1099
  %v1108 = vadd.f32 %v1061, %v1100
  %v1109 = vld [vmem:[%s0 + $0x17] sm:$0x1]
  %v1110 = vlaneseq
  %v1111 = vshrl.u32 %v1110, 7
  %v1112 = vsub.s32 0, %v1111
  %v1113 = vrot.slane %v1109, %v1112
  %v1114 = vsub.f32 %v1113, %v24
  %v1115 = vsub.f32 %v1113, %v25
  %v1116 = vsub.f32 %v1113, %v26
  %v1117 = vsub.f32 %v1113, %v27
  %v1118 = vmul.f32 %v1114, %v1114
  %v1119 = vmul.f32 %v1115, %v1115
  %v1120 = vmul.f32 %v1116, %v1116
  %v1121 = vmul.f32 %v1117, %v1117
  %v1122 = vmul.f32 %v1118, -480.5
  %v1123 = vmul.f32 %v1119, -480.5
  %v1124 = vmul.f32 %v1120, -480.5
  %v1125 = vmul.f32 %v1121, -480.5
  %v1126 = vmul.f32 %v1122, 1.442695
  %v1127 = vpow.pop %v1126
  %v1128 = vmul.f32 %v1123, 1.442695
  %v1129 = vpow.pop %v1128
  %v1130 = vmul.f32 %v1124, 1.442695
  %v1131 = vpow.pop %v1130
  %v1132 = vmul.f32 %v1125, 1.442695
  %v1133 = vpow.pop %v1132
  %v1134 = vadd.f32 %v1127, %v1129
  %v1135 = vadd.f32 %v1134, %v1131
  %v1136 = vadd.f32 %v1135, %v1133
  %v1137 = vrot.slane %v1136, 4
  %v1138 = vadd.f32 %v1136, %v1137
  %v1139 = vrot.slane %v1138, 2
  %v1140 = vadd.f32 %v1138, %v1139
  %v1141 = vrot.slane %v1140, 1
  %v1142 = vadd.f32 %v1140, %v1141
  %v1143 = vrcp.pop %v1142
  %v1144 = vmul.f32 %v1127, %v1143
  %v1145 = vmul.f32 %v1129, %v1143
  %v1146 = vmul.f32 %v1131, %v1143
  %v1147 = vmul.f32 %v1133, %v1143
  %1148 = vst [vmem:[#allocation2 + $0x2e0] sm:$0xff] %v1144
  %1149 = vst [vmem:[#allocation2 + $0x2e8] sm:$0xff] %v1145
  %1150 = vst [vmem:[#allocation2 + $0x2f0] sm:$0xff] %v1146
  %1151 = vst [vmem:[#allocation2 + $0x2f8] sm:$0xff] %v1147
  %v1152 = vadd.f32 %v1105, %v1144
  %v1153 = vadd.f32 %v1106, %v1145
  %v1154 = vadd.f32 %v1107, %v1146
  %v1155 = vadd.f32 %v1108, %v1147
  %v1156 = vld [vmem:[%s0 + $0x18] sm:$0x1]
  %v1157 = vlaneseq
  %v1158 = vshrl.u32 %v1157, 7
  %v1159 = vsub.s32 0, %v1158
  %v1160 = vrot.slane %v1156, %v1159
  %v1161 = vsub.f32 %v1160, %v24
  %v1162 = vsub.f32 %v1160, %v25
  %v1163 = vsub.f32 %v1160, %v26
  %v1164 = vsub.f32 %v1160, %v27
  %v1165 = vmul.f32 %v1161, %v1161
  %v1166 = vmul.f32 %v1162, %v1162
  %v1167 = vmul.f32 %v1163, %v1163
  %v1168 = vmul.f32 %v1164, %v1164
  %v1169 = vmul.f32 %v1165, -480.5
  %v1170 = vmul.f32 %v1166, -480.5
  %v1171 = vmul.f32 %v1167, -480.5
  %v1172 = vmul.f32 %v1168, -480.5
  %v1173 = vmul.f32 %v1169, 1.442695
  %v1174 = vpow.pop %v1173
  %v1175 = vmul.f32 %v1170, 1.442695
  %v1176 = vpow.pop %v1175
  %v1177 = vmul.f32 %v1171, 1.442695
  %v1178 = vpow.pop %v1177
  %v1179 = vmul.f32 %v1172, 1.442695
  %v1180 = vpow.pop %v1179
  %v1181 = vadd.f32 %v1174, %v1176
  %v1182 = vadd.f32 %v1181, %v1178
  %v1183 = vadd.f32 %v1182, %v1180
  %v1184 = vrot.slane %v1183, 4
  %v1185 = vadd.f32 %v1183, %v1184
  %v1186 = vrot.slane %v1185, 2
  %v1187 = vadd.f32 %v1185, %v1186
  %v1188 = vrot.slane %v1187, 1
  %v1189 = vadd.f32 %v1187, %v1188
  %v1190 = vrcp.pop %v1189
  %v1191 = vmul.f32 %v1174, %v1190
  %v1192 = vmul.f32 %v1176, %v1190
  %v1193 = vmul.f32 %v1178, %v1190
  %v1194 = vmul.f32 %v1180, %v1190
  %1195 = vst [vmem:[#allocation2 + $0x300] sm:$0xff] %v1191
  %1196 = vst [vmem:[#allocation2 + $0x308] sm:$0xff] %v1192
  %1197 = vst [vmem:[#allocation2 + $0x310] sm:$0xff] %v1193
  %1198 = vst [vmem:[#allocation2 + $0x318] sm:$0xff] %v1194
  %v1199 = vadd.f32 %v1152, %v1191
  %v1200 = vadd.f32 %v1153, %v1192
  %v1201 = vadd.f32 %v1154, %v1193
  %v1202 = vadd.f32 %v1155, %v1194
  %v1203 = vmul.f32 %v1199, 0.04
  %v1204 = vmul.f32 %v1200, 0.04
  %v1205 = vmul.f32 %v1201, 0.04
  %v1206 = vmul.f32 %v1202, 0.04
  %1207 = vst [vmem:[#allocation4] sm:$0xff] %v1203
  %1208 = vst [vmem:[#allocation4 + $0x8] sm:$0xff] %v1204
  %1209 = vst [vmem:[#allocation4 + $0x10] sm:$0xff] %v1205
  %1210 = vst [vmem:[#allocation4 + $0x18] sm:$0xff] %v1206
  %v1211 = vld [vmem:[%s1] sm:$0x1]
  %v1212 = vlaneseq
  %v1213 = vshrl.u32 %v1212, 7
  %v1214 = vsub.s32 0, %v1213
  %v1215 = vrot.slane %v1211, %v1214
  %v1216 = vsub.f32 %v1215, %v24
  %v1217 = vsub.f32 %v1215, %v25
  %v1218 = vsub.f32 %v1215, %v26
  %v1219 = vsub.f32 %v1215, %v27
  %v1220 = vmul.f32 %v1216, %v1216
  %v1221 = vmul.f32 %v1217, %v1217
  %v1222 = vmul.f32 %v1218, %v1218
  %v1223 = vmul.f32 %v1219, %v1219
  %v1224 = vmul.f32 %v1220, -480.5
  %v1225 = vmul.f32 %v1221, -480.5
  %v1226 = vmul.f32 %v1222, -480.5
  %v1227 = vmul.f32 %v1223, -480.5
  %v1228 = vmul.f32 %v1224, 1.442695
  %v1229 = vpow.pop %v1228
  %v1230 = vmul.f32 %v1225, 1.442695
  %v1231 = vpow.pop %v1230
  %v1232 = vmul.f32 %v1226, 1.442695
  %v1233 = vpow.pop %v1232
  %v1234 = vmul.f32 %v1227, 1.442695
  %v1235 = vpow.pop %v1234
  %v1236 = vadd.f32 %v1229, %v1231
  %v1237 = vadd.f32 %v1236, %v1233
  %v1238 = vadd.f32 %v1237, %v1235
  %v1239 = vrot.slane %v1238, 4
  %v1240 = vadd.f32 %v1238, %v1239
  %v1241 = vrot.slane %v1240, 2
  %v1242 = vadd.f32 %v1240, %v1241
  %v1243 = vrot.slane %v1242, 1
  %v1244 = vadd.f32 %v1242, %v1243
  %v1245 = vrcp.pop %v1244
  %v1246 = vmul.f32 %v1229, %v1245
  %v1247 = vmul.f32 %v1231, %v1245
  %v1248 = vmul.f32 %v1233, %v1245
  %v1249 = vmul.f32 %v1235, %v1245
  %1250 = vst [vmem:[#allocation3] sm:$0xff] %v1246
  %1251 = vst [vmem:[#allocation3 + $0x8] sm:$0xff] %v1247
  %1252 = vst [vmem:[#allocation3 + $0x10] sm:$0xff] %v1248
  %1253 = vst [vmem:[#allocation3 + $0x18] sm:$0xff] %v1249
  %v1254 = vadd.f32 %v1246, 0.0
  %v1255 = vadd.f32 %v1247, 0.0
  %v1256 = vadd.f32 %v1248, 0.0
  %v1257 = vadd.f32 %v1249, 0.0
  %v1258 = vld [vmem:[%s1 + $0x1] sm:$0x1]
  %v1259 = vlaneseq
  %v1260 = vshrl.u32 %v1259, 7
  %v1261 = vsub.s32 0, %v1260
  %v1262 = vrot.slane %v1258, %v1261
  %v1263 = vsub.f32 %v1262, %v24
  %v1264 = vsub.f32 %v1262, %v25
  %v1265 = vsub.f32 %v1262, %v26
  %v1266 = vsub.f32 %v1262, %v27
  %v1267 = vmul.f32 %v1263, %v1263
  %v1268 = vmul.f32 %v1264, %v1264
  %v1269 = vmul.f32 %v1265, %v1265
  %v1270 = vmul.f32 %v1266, %v1266
  %v1271 = vmul.f32 %v1267, -480.5
  %v1272 = vmul.f32 %v1268, -480.5
  %v1273 = vmul.f32 %v1269, -480.5
  %v1274 = vmul.f32 %v1270, -480.5
  %v1275 = vmul.f32 %v1271, 1.442695
  %v1276 = vpow.pop %v1275
  %v1277 = vmul.f32 %v1272, 1.442695
  %v1278 = vpow.pop %v1277
  %v1279 = vmul.f32 %v1273, 1.442695
  %v1280 = vpow.pop %v1279
  %v1281 = vmul.f32 %v1274, 1.442695
  %v1282 = vpow.pop %v1281
  %v1283 = vadd.f32 %v1276, %v1278
  %v1284 = vadd.f32 %v1283, %v1280
  %v1285 = vadd.f32 %v1284, %v1282
  %v1286 = vrot.slane %v1285, 4
  %v1287 = vadd.f32 %v1285, %v1286
  %v1288 = vrot.slane %v1287, 2
  %v1289 = vadd.f32 %v1287, %v1288
  %v1290 = vrot.slane %v1289, 1
  %v1291 = vadd.f32 %v1289, %v1290
  %v1292 = vrcp.pop %v1291
  %v1293 = vmul.f32 %v1276, %v1292
  %v1294 = vmul.f32 %v1278, %v1292
  %v1295 = vmul.f32 %v1280, %v1292
  %v1296 = vmul.f32 %v1282, %v1292
  %1297 = vst [vmem:[#allocation3 + $0x20] sm:$0xff] %v1293
  %1298 = vst [vmem:[#allocation3 + $0x28] sm:$0xff] %v1294
  %1299 = vst [vmem:[#allocation3 + $0x30] sm:$0xff] %v1295
  %1300 = vst [vmem:[#allocation3 + $0x38] sm:$0xff] %v1296
  %v1301 = vadd.f32 %v1254, %v1293
  %v1302 = vadd.f32 %v1255, %v1294
  %v1303 = vadd.f32 %v1256, %v1295
  %v1304 = vadd.f32 %v1257, %v1296
  %v1305 = vld [vmem:[%s1 + $0x2] sm:$0x1]
  %v1306 = vlaneseq
  %v1307 = vshrl.u32 %v1306, 7
  %v1308 = vsub.s32 0, %v1307
  %v1309 = vrot.slane %v1305, %v1308
  %v1310 = vsub.f32 %v1309, %v24
  %v1311 = vsub.f32 %v1309, %v25
  %v1312 = vsub.f32 %v1309, %v26
  %v1313 = vsub.f32 %v1309, %v27
  %v1314 = vmul.f32 %v1310, %v1310
  %v1315 = vmul.f32 %v1311, %v1311
  %v1316 = vmul.f32 %v1312, %v1312
  %v1317 = vmul.f32 %v1313, %v1313
  %v1318 = vmul.f32 %v1314, -480.5
  %v1319 = vmul.f32 %v1315, -480.5
  %v1320 = vmul.f32 %v1316, -480.5
  %v1321 = vmul.f32 %v1317, -480.5
  %v1322 = vmul.f32 %v1318, 1.442695
  %v1323 = vpow.pop %v1322
  %v1324 = vmul.f32 %v1319, 1.442695
  %v1325 = vpow.pop %v1324
  %v1326 = vmul.f32 %v1320, 1.442695
  %v1327 = vpow.pop %v1326
  %v1328 = vmul.f32 %v1321, 1.442695
  %v1329 = vpow.pop %v1328
  %v1330 = vadd.f32 %v1323, %v1325
  %v1331 = vadd.f32 %v1330, %v1327
  %v1332 = vadd.f32 %v1331, %v1329
  %v1333 = vrot.slane %v1332, 4
  %v1334 = vadd.f32 %v1332, %v1333
  %v1335 = vrot.slane %v1334, 2
  %v1336 = vadd.f32 %v1334, %v1335
  %v1337 = vrot.slane %v1336, 1
  %v1338 = vadd.f32 %v1336, %v1337
  %v1339 = vrcp.pop %v1338
  %v1340 = vmul.f32 %v1323, %v1339
  %v1341 = vmul.f32 %v1325, %v1339
  %v1342 = vmul.f32 %v1327, %v1339
  %v1343 = vmul.f32 %v1329, %v1339
  %1344 = vst [vmem:[#allocation3 + $0x40] sm:$0xff] %v1340
  %1345 = vst [vmem:[#allocation3 + $0x48] sm:$0xff] %v1341
  %1346 = vst [vmem:[#allocation3 + $0x50] sm:$0xff] %v1342
  %1347 = vst [vmem:[#allocation3 + $0x58] sm:$0xff] %v1343
  %v1348 = vadd.f32 %v1301, %v1340
  %v1349 = vadd.f32 %v1302, %v1341
  %v1350 = vadd.f32 %v1303, %v1342
  %v1351 = vadd.f32 %v1304, %v1343
  %v1352 = vld [vmem:[%s1 + $0x3] sm:$0x1]
  %v1353 = vlaneseq
  %v1354 = vshrl.u32 %v1353, 7
  %v1355 = vsub.s32 0, %v1354
  %v1356 = vrot.slane %v1352, %v1355
  %v1357 = vsub.f32 %v1356, %v24
  %v1358 = vsub.f32 %v1356, %v25
  %v1359 = vsub.f32 %v1356, %v26
  %v1360 = vsub.f32 %v1356, %v27
  %v1361 = vmul.f32 %v1357, %v1357
  %v1362 = vmul.f32 %v1358, %v1358
  %v1363 = vmul.f32 %v1359, %v1359
  %v1364 = vmul.f32 %v1360, %v1360
  %v1365 = vmul.f32 %v1361, -480.5
  %v1366 = vmul.f32 %v1362, -480.5
  %v1367 = vmul.f32 %v1363, -480.5
  %v1368 = vmul.f32 %v1364, -480.5
  %v1369 = vmul.f32 %v1365, 1.442695
  %v1370 = vpow.pop %v1369
  %v1371 = vmul.f32 %v1366, 1.442695
  %v1372 = vpow.pop %v1371
  %v1373 = vmul.f32 %v1367, 1.442695
  %v1374 = vpow.pop %v1373
  %v1375 = vmul.f32 %v1368, 1.442695
  %v1376 = vpow.pop %v1375
  %v1377 = vadd.f32 %v1370, %v1372
  %v1378 = vadd.f32 %v1377, %v1374
  %v1379 = vadd.f32 %v1378, %v1376
  %v1380 = vrot.slane %v1379, 4
  %v1381 = vadd.f32 %v1379, %v1380
  %v1382 = vrot.slane %v1381, 2
  %v1383 = vadd.f32 %v1381, %v1382
  %v1384 = vrot.slane %v1383, 1
  %v1385 = vadd.f32 %v1383, %v1384
  %v1386 = vrcp.pop %v1385
  %v1387 = vmul.f32 %v1370, %v1386
  %v1388 = vmul.f32 %v1372, %v1386
  %v1389 = vmul.f32 %v1374, %v1386
  %v1390 = vmul.f32 %v1376, %v1386
  %1391 = vst [vmem:[#allocation3 + $0x60] sm:$0xff] %v1387
  %1392 = vst [vmem:[#allocation3 + $0x68] sm:$0xff] %v1388
  %1393 = vst [vmem:[#allocation3 + $0x70] sm:$0xff] %v1389
  %1394 = vst [vmem:[#allocation3 + $0x78] sm:$0xff] %v1390
  %v1395 = vadd.f32 %v1348, %v1387
  %v1396 = vadd.f32 %v1349, %v1388
  %v1397 = vadd.f32 %v1350, %v1389
  %v1398 = vadd.f32 %v1351, %v1390
  %v1399 = vld [vmem:[%s1 + $0x4] sm:$0x1]
  %v1400 = vlaneseq
  %v1401 = vshrl.u32 %v1400, 7
  %v1402 = vsub.s32 0, %v1401
  %v1403 = vrot.slane %v1399, %v1402
  %v1404 = vsub.f32 %v1403, %v24
  %v1405 = vsub.f32 %v1403, %v25
  %v1406 = vsub.f32 %v1403, %v26
  %v1407 = vsub.f32 %v1403, %v27
  %v1408 = vmul.f32 %v1404, %v1404
  %v1409 = vmul.f32 %v1405, %v1405
  %v1410 = vmul.f32 %v1406, %v1406
  %v1411 = vmul.f32 %v1407, %v1407
  %v1412 = vmul.f32 %v1408, -480.5
  %v1413 = vmul.f32 %v1409, -480.5
  %v1414 = vmul.f32 %v1410, -480.5
  %v1415 = vmul.f32 %v1411, -480.5
  %v1416 = vmul.f32 %v1412, 1.442695
  %v1417 = vpow.pop %v1416
  %v1418 = vmul.f32 %v1413, 1.442695
  %v1419 = vpow.pop %v1418
  %v1420 = vmul.f32 %v1414, 1.442695
  %v1421 = vpow.pop %v1420
  %v1422 = vmul.f32 %v1415, 1.442695
  %v1423 = vpow.pop %v1422
  %v1424 = vadd.f32 %v1417, %v1419
  %v1425 = vadd.f32 %v1424, %v1421
  %v1426 = vadd.f32 %v1425, %v1423
  %v1427 = vrot.slane %v1426, 4
  %v1428 = vadd.f32 %v1426, %v1427
  %v1429 = vrot.slane %v1428, 2
  %v1430 = vadd.f32 %v1428, %v1429
  %v1431 = vrot.slane %v1430, 1
  %v1432 = vadd.f32 %v1430, %v1431
  %v1433 = vrcp.pop %v1432
  %v1434 = vmul.f32 %v1417, %v1433
  %v1435 = vmul.f32 %v1419, %v1433
  %v1436 = vmul.f32 %v1421, %v1433
  %v1437 = vmul.f32 %v1423, %v1433
  %1438 = vst [vmem:[#allocation3 + $0x80] sm:$0xff] %v1434
  %1439 = vst [vmem:[#allocation3 + $0x88] sm:$0xff] %v1435
  %1440 = vst [vmem:[#allocation3 + $0x90] sm:$0xff] %v1436
  %1441 = vst [vmem:[#allocation3 + $0x98] sm:$0xff] %v1437
  %v1442 = vadd.f32 %v1395, %v1434
  %v1443 = vadd.f32 %v1396, %v1435
  %v1444 = vadd.f32 %v1397, %v1436
  %v1445 = vadd.f32 %v1398, %v1437
  %v1446 = vld [vmem:[%s1 + $0x5] sm:$0x1]
  %v1447 = vlaneseq
  %v1448 = vshrl.u32 %v1447, 7
  %v1449 = vsub.s32 0, %v1448
  %v1450 = vrot.slane %v1446, %v1449
  %v1451 = vsub.f32 %v1450, %v24
  %v1452 = vsub.f32 %v1450, %v25
  %v1453 = vsub.f32 %v1450, %v26
  %v1454 = vsub.f32 %v1450, %v27
  %v1455 = vmul.f32 %v1451, %v1451
  %v1456 = vmul.f32 %v1452, %v1452
  %v1457 = vmul.f32 %v1453, %v1453
  %v1458 = vmul.f32 %v1454, %v1454
  %v1459 = vmul.f32 %v1455, -480.5
  %v1460 = vmul.f32 %v1456, -480.5
  %v1461 = vmul.f32 %v1457, -480.5
  %v1462 = vmul.f32 %v1458, -480.5
  %v1463 = vmul.f32 %v1459, 1.442695
  %v1464 = vpow.pop %v1463
  %v1465 = vmul.f32 %v1460, 1.442695
  %v1466 = vpow.pop %v1465
  %v1467 = vmul.f32 %v1461, 1.442695
  %v1468 = vpow.pop %v1467
  %v1469 = vmul.f32 %v1462, 1.442695
  %v1470 = vpow.pop %v1469
  %v1471 = vadd.f32 %v1464, %v1466
  %v1472 = vadd.f32 %v1471, %v1468
  %v1473 = vadd.f32 %v1472, %v1470
  %v1474 = vrot.slane %v1473, 4
  %v1475 = vadd.f32 %v1473, %v1474
  %v1476 = vrot.slane %v1475, 2
  %v1477 = vadd.f32 %v1475, %v1476
  %v1478 = vrot.slane %v1477, 1
  %v1479 = vadd.f32 %v1477, %v1478
  %v1480 = vrcp.pop %v1479
  %v1481 = vmul.f32 %v1464, %v1480
  %v1482 = vmul.f32 %v1466, %v1480
  %v1483 = vmul.f32 %v1468, %v1480
  %v1484 = vmul.f32 %v1470, %v1480
  %1485 = vst [vmem:[#allocation3 + $0xa0] sm:$0xff] %v1481
  %1486 = vst [vmem:[#allocation3 + $0xa8] sm:$0xff] %v1482
  %1487 = vst [vmem:[#allocation3 + $0xb0] sm:$0xff] %v1483
  %1488 = vst [vmem:[#allocation3 + $0xb8] sm:$0xff] %v1484
  %v1489 = vadd.f32 %v1442, %v1481
  %v1490 = vadd.f32 %v1443, %v1482
  %v1491 = vadd.f32 %v1444, %v1483
  %v1492 = vadd.f32 %v1445, %v1484
  %v1493 = vld [vmem:[%s1 + $0x6] sm:$0x1]
  %v1494 = vlaneseq
  %v1495 = vshrl.u32 %v1494, 7
  %v1496 = vsub.s32 0, %v1495
  %v1497 = vrot.slane %v1493, %v1496
  %v1498 = vsub.f32 %v1497, %v24
  %v1499 = vsub.f32 %v1497, %v25
  %v1500 = vsub.f32 %v1497, %v26
  %v1501 = vsub.f32 %v1497, %v27
  %v1502 = vmul.f32 %v1498, %v1498
  %v1503 = vmul.f32 %v1499, %v1499
  %v1504 = vmul.f32 %v1500, %v1500
  %v1505 = vmul.f32 %v1501, %v1501
  %v1506 = vmul.f32 %v1502, -480.5
  %v1507 = vmul.f32 %v1503, -480.5
  %v1508 = vmul.f32 %v1504, -480.5
  %v1509 = vmul.f32 %v1505, -480.5
  %v1510 = vmul.f32 %v1506, 1.442695
  %v1511 = vpow.pop %v1510
  %v1512 = vmul.f32 %v1507, 1.442695
  %v1513 = vpow.pop %v1512
  %v1514 = vmul.f32 %v1508, 1.442695
  %v1515 = vpow.pop %v1514
  %v1516 = vmul.f32 %v1509, 1.442695
  %v1517 = vpow.pop %v1516
  %v1518 = vadd.f32 %v1511, %v1513
  %v1519 = vadd.f32 %v1518, %v1515
  %v1520 = vadd.f32 %v1519, %v1517
  %v1521 = vrot.slane %v1520, 4
  %v1522 = vadd.f32 %v1520, %v1521
  %v1523 = vrot.slane %v1522, 2
  %v1524 = vadd.f32 %v1522, %v1523
  %v1525 = vrot.slane %v1524, 1
  %v1526 = vadd.f32 %v1524, %v1525
  %v1527 = vrcp.pop %v1526
  %v1528 = vmul.f32 %v1511, %v1527
  %v1529 = vmul.f32 %v1513, %v1527
  %v1530 = vmul.f32 %v1515, %v1527
  %v1531 = vmul.f32 %v1517, %v1527
  %1532 = vst [vmem:[#allocation3 + $0xc0] sm:$0xff] %v1528
  %1533 = vst [vmem:[#allocation3 + $0xc8] sm:$0xff] %v1529
  %1534 = vst [vmem:[#allocation3 + $0xd0] sm:$0xff] %v1530
  %1535 = vst [vmem:[#allocation3 + $0xd8] sm:$0xff] %v1531
  %v1536 = vadd.f32 %v1489, %v1528
  %v1537 = vadd.f32 %v1490, %v1529
  %v1538 = vadd.f32 %v1491, %v1530
  %v1539 = vadd.f32 %v1492, %v1531
  %v1540 = vld [vmem:[%s1 + $0x7] sm:$0x1]
  %v1541 = vlaneseq
  %v1542 = vshrl.u32 %v1541, 7
  %v1543 = vsub.s32 0, %v1542
  %v1544 = vrot.slane %v1540, %v1543
  %v1545 = vsub.f32 %v1544, %v24
  %v1546 = vsub.f32 %v1544, %v25
  %v1547 = vsub.f32 %v1544, %v26
  %v1548 = vsub.f32 %v1544, %v27
  %v1549 = vmul.f32 %v1545, %v1545
  %v1550 = vmul.f32 %v1546, %v1546
  %v1551 = vmul.f32 %v1547, %v1547
  %v1552 = vmul.f32 %v1548, %v1548
  %v1553 = vmul.f32 %v1549, -480.5
  %v1554 = vmul.f32 %v1550, -480.5
  %v1555 = vmul.f32 %v1551, -480.5
  %v1556 = vmul.f32 %v1552, -480.5
  %v1557 = vmul.f32 %v1553, 1.442695
  %v1558 = vpow.pop %v1557
  %v1559 = vmul.f32 %v1554, 1.442695
  %v1560 = vpow.pop %v1559
  %v1561 = vmul.f32 %v1555, 1.442695
  %v1562 = vpow.pop %v1561
  %v1563 = vmul.f32 %v1556, 1.442695
  %v1564 = vpow.pop %v1563
  %v1565 = vadd.f32 %v1558, %v1560
  %v1566 = vadd.f32 %v1565, %v1562
  %v1567 = vadd.f32 %v1566, %v1564
  %v1568 = vrot.slane %v1567, 4
  %v1569 = vadd.f32 %v1567, %v1568
  %v1570 = vrot.slane %v1569, 2
  %v1571 = vadd.f32 %v1569, %v1570
  %v1572 = vrot.slane %v1571, 1
  %v1573 = vadd.f32 %v1571, %v1572
  %v1574 = vrcp.pop %v1573
  %v1575 = vmul.f32 %v1558, %v1574
  %v1576 = vmul.f32 %v1560, %v1574
  %v1577 = vmul.f32 %v1562, %v1574
  %v1578 = vmul.f32 %v1564, %v1574
  %1579 = vst [vmem:[#allocation3 + $0xe0] sm:$0xff] %v1575
  %1580 = vst [vmem:[#allocation3 + $0xe8] sm:$0xff] %v1576
  %1581 = vst [vmem:[#allocation3 + $0xf0] sm:$0xff] %v1577
  %1582 = vst [vmem:[#allocation3 + $0xf8] sm:$0xff] %v1578
  %v1583 = vadd.f32 %v1536, %v1575
  %v1584 = vadd.f32 %v1537, %v1576
  %v1585 = vadd.f32 %v1538, %v1577
  %v1586 = vadd.f32 %v1539, %v1578
  %v1587 = vld [vmem:[%s1 + $0x8] sm:$0x1]
  %v1588 = vlaneseq
  %v1589 = vshrl.u32 %v1588, 7
  %v1590 = vsub.s32 0, %v1589
  %v1591 = vrot.slane %v1587, %v1590
  %v1592 = vsub.f32 %v1591, %v24
  %v1593 = vsub.f32 %v1591, %v25
  %v1594 = vsub.f32 %v1591, %v26
  %v1595 = vsub.f32 %v1591, %v27
  %v1596 = vmul.f32 %v1592, %v1592
  %v1597 = vmul.f32 %v1593, %v1593
  %v1598 = vmul.f32 %v1594, %v1594
  %v1599 = vmul.f32 %v1595, %v1595
  %v1600 = vmul.f32 %v1596, -480.5
  %v1601 = vmul.f32 %v1597, -480.5
  %v1602 = vmul.f32 %v1598, -480.5
  %v1603 = vmul.f32 %v1599, -480.5
  %v1604 = vmul.f32 %v1600, 1.442695
  %v1605 = vpow.pop %v1604
  %v1606 = vmul.f32 %v1601, 1.442695
  %v1607 = vpow.pop %v1606
  %v1608 = vmul.f32 %v1602, 1.442695
  %v1609 = vpow.pop %v1608
  %v1610 = vmul.f32 %v1603, 1.442695
  %v1611 = vpow.pop %v1610
  %v1612 = vadd.f32 %v1605, %v1607
  %v1613 = vadd.f32 %v1612, %v1609
  %v1614 = vadd.f32 %v1613, %v1611
  %v1615 = vrot.slane %v1614, 4
  %v1616 = vadd.f32 %v1614, %v1615
  %v1617 = vrot.slane %v1616, 2
  %v1618 = vadd.f32 %v1616, %v1617
  %v1619 = vrot.slane %v1618, 1
  %v1620 = vadd.f32 %v1618, %v1619
  %v1621 = vrcp.pop %v1620
  %v1622 = vmul.f32 %v1605, %v1621
  %v1623 = vmul.f32 %v1607, %v1621
  %v1624 = vmul.f32 %v1609, %v1621
  %v1625 = vmul.f32 %v1611, %v1621
  %1626 = vst [vmem:[#allocation3 + $0x100] sm:$0xff] %v1622
  %1627 = vst [vmem:[#allocation3 + $0x108] sm:$0xff] %v1623
  %1628 = vst [vmem:[#allocation3 + $0x110] sm:$0xff] %v1624
  %1629 = vst [vmem:[#allocation3 + $0x118] sm:$0xff] %v1625
  %v1630 = vadd.f32 %v1583, %v1622
  %v1631 = vadd.f32 %v1584, %v1623
  %v1632 = vadd.f32 %v1585, %v1624
  %v1633 = vadd.f32 %v1586, %v1625
  %v1634 = vld [vmem:[%s1 + $0x9] sm:$0x1]
  %v1635 = vlaneseq
  %v1636 = vshrl.u32 %v1635, 7
  %v1637 = vsub.s32 0, %v1636
  %v1638 = vrot.slane %v1634, %v1637
  %v1639 = vsub.f32 %v1638, %v24
  %v1640 = vsub.f32 %v1638, %v25
  %v1641 = vsub.f32 %v1638, %v26
  %v1642 = vsub.f32 %v1638, %v27
  %v1643 = vmul.f32 %v1639, %v1639
  %v1644 = vmul.f32 %v1640, %v1640
  %v1645 = vmul.f32 %v1641, %v1641
  %v1646 = vmul.f32 %v1642, %v1642
  %v1647 = vmul.f32 %v1643, -480.5
  %v1648 = vmul.f32 %v1644, -480.5
  %v1649 = vmul.f32 %v1645, -480.5
  %v1650 = vmul.f32 %v1646, -480.5
  %v1651 = vmul.f32 %v1647, 1.442695
  %v1652 = vpow.pop %v1651
  %v1653 = vmul.f32 %v1648, 1.442695
  %v1654 = vpow.pop %v1653
  %v1655 = vmul.f32 %v1649, 1.442695
  %v1656 = vpow.pop %v1655
  %v1657 = vmul.f32 %v1650, 1.442695
  %v1658 = vpow.pop %v1657
  %v1659 = vadd.f32 %v1652, %v1654
  %v1660 = vadd.f32 %v1659, %v1656
  %v1661 = vadd.f32 %v1660, %v1658
  %v1662 = vrot.slane %v1661, 4
  %v1663 = vadd.f32 %v1661, %v1662
  %v1664 = vrot.slane %v1663, 2
  %v1665 = vadd.f32 %v1663, %v1664
  %v1666 = vrot.slane %v1665, 1
  %v1667 = vadd.f32 %v1665, %v1666
  %v1668 = vrcp.pop %v1667
  %v1669 = vmul.f32 %v1652, %v1668
  %v1670 = vmul.f32 %v1654, %v1668
  %v1671 = vmul.f32 %v1656, %v1668
  %v1672 = vmul.f32 %v1658, %v1668
  %1673 = vst [vmem:[#allocation3 + $0x120] sm:$0xff] %v1669
  %1674 = vst [vmem:[#allocation3 + $0x128] sm:$0xff] %v1670
  %1675 = vst [vmem:[#allocation3 + $0x130] sm:$0xff] %v1671
  %1676 = vst [vmem:[#allocation3 + $0x138] sm:$0xff] %v1672
  %v1677 = vadd.f32 %v1630, %v1669
  %v1678 = vadd.f32 %v1631, %v1670
  %v1679 = vadd.f32 %v1632, %v1671
  %v1680 = vadd.f32 %v1633, %v1672
  %v1681 = vld [vmem:[%s1 + $0xa] sm:$0x1]
  %v1682 = vlaneseq
  %v1683 = vshrl.u32 %v1682, 7
  %v1684 = vsub.s32 0, %v1683
  %v1685 = vrot.slane %v1681, %v1684
  %v1686 = vsub.f32 %v1685, %v24
  %v1687 = vsub.f32 %v1685, %v25
  %v1688 = vsub.f32 %v1685, %v26
  %v1689 = vsub.f32 %v1685, %v27
  %v1690 = vmul.f32 %v1686, %v1686
  %v1691 = vmul.f32 %v1687, %v1687
  %v1692 = vmul.f32 %v1688, %v1688
  %v1693 = vmul.f32 %v1689, %v1689
  %v1694 = vmul.f32 %v1690, -480.5
  %v1695 = vmul.f32 %v1691, -480.5
  %v1696 = vmul.f32 %v1692, -480.5
  %v1697 = vmul.f32 %v1693, -480.5
  %v1698 = vmul.f32 %v1694, 1.442695
  %v1699 = vpow.pop %v1698
  %v1700 = vmul.f32 %v1695, 1.442695
  %v1701 = vpow.pop %v1700
  %v1702 = vmul.f32 %v1696, 1.442695
  %v1703 = vpow.pop %v1702
  %v1704 = vmul.f32 %v1697, 1.442695
  %v1705 = vpow.pop %v1704
  %v1706 = vadd.f32 %v1699, %v1701
  %v1707 = vadd.f32 %v1706, %v1703
  %v1708 = vadd.f32 %v1707, %v1705
  %v1709 = vrot.slane %v1708, 4
  %v1710 = vadd.f32 %v1708, %v1709
  %v1711 = vrot.slane %v1710, 2
  %v1712 = vadd.f32 %v1710, %v1711
  %v1713 = vrot.slane %v1712, 1
  %v1714 = vadd.f32 %v1712, %v1713
  %v1715 = vrcp.pop %v1714
  %v1716 = vmul.f32 %v1699, %v1715
  %v1717 = vmul.f32 %v1701, %v1715
  %v1718 = vmul.f32 %v1703, %v1715
  %v1719 = vmul.f32 %v1705, %v1715
  %1720 = vst [vmem:[#allocation3 + $0x140] sm:$0xff] %v1716
  %1721 = vst [vmem:[#allocation3 + $0x148] sm:$0xff] %v1717
  %1722 = vst [vmem:[#allocation3 + $0x150] sm:$0xff] %v1718
  %1723 = vst [vmem:[#allocation3 + $0x158] sm:$0xff] %v1719
  %v1724 = vadd.f32 %v1677, %v1716
  %v1725 = vadd.f32 %v1678, %v1717
  %v1726 = vadd.f32 %v1679, %v1718
  %v1727 = vadd.f32 %v1680, %v1719
  %v1728 = vld [vmem:[%s1 + $0xb] sm:$0x1]
  %v1729 = vlaneseq
  %v1730 = vshrl.u32 %v1729, 7
  %v1731 = vsub.s32 0, %v1730
  %v1732 = vrot.slane %v1728, %v1731
  %v1733 = vsub.f32 %v1732, %v24
  %v1734 = vsub.f32 %v1732, %v25
  %v1735 = vsub.f32 %v1732, %v26
  %v1736 = vsub.f32 %v1732, %v27
  %v1737 = vmul.f32 %v1733, %v1733
  %v1738 = vmul.f32 %v1734, %v1734
  %v1739 = vmul.f32 %v1735, %v1735
  %v1740 = vmul.f32 %v1736, %v1736
  %v1741 = vmul.f32 %v1737, -480.5
  %v1742 = vmul.f32 %v1738, -480.5
  %v1743 = vmul.f32 %v1739, -480.5
  %v1744 = vmul.f32 %v1740, -480.5
  %v1745 = vmul.f32 %v1741, 1.442695
  %v1746 = vpow.pop %v1745
  %v1747 = vmul.f32 %v1742, 1.442695
  %v1748 = vpow.pop %v1747
  %v1749 = vmul.f32 %v1743, 1.442695
  %v1750 = vpow.pop %v1749
  %v1751 = vmul.f32 %v1744, 1.442695
  %v1752 = vpow.pop %v1751
  %v1753 = vadd.f32 %v1746, %v1748
  %v1754 = vadd.f32 %v1753, %v1750
  %v1755 = vadd.f32 %v1754, %v1752
  %v1756 = vrot.slane %v1755, 4
  %v1757 = vadd.f32 %v1755, %v1756
  %v1758 = vrot.slane %v1757, 2
  %v1759 = vadd.f32 %v1757, %v1758
  %v1760 = vrot.slane %v1759, 1
  %v1761 = vadd.f32 %v1759, %v1760
  %v1762 = vrcp.pop %v1761
  %v1763 = vmul.f32 %v1746, %v1762
  %v1764 = vmul.f32 %v1748, %v1762
  %v1765 = vmul.f32 %v1750, %v1762
  %v1766 = vmul.f32 %v1752, %v1762
  %1767 = vst [vmem:[#allocation3 + $0x160] sm:$0xff] %v1763
  %1768 = vst [vmem:[#allocation3 + $0x168] sm:$0xff] %v1764
  %1769 = vst [vmem:[#allocation3 + $0x170] sm:$0xff] %v1765
  %1770 = vst [vmem:[#allocation3 + $0x178] sm:$0xff] %v1766
  %v1771 = vadd.f32 %v1724, %v1763
  %v1772 = vadd.f32 %v1725, %v1764
  %v1773 = vadd.f32 %v1726, %v1765
  %v1774 = vadd.f32 %v1727, %v1766
  %v1775 = vld [vmem:[%s1 + $0xc] sm:$0x1]
  %v1776 = vlaneseq
  %v1777 = vshrl.u32 %v1776, 7
  %v1778 = vsub.s32 0, %v1777
  %v1779 = vrot.slane %v1775, %v1778
  %v1780 = vsub.f32 %v1779, %v24
  %v1781 = vsub.f32 %v1779, %v25
  %v1782 = vsub.f32 %v1779, %v26
  %v1783 = vsub.f32 %v1779, %v27
  %v1784 = vmul.f32 %v1780, %v1780
  %v1785 = vmul.f32 %v1781, %v1781
  %v1786 = vmul.f32 %v1782, %v1782
  %v1787 = vmul.f32 %v1783, %v1783
  %v1788 = vmul.f32 %v1784, -480.5
  %v1789 = vmul.f32 %v1785, -480.5
  %v1790 = vmul.f32 %v1786, -480.5
  %v1791 = vmul.f32 %v1787, -480.5
  %v1792 = vmul.f32 %v1788, 1.442695
  %v1793 = vpow.pop %v1792
  %v1794 = vmul.f32 %v1789, 1.442695
  %v1795 = vpow.pop %v1794
  %v1796 = vmul.f32 %v1790, 1.442695
  %v1797 = vpow.pop %v1796
  %v1798 = vmul.f32 %v1791, 1.442695
  %v1799 = vpow.pop %v1798
  %v1800 = vadd.f32 %v1793, %v1795
  %v1801 = vadd.f32 %v1800, %v1797
  %v1802 = vadd.f32 %v1801, %v1799
  %v1803 = vrot.slane %v1802, 4
  %v1804 = vadd.f32 %v1802, %v1803
  %v1805 = vrot.slane %v1804, 2
  %v1806 = vadd.f32 %v1804, %v1805
  %v1807 = vrot.slane %v1806, 1
  %v1808 = vadd.f32 %v1806, %v1807
  %v1809 = vrcp.pop %v1808
  %v1810 = vmul.f32 %v1793, %v1809
  %v1811 = vmul.f32 %v1795, %v1809
  %v1812 = vmul.f32 %v1797, %v1809
  %v1813 = vmul.f32 %v1799, %v1809
  %1814 = vst [vmem:[#allocation3 + $0x180] sm:$0xff] %v1810
  %1815 = vst [vmem:[#allocation3 + $0x188] sm:$0xff] %v1811
  %1816 = vst [vmem:[#allocation3 + $0x190] sm:$0xff] %v1812
  %1817 = vst [vmem:[#allocation3 + $0x198] sm:$0xff] %v1813
  %v1818 = vadd.f32 %v1771, %v1810
  %v1819 = vadd.f32 %v1772, %v1811
  %v1820 = vadd.f32 %v1773, %v1812
  %v1821 = vadd.f32 %v1774, %v1813
  %v1822 = vld [vmem:[%s1 + $0xd] sm:$0x1]
  %v1823 = vlaneseq
  %v1824 = vshrl.u32 %v1823, 7
  %v1825 = vsub.s32 0, %v1824
  %v1826 = vrot.slane %v1822, %v1825
  %v1827 = vsub.f32 %v1826, %v24
  %v1828 = vsub.f32 %v1826, %v25
  %v1829 = vsub.f32 %v1826, %v26
  %v1830 = vsub.f32 %v1826, %v27
  %v1831 = vmul.f32 %v1827, %v1827
  %v1832 = vmul.f32 %v1828, %v1828
  %v1833 = vmul.f32 %v1829, %v1829
  %v1834 = vmul.f32 %v1830, %v1830
  %v1835 = vmul.f32 %v1831, -480.5
  %v1836 = vmul.f32 %v1832, -480.5
  %v1837 = vmul.f32 %v1833, -480.5
  %v1838 = vmul.f32 %v1834, -480.5
  %v1839 = vmul.f32 %v1835, 1.442695
  %v1840 = vpow.pop %v1839
  %v1841 = vmul.f32 %v1836, 1.442695
  %v1842 = vpow.pop %v1841
  %v1843 = vmul.f32 %v1837, 1.442695
  %v1844 = vpow.pop %v1843
  %v1845 = vmul.f32 %v1838, 1.442695
  %v1846 = vpow.pop %v1845
  %v1847 = vadd.f32 %v1840, %v1842
  %v1848 = vadd.f32 %v1847, %v1844
  %v1849 = vadd.f32 %v1848, %v1846
  %v1850 = vrot.slane %v1849, 4
  %v1851 = vadd.f32 %v1849, %v1850
  %v1852 = vrot.slane %v1851, 2
  %v1853 = vadd.f32 %v1851, %v1852
  %v1854 = vrot.slane %v1853, 1
  %v1855 = vadd.f32 %v1853, %v1854
  %v1856 = vrcp.pop %v1855
  %v1857 = vmul.f32 %v1840, %v1856
  %v1858 = vmul.f32 %v1842, %v1856
  %v1859 = vmul.f32 %v1844, %v1856
  %v1860 = vmul.f32 %v1846, %v1856
  %1861 = vst [vmem:[#allocation3 + $0x1a0] sm:$0xff] %v1857
  %1862 = vst [vmem:[#allocation3 + $0x1a8] sm:$0xff] %v1858
  %1863 = vst [vmem:[#allocation3 + $0x1b0] sm:$0xff] %v1859
  %1864 = vst [vmem:[#allocation3 + $0x1b8] sm:$0xff] %v1860
  %v1865 = vadd.f32 %v1818, %v1857
  %v1866 = vadd.f32 %v1819, %v1858
  %v1867 = vadd.f32 %v1820, %v1859
  %v1868 = vadd.f32 %v1821, %v1860
  %v1869 = vld [vmem:[%s1 + $0xe] sm:$0x1]
  %v1870 = vlaneseq
  %v1871 = vshrl.u32 %v1870, 7
  %v1872 = vsub.s32 0, %v1871
  %v1873 = vrot.slane %v1869, %v1872
  %v1874 = vsub.f32 %v1873, %v24
  %v1875 = vsub.f32 %v1873, %v25
  %v1876 = vsub.f32 %v1873, %v26
  %v1877 = vsub.f32 %v1873, %v27
  %v1878 = vmul.f32 %v1874, %v1874
  %v1879 = vmul.f32 %v1875, %v1875
  %v1880 = vmul.f32 %v1876, %v1876
  %v1881 = vmul.f32 %v1877, %v1877
  %v1882 = vmul.f32 %v1878, -480.5
  %v1883 = vmul.f32 %v1879, -480.5
  %v1884 = vmul.f32 %v1880, -480.5
  %v1885 = vmul.f32 %v1881, -480.5
  %v1886 = vmul.f32 %v1882, 1.442695
  %v1887 = vpow.pop %v1886
  %v1888 = vmul.f32 %v1883, 1.442695
  %v1889 = vpow.pop %v1888
  %v1890 = vmul.f32 %v1884, 1.442695
  %v1891 = vpow.pop %v1890
  %v1892 = vmul.f32 %v1885, 1.442695
  %v1893 = vpow.pop %v1892
  %v1894 = vadd.f32 %v1887, %v1889
  %v1895 = vadd.f32 %v1894, %v1891
  %v1896 = vadd.f32 %v1895, %v1893
  %v1897 = vrot.slane %v1896, 4
  %v1898 = vadd.f32 %v1896, %v1897
  %v1899 = vrot.slane %v1898, 2
  %v1900 = vadd.f32 %v1898, %v1899
  %v1901 = vrot.slane %v1900, 1
  %v1902 = vadd.f32 %v1900, %v1901
  %v1903 = vrcp.pop %v1902
  %v1904 = vmul.f32 %v1887, %v1903
  %v1905 = vmul.f32 %v1889, %v1903
  %v1906 = vmul.f32 %v1891, %v1903
  %v1907 = vmul.f32 %v1893, %v1903
  %1908 = vst [vmem:[#allocation3 + $0x1c0] sm:$0xff] %v1904
  %1909 = vst [vmem:[#allocation3 + $0x1c8] sm:$0xff] %v1905
  %1910 = vst [vmem:[#allocation3 + $0x1d0] sm:$0xff] %v1906
  %1911 = vst [vmem:[#allocation3 + $0x1d8] sm:$0xff] %v1907
  %v1912 = vadd.f32 %v1865, %v1904
  %v1913 = vadd.f32 %v1866, %v1905
  %v1914 = vadd.f32 %v1867, %v1906
  %v1915 = vadd.f32 %v1868, %v1907
  %v1916 = vld [vmem:[%s1 + $0xf] sm:$0x1]
  %v1917 = vlaneseq
  %v1918 = vshrl.u32 %v1917, 7
  %v1919 = vsub.s32 0, %v1918
  %v1920 = vrot.slane %v1916, %v1919
  %v1921 = vsub.f32 %v1920, %v24
  %v1922 = vsub.f32 %v1920, %v25
  %v1923 = vsub.f32 %v1920, %v26
  %v1924 = vsub.f32 %v1920, %v27
  %v1925 = vmul.f32 %v1921, %v1921
  %v1926 = vmul.f32 %v1922, %v1922
  %v1927 = vmul.f32 %v1923, %v1923
  %v1928 = vmul.f32 %v1924, %v1924
  %v1929 = vmul.f32 %v1925, -480.5
  %v1930 = vmul.f32 %v1926, -480.5
  %v1931 = vmul.f32 %v1927, -480.5
  %v1932 = vmul.f32 %v1928, -480.5
  %v1933 = vmul.f32 %v1929, 1.442695
  %v1934 = vpow.pop %v1933
  %v1935 = vmul.f32 %v1930, 1.442695
  %v1936 = vpow.pop %v1935
  %v1937 = vmul.f32 %v1931, 1.442695
  %v1938 = vpow.pop %v1937
  %v1939 = vmul.f32 %v1932, 1.442695
  %v1940 = vpow.pop %v1939
  %v1941 = vadd.f32 %v1934, %v1936
  %v1942 = vadd.f32 %v1941, %v1938
  %v1943 = vadd.f32 %v1942, %v1940
  %v1944 = vrot.slane %v1943, 4
  %v1945 = vadd.f32 %v1943, %v1944
  %v1946 = vrot.slane %v1945, 2
  %v1947 = vadd.f32 %v1945, %v1946
  %v1948 = vrot.slane %v1947, 1
  %v1949 = vadd.f32 %v1947, %v1948
  %v1950 = vrcp.pop %v1949
  %v1951 = vmul.f32 %v1934, %v1950
  %v1952 = vmul.f32 %v1936, %v1950
  %v1953 = vmul.f32 %v1938, %v1950
  %v1954 = vmul.f32 %v1940, %v1950
  %1955 = vst [vmem:[#allocation3 + $0x1e0] sm:$0xff] %v1951
  %1956 = vst [vmem:[#allocation3 + $0x1e8] sm:$0xff] %v1952
  %1957 = vst [vmem:[#allocation3 + $0x1f0] sm:$0xff] %v1953
  %1958 = vst [vmem:[#allocation3 + $0x1f8] sm:$0xff] %v1954
  %v1959 = vadd.f32 %v1912, %v1951
  %v1960 = vadd.f32 %v1913, %v1952
  %v1961 = vadd.f32 %v1914, %v1953
  %v1962 = vadd.f32 %v1915, %v1954
  %v1963 = vld [vmem:[%s1 + $0x10] sm:$0x1]
  %v1964 = vlaneseq
  %v1965 = vshrl.u32 %v1964, 7
  %v1966 = vsub.s32 0, %v1965
  %v1967 = vrot.slane %v1963, %v1966
  %v1968 = vsub.f32 %v1967, %v24
  %v1969 = vsub.f32 %v1967, %v25
  %v1970 = vsub.f32 %v1967, %v26
  %v1971 = vsub.f32 %v1967, %v27
  %v1972 = vmul.f32 %v1968, %v1968
  %v1973 = vmul.f32 %v1969, %v1969
  %v1974 = vmul.f32 %v1970, %v1970
  %v1975 = vmul.f32 %v1971, %v1971
  %v1976 = vmul.f32 %v1972, -480.5
  %v1977 = vmul.f32 %v1973, -480.5
  %v1978 = vmul.f32 %v1974, -480.5
  %v1979 = vmul.f32 %v1975, -480.5
  %v1980 = vmul.f32 %v1976, 1.442695
  %v1981 = vpow.pop %v1980
  %v1982 = vmul.f32 %v1977, 1.442695
  %v1983 = vpow.pop %v1982
  %v1984 = vmul.f32 %v1978, 1.442695
  %v1985 = vpow.pop %v1984
  %v1986 = vmul.f32 %v1979, 1.442695
  %v1987 = vpow.pop %v1986
  %v1988 = vadd.f32 %v1981, %v1983
  %v1989 = vadd.f32 %v1988, %v1985
  %v1990 = vadd.f32 %v1989, %v1987
  %v1991 = vrot.slane %v1990, 4
  %v1992 = vadd.f32 %v1990, %v1991
  %v1993 = vrot.slane %v1992, 2
  %v1994 = vadd.f32 %v1992, %v1993
  %v1995 = vrot.slane %v1994, 1
  %v1996 = vadd.f32 %v1994, %v1995
  %v1997 = vrcp.pop %v1996
  %v1998 = vmul.f32 %v1981, %v1997
  %v1999 = vmul.f32 %v1983, %v1997
  %v2000 = vmul.f32 %v1985, %v1997
  %v2001 = vmul.f32 %v1987, %v1997
  %2002 = vst [vmem:[#allocation3 + $0x200] sm:$0xff] %v1998
  %2003 = vst [vmem:[#allocation3 + $0x208] sm:$0xff] %v1999
  %2004 = vst [vmem:[#allocation3 + $0x210] sm:$0xff] %v2000
  %2005 = vst [vmem:[#allocation3 + $0x218] sm:$0xff] %v2001
  %v2006 = vadd.f32 %v1959, %v1998
  %v2007 = vadd.f32 %v1960, %v1999
  %v2008 = vadd.f32 %v1961, %v2000
  %v2009 = vadd.f32 %v1962, %v2001
  %v2010 = vld [vmem:[%s1 + $0x11] sm:$0x1]
  %v2011 = vlaneseq
  %v2012 = vshrl.u32 %v2011, 7
  %v2013 = vsub.s32 0, %v2012
  %v2014 = vrot.slane %v2010, %v2013
  %v2015 = vsub.f32 %v2014, %v24
  %v2016 = vsub.f32 %v2014, %v25
  %v2017 = vsub.f32 %v2014, %v26
  %v2018 = vsub.f32 %v2014, %v27
  %v2019 = vmul.f32 %v2015, %v2015
  %v2020 = vmul.f32 %v2016, %v2016
  %v2021 = vmul.f32 %v2017, %v2017
  %v2022 = vmul.f32 %v2018, %v2018
  %v2023 = vmul.f32 %v2019, -480.5
  %v2024 = vmul.f32 %v2020, -480.5
  %v2025 = vmul.f32 %v2021, -480.5
  %v2026 = vmul.f32 %v2022, -480.5
  %v2027 = vmul.f32 %v2023, 1.442695
  %v2028 = vpow.pop %v2027
  %v2029 = vmul.f32 %v2024, 1.442695
  %v2030 = vpow.pop %v2029
  %v2031 = vmul.f32 %v2025, 1.442695
  %v2032 = vpow.pop %v2031
  %v2033 = vmul.f32 %v2026, 1.442695
  %v2034 = vpow.pop %v2033
  %v2035 = vadd.f32 %v2028, %v2030
  %v2036 = vadd.f32 %v2035, %v2032
  %v2037 = vadd.f32 %v2036, %v2034
  %v2038 = vrot.slane %v2037, 4
  %v2039 = vadd.f32 %v2037, %v2038
  %v2040 = vrot.slane %v2039, 2
  %v2041 = vadd.f32 %v2039, %v2040
  %v2042 = vrot.slane %v2041, 1
  %v2043 = vadd.f32 %v2041, %v2042
  %v2044 = vrcp.pop %v2043
  %v2045 = vmul.f32 %v2028, %v2044
  %v2046 = vmul.f32 %v2030, %v2044
  %v2047 = vmul.f32 %v2032, %v2044
  %v2048 = vmul.f32 %v2034, %v2044
  %2049 = vst [vmem:[#allocation3 + $0x220] sm:$0xff] %v2045
  %2050 = vst [vmem:[#allocation3 + $0x228] sm:$0xff] %v2046
  %2051 = vst [vmem:[#allocation3 + $0x230] sm:$0xff] %v2047
  %2052 = vst [vmem:[#allocation3 + $0x238] sm:$0xff] %v2048
  %v2053 = vadd.f32 %v2006, %v2045
  %v2054 = vadd.f32 %v2007, %v2046
  %v2055 = vadd.f32 %v2008, %v2047
  %v2056 = vadd.f32 %v2009, %v2048
  %v2057 = vld [vmem:[%s1 + $0x12] sm:$0x1]
  %v2058 = vlaneseq
  %v2059 = vshrl.u32 %v2058, 7
  %v2060 = vsub.s32 0, %v2059
  %v2061 = vrot.slane %v2057, %v2060
  %v2062 = vsub.f32 %v2061, %v24
  %v2063 = vsub.f32 %v2061, %v25
  %v2064 = vsub.f32 %v2061, %v26
  %v2065 = vsub.f32 %v2061, %v27
  %v2066 = vmul.f32 %v2062, %v2062
  %v2067 = vmul.f32 %v2063, %v2063
  %v2068 = vmul.f32 %v2064, %v2064
  %v2069 = vmul.f32 %v2065, %v2065
  %v2070 = vmul.f32 %v2066, -480.5
  %v2071 = vmul.f32 %v2067, -480.5
  %v2072 = vmul.f32 %v2068, -480.5
  %v2073 = vmul.f32 %v2069, -480.5
  %v2074 = vmul.f32 %v2070, 1.442695
  %v2075 = vpow.pop %v2074
  %v2076 = vmul.f32 %v2071, 1.442695
  %v2077 = vpow.pop %v2076
  %v2078 = vmul.f32 %v2072, 1.442695
  %v2079 = vpow.pop %v2078
  %v2080 = vmul.f32 %v2073, 1.442695
  %v2081 = vpow.pop %v2080
  %v2082 = vadd.f32 %v2075, %v2077
  %v2083 = vadd.f32 %v2082, %v2079
  %v2084 = vadd.f32 %v2083, %v2081
  %v2085 = vrot.slane %v2084, 4
  %v2086 = vadd.f32 %v2084, %v2085
  %v2087 = vrot.slane %v2086, 2
  %v2088 = vadd.f32 %v2086, %v2087
  %v2089 = vrot.slane %v2088, 1
  %v2090 = vadd.f32 %v2088, %v2089
  %v2091 = vrcp.pop %v2090
  %v2092 = vmul.f32 %v2075, %v2091
  %v2093 = vmul.f32 %v2077, %v2091
  %v2094 = vmul.f32 %v2079, %v2091
  %v2095 = vmul.f32 %v2081, %v2091
  %2096 = vst [vmem:[#allocation3 + $0x240] sm:$0xff] %v2092
  %2097 = vst [vmem:[#allocation3 + $0x248] sm:$0xff] %v2093
  %2098 = vst [vmem:[#allocation3 + $0x250] sm:$0xff] %v2094
  %2099 = vst [vmem:[#allocation3 + $0x258] sm:$0xff] %v2095
  %v2100 = vadd.f32 %v2053, %v2092
  %v2101 = vadd.f32 %v2054, %v2093
  %v2102 = vadd.f32 %v2055, %v2094
  %v2103 = vadd.f32 %v2056, %v2095
  %v2104 = vld [vmem:[%s1 + $0x13] sm:$0x1]
  %v2105 = vlaneseq
  %v2106 = vshrl.u32 %v2105, 7
  %v2107 = vsub.s32 0, %v2106
  %v2108 = vrot.slane %v2104, %v2107
  %v2109 = vsub.f32 %v2108, %v24
  %v2110 = vsub.f32 %v2108, %v25
  %v2111 = vsub.f32 %v2108, %v26
  %v2112 = vsub.f32 %v2108, %v27
  %v2113 = vmul.f32 %v2109, %v2109
  %v2114 = vmul.f32 %v2110, %v2110
  %v2115 = vmul.f32 %v2111, %v2111
  %v2116 = vmul.f32 %v2112, %v2112
  %v2117 = vmul.f32 %v2113, -480.5
  %v2118 = vmul.f32 %v2114, -480.5
  %v2119 = vmul.f32 %v2115, -480.5
  %v2120 = vmul.f32 %v2116, -480.5
  %v2121 = vmul.f32 %v2117, 1.442695
  %v2122 = vpow.pop %v2121
  %v2123 = vmul.f32 %v2118, 1.442695
  %v2124 = vpow.pop %v2123
  %v2125 = vmul.f32 %v2119, 1.442695
  %v2126 = vpow.pop %v2125
  %v2127 = vmul.f32 %v2120, 1.442695
  %v2128 = vpow.pop %v2127
  %v2129 = vadd.f32 %v2122, %v2124
  %v2130 = vadd.f32 %v2129, %v2126
  %v2131 = vadd.f32 %v2130, %v2128
  %v2132 = vrot.slane %v2131, 4
  %v2133 = vadd.f32 %v2131, %v2132
  %v2134 = vrot.slane %v2133, 2
  %v2135 = vadd.f32 %v2133, %v2134
  %v2136 = vrot.slane %v2135, 1
  %v2137 = vadd.f32 %v2135, %v2136
  %v2138 = vrcp.pop %v2137
  %v2139 = vmul.f32 %v2122, %v2138
  %v2140 = vmul.f32 %v2124, %v2138
  %v2141 = vmul.f32 %v2126, %v2138
  %v2142 = vmul.f32 %v2128, %v2138
  %2143 = vst [vmem:[#allocation3 + $0x260] sm:$0xff] %v2139
  %2144 = vst [vmem:[#allocation3 + $0x268] sm:$0xff] %v2140
  %2145 = vst [vmem:[#allocation3 + $0x270] sm:$0xff] %v2141
  %2146 = vst [vmem:[#allocation3 + $0x278] sm:$0xff] %v2142
  %v2147 = vadd.f32 %v2100, %v2139
  %v2148 = vadd.f32 %v2101, %v2140
  %v2149 = vadd.f32 %v2102, %v2141
  %v2150 = vadd.f32 %v2103, %v2142
  %v2151 = vld [vmem:[%s1 + $0x14] sm:$0x1]
  %v2152 = vlaneseq
  %v2153 = vshrl.u32 %v2152, 7
  %v2154 = vsub.s32 0, %v2153
  %v2155 = vrot.slane %v2151, %v2154
  %v2156 = vsub.f32 %v2155, %v24
  %v2157 = vsub.f32 %v2155, %v25
  %v2158 = vsub.f32 %v2155, %v26
  %v2159 = vsub.f32 %v2155, %v27
  %v2160 = vmul.f32 %v2156, %v2156
  %v2161 = vmul.f32 %v2157, %v2157
  %v2162 = vmul.f32 %v2158, %v2158
  %v2163 = vmul.f32 %v2159, %v2159
  %v2164 = vmul.f32 %v2160, -480.5
  %v2165 = vmul.f32 %v2161, -480.5
  %v2166 = vmul.f32 %v2162, -480.5
  %v2167 = vmul.f32 %v2163, -480.5
  %v2168 = vmul.f32 %v2164, 1.442695
  %v2169 = vpow.pop %v2168
  %v2170 = vmul.f32 %v2165, 1.442695
  %v2171 = vpow.pop %v2170
  %v2172 = vmul.f32 %v2166, 1.442695
  %v2173 = vpow.pop %v2172
  %v2174 = vmul.f32 %v2167, 1.442695
  %v2175 = vpow.pop %v2174
  %v2176 = vadd.f32 %v2169, %v2171
  %v2177 = vadd.f32 %v2176, %v2173
  %v2178 = vadd.f32 %v2177, %v2175
  %v2179 = vrot.slane %v2178, 4
  %v2180 = vadd.f32 %v2178, %v2179
  %v2181 = vrot.slane %v2180, 2
  %v2182 = vadd.f32 %v2180, %v2181
  %v2183 = vrot.slane %v2182, 1
  %v2184 = vadd.f32 %v2182, %v2183
  %v2185 = vrcp.pop %v2184
  %v2186 = vmul.f32 %v2169, %v2185
  %v2187 = vmul.f32 %v2171, %v2185
  %v2188 = vmul.f32 %v2173, %v2185
  %v2189 = vmul.f32 %v2175, %v2185
  %2190 = vst [vmem:[#allocation3 + $0x280] sm:$0xff] %v2186
  %2191 = vst [vmem:[#allocation3 + $0x288] sm:$0xff] %v2187
  %2192 = vst [vmem:[#allocation3 + $0x290] sm:$0xff] %v2188
  %2193 = vst [vmem:[#allocation3 + $0x298] sm:$0xff] %v2189
  %v2194 = vadd.f32 %v2147, %v2186
  %v2195 = vadd.f32 %v2148, %v2187
  %v2196 = vadd.f32 %v2149, %v2188
  %v2197 = vadd.f32 %v2150, %v2189
  %v2198 = vld [vmem:[%s1 + $0x15] sm:$0x1]
  %v2199 = vlaneseq
  %v2200 = vshrl.u32 %v2199, 7
  %v2201 = vsub.s32 0, %v2200
  %v2202 = vrot.slane %v2198, %v2201
  %v2203 = vsub.f32 %v2202, %v24
  %v2204 = vsub.f32 %v2202, %v25
  %v2205 = vsub.f32 %v2202, %v26
  %v2206 = vsub.f32 %v2202, %v27
  %v2207 = vmul.f32 %v2203, %v2203
  %v2208 = vmul.f32 %v2204, %v2204
  %v2209 = vmul.f32 %v2205, %v2205
  %v2210 = vmul.f32 %v2206, %v2206
  %v2211 = vmul.f32 %v2207, -480.5
  %v2212 = vmul.f32 %v2208, -480.5
  %v2213 = vmul.f32 %v2209, -480.5
  %v2214 = vmul.f32 %v2210, -480.5
  %v2215 = vmul.f32 %v2211, 1.442695
  %v2216 = vpow.pop %v2215
  %v2217 = vmul.f32 %v2212, 1.442695
  %v2218 = vpow.pop %v2217
  %v2219 = vmul.f32 %v2213, 1.442695
  %v2220 = vpow.pop %v2219
  %v2221 = vmul.f32 %v2214, 1.442695
  %v2222 = vpow.pop %v2221
  %v2223 = vadd.f32 %v2216, %v2218
  %v2224 = vadd.f32 %v2223, %v2220
  %v2225 = vadd.f32 %v2224, %v2222
  %v2226 = vrot.slane %v2225, 4
  %v2227 = vadd.f32 %v2225, %v2226
  %v2228 = vrot.slane %v2227, 2
  %v2229 = vadd.f32 %v2227, %v2228
  %v2230 = vrot.slane %v2229, 1
  %v2231 = vadd.f32 %v2229, %v2230
  %v2232 = vrcp.pop %v2231
  %v2233 = vmul.f32 %v2216, %v2232
  %v2234 = vmul.f32 %v2218, %v2232
  %v2235 = vmul.f32 %v2220, %v2232
  %v2236 = vmul.f32 %v2222, %v2232
  %2237 = vst [vmem:[#allocation3 + $0x2a0] sm:$0xff] %v2233
  %2238 = vst [vmem:[#allocation3 + $0x2a8] sm:$0xff] %v2234
  %2239 = vst [vmem:[#allocation3 + $0x2b0] sm:$0xff] %v2235
  %2240 = vst [vmem:[#allocation3 + $0x2b8] sm:$0xff] %v2236
  %v2241 = vadd.f32 %v2194, %v2233
  %v2242 = vadd.f32 %v2195, %v2234
  %v2243 = vadd.f32 %v2196, %v2235
  %v2244 = vadd.f32 %v2197, %v2236
  %v2245 = vld [vmem:[%s1 + $0x16] sm:$0x1]
  %v2246 = vlaneseq
  %v2247 = vshrl.u32 %v2246, 7
  %v2248 = vsub.s32 0, %v2247
  %v2249 = vrot.slane %v2245, %v2248
  %v2250 = vsub.f32 %v2249, %v24
  %v2251 = vsub.f32 %v2249, %v25
  %v2252 = vsub.f32 %v2249, %v26
  %v2253 = vsub.f32 %v2249, %v27
  %v2254 = vmul.f32 %v2250, %v2250
  %v2255 = vmul.f32 %v2251, %v2251
  %v2256 = vmul.f32 %v2252, %v2252
  %v2257 = vmul.f32 %v2253, %v2253
  %v2258 = vmul.f32 %v2254, -480.5
  %v2259 = vmul.f32 %v2255, -480.5
  %v2260 = vmul.f32 %v2256, -480.5
  %v2261 = vmul.f32 %v2257, -480.5
  %v2262 = vmul.f32 %v2258, 1.442695
  %v2263 = vpow.pop %v2262
  %v2264 = vmul.f32 %v2259, 1.442695
  %v2265 = vpow.pop %v2264
  %v2266 = vmul.f32 %v2260, 1.442695
  %v2267 = vpow.pop %v2266
  %v2268 = vmul.f32 %v2261, 1.442695
  %v2269 = vpow.pop %v2268
  %v2270 = vadd.f32 %v2263, %v2265
  %v2271 = vadd.f32 %v2270, %v2267
  %v2272 = vadd.f32 %v2271, %v2269
  %v2273 = vrot.slane %v2272, 4
  %v2274 = vadd.f32 %v2272, %v2273
  %v2275 = vrot.slane %v2274, 2
  %v2276 = vadd.f32 %v2274, %v2275
  %v2277 = vrot.slane %v2276, 1
  %v2278 = vadd.f32 %v2276, %v2277
  %v2279 = vrcp.pop %v2278
  %v2280 = vmul.f32 %v2263, %v2279
  %v2281 = vmul.f32 %v2265, %v2279
  %v2282 = vmul.f32 %v2267, %v2279
  %v2283 = vmul.f32 %v2269, %v2279
  %2284 = vst [vmem:[#allocation3 + $0x2c0] sm:$0xff] %v2280
  %2285 = vst [vmem:[#allocation3 + $0x2c8] sm:$0xff] %v2281
  %2286 = vst [vmem:[#allocation3 + $0x2d0] sm:$0xff] %v2282
  %2287 = vst [vmem:[#allocation3 + $0x2d8] sm:$0xff] %v2283
  %v2288 = vadd.f32 %v2241, %v2280
  %v2289 = vadd.f32 %v2242, %v2281
  %v2290 = vadd.f32 %v2243, %v2282
  %v2291 = vadd.f32 %v2244, %v2283
  %v2292 = vld [vmem:[%s1 + $0x17] sm:$0x1]
  %v2293 = vlaneseq
  %v2294 = vshrl.u32 %v2293, 7
  %v2295 = vsub.s32 0, %v2294
  %v2296 = vrot.slane %v2292, %v2295
  %v2297 = vsub.f32 %v2296, %v24
  %v2298 = vsub.f32 %v2296, %v25
  %v2299 = vsub.f32 %v2296, %v26
  %v2300 = vsub.f32 %v2296, %v27
  %v2301 = vmul.f32 %v2297, %v2297
  %v2302 = vmul.f32 %v2298, %v2298
  %v2303 = vmul.f32 %v2299, %v2299
  %v2304 = vmul.f32 %v2300, %v2300
  %v2305 = vmul.f32 %v2301, -480.5
  %v2306 = vmul.f32 %v2302, -480.5
  %v2307 = vmul.f32 %v2303, -480.5
  %v2308 = vmul.f32 %v2304, -480.5
  %v2309 = vmul.f32 %v2305, 1.442695
  %v2310 = vpow.pop %v2309
  %v2311 = vmul.f32 %v2306, 1.442695
  %v2312 = vpow.pop %v2311
  %v2313 = vmul.f32 %v2307, 1.442695
  %v2314 = vpow.pop %v2313
  %v2315 = vmul.f32 %v2308, 1.442695
  %v2316 = vpow.pop %v2315
  %v2317 = vadd.f32 %v2310, %v2312
  %v2318 = vadd.f32 %v2317, %v2314
  %v2319 = vadd.f32 %v2318, %v2316
  %v2320 = vrot.slane %v2319, 4
  %v2321 = vadd.f32 %v2319, %v2320
  %v2322 = vrot.slane %v2321, 2
  %v2323 = vadd.f32 %v2321, %v2322
  %v2324 = vrot.slane %v2323, 1
  %v2325 = vadd.f32 %v2323, %v2324
  %v2326 = vrcp.pop %v2325
  %v2327 = vmul.f32 %v2310, %v2326
  %v2328 = vmul.f32 %v2312, %v2326
  %v2329 = vmul.f32 %v2314, %v2326
  %v2330 = vmul.f32 %v2316, %v2326
  %2331 = vst [vmem:[#allocation3 + $0x2e0] sm:$0xff] %v2327
  %2332 = vst [vmem:[#allocation3 + $0x2e8] sm:$0xff] %v2328
  %2333 = vst [vmem:[#allocation3 + $0x2f0] sm:$0xff] %v2329
  %2334 = vst [vmem:[#allocation3 + $0x2f8] sm:$0xff] %v2330
  %v2335 = vadd.f32 %v2288, %v2327
  %v2336 = vadd.f32 %v2289, %v2328
  %v2337 = vadd.f32 %v2290, %v2329
  %v2338 = vadd.f32 %v2291, %v2330
  %v2339 = vld [vmem:[%s1 + $0x18] sm:$0x1]
  %v2340 = vlaneseq
  %v2341 = vshrl.u32 %v2340, 7
  %v2342 = vsub.s32 0, %v2341
  %v2343 = vrot.slane %v2339, %v2342
  %v2344 = vsub.f32 %v2343, %v24
  %v2345 = vsub.f32 %v2343, %v25
  %v2346 = vsub.f32 %v2343, %v26
  %v2347 = vsub.f32 %v2343, %v27
  %v2348 = vmul.f32 %v2344, %v2344
  %v2349 = vmul.f32 %v2345, %v2345
  %v2350 = vmul.f32 %v2346, %v2346
  %v2351 = vmul.f32 %v2347, %v2347
  %v2352 = vmul.f32 %v2348, -480.5
  %v2353 = vmul.f32 %v2349, -480.5
  %v2354 = vmul.f32 %v2350, -480.5
  %v2355 = vmul.f32 %v2351, -480.5
  %v2356 = vmul.f32 %v2352, 1.442695
  %v2357 = vpow.pop %v2356
  %v2358 = vmul.f32 %v2353, 1.442695
  %v2359 = vpow.pop %v2358
  %v2360 = vmul.f32 %v2354, 1.442695
  %v2361 = vpow.pop %v2360
  %v2362 = vmul.f32 %v2355, 1.442695
  %v2363 = vpow.pop %v2362
  %v2364 = vadd.f32 %v2357, %v2359
  %v2365 = vadd.f32 %v2364, %v2361
  %v2366 = vadd.f32 %v2365, %v2363
  %v2367 = vrot.slane %v2366, 4
  %v2368 = vadd.f32 %v2366, %v2367
  %v2369 = vrot.slane %v2368, 2
  %v2370 = vadd.f32 %v2368, %v2369
  %v2371 = vrot.slane %v2370, 1
  %v2372 = vadd.f32 %v2370, %v2371
  %v2373 = vrcp.pop %v2372
  %v2374 = vmul.f32 %v2357, %v2373
  %v2375 = vmul.f32 %v2359, %v2373
  %v2376 = vmul.f32 %v2361, %v2373
  %v2377 = vmul.f32 %v2363, %v2373
  %2378 = vst [vmem:[#allocation3 + $0x300] sm:$0xff] %v2374
  %2379 = vst [vmem:[#allocation3 + $0x308] sm:$0xff] %v2375
  %2380 = vst [vmem:[#allocation3 + $0x310] sm:$0xff] %v2376
  %2381 = vst [vmem:[#allocation3 + $0x318] sm:$0xff] %v2377
  %v2382 = vadd.f32 %v2335, %v2374
  %v2383 = vadd.f32 %v2336, %v2375
  %v2384 = vadd.f32 %v2337, %v2376
  %v2385 = vadd.f32 %v2338, %v2377
  %v2386 = vmul.f32 %v2382, 0.04
  %v2387 = vmul.f32 %v2383, 0.04
  %v2388 = vmul.f32 %v2384, 0.04
  %v2389 = vmul.f32 %v2385, 0.04
  %2390 = vst [vmem:[#allocation5] sm:$0xff] %v2386
  %2391 = vst [vmem:[#allocation5 + $0x8] sm:$0xff] %v2387
  %2392 = vst [vmem:[#allocation5 + $0x10] sm:$0xff] %v2388
  %2393 = vst [vmem:[#allocation5 + $0x18] sm:$0xff] %v2389
  loop: start=0, step=1, limit=32
  $region10: #{local_mutual_information.1} parent=0 // loop_pre_header
    _
  $region11: #{local_mutual_information.1} parent=0 // loop_header
    %s2395 = sphi 0, %s2399
    %p2396 = scmp.ge.s32.totalorder %s2395, 32
    %v2400 = vphi 0.0, %v2930
  $region12: #{local_mutual_information.1} parent=0 // loop_header_branch
    %2398 = sbr.rel (%p2396) target = $region16
  $region13: #{local_mutual_information.1} parent=0 // loop_body
    %s2401 = scalar_lea.vmem [#allocation3], %s2395
    %v2402 = vld [vmem:[%s2401] sm:$0x1]
    %v2403 = vld [vmem:[#allocation2] sm:$0xff]
    %v2404 = vld [vmem:[#allocation2 + $0x8] sm:$0xff]
    %v2405 = vld [vmem:[#allocation2 + $0x10] sm:$0xff]
    %v2406 = vld [vmem:[#allocation2 + $0x18] sm:$0xff]
    %v2407 = vlaneseq
    %v2408 = vshrl.u32 %v2407, 7
    %v2409 = vsub.s32 0, %v2408
    %v2410 = vrot.slane %v2402, %v2409
    %v2411 = vmul.f32 %v2403, %v2410
    %v2412 = vmul.f32 %v2404, %v2410
    %v2413 = vmul.f32 %v2405, %v2410
    %v2414 = vmul.f32 %v2406, %v2410
    %v2415 = vadd.f32 %v2411, 0.0
    %v2416 = vadd.f32 %v2412, 0.0
    %v2417 = vadd.f32 %v2413, 0.0
    %v2418 = vadd.f32 %v2414, 0.0
    %s2419 = sadd.s32 %s2395, 32
    %s2420 = scalar_lea.vmem [#allocation3], %s2419
    %v2421 = vld [vmem:[%s2420] sm:$0x1]
    %v2422 = vld [vmem:[#allocation2 + $0x20] sm:$0xff]
    %v2423 = vld [vmem:[#allocation2 + $0x28] sm:$0xff]
    %v2424 = vld [vmem:[#allocation2 + $0x30] sm:$0xff]
    %v2425 = vld [vmem:[#allocation2 + $0x38] sm:$0xff]
    %v2426 = vlaneseq
    %v2427 = vshrl.u32 %v2426, 7
    %v2428 = vsub.s32 0, %v2427
    %v2429 = vrot.slane %v2421, %v2428
    %v2430 = vmul.f32 %v2422, %v2429
    %v2431 = vmul.f32 %v2423, %v2429
    %v2432 = vmul.f32 %v2424, %v2429
    %v2433 = vmul.f32 %v2425, %v2429
    %v2434 = vadd.f32 %v2415, %v2430
    %v2435 = vadd.f32 %v2416, %v2431
    %v2436 = vadd.f32 %v2417, %v2432
    %v2437 = vadd.f32 %v2418, %v2433
    %s2438 = sadd.s32 %s2395, 64
    %s2439 = scalar_lea.vmem [#allocation3], %s2438
    %v2440 = vld [vmem:[%s2439] sm:$0x1]
    %v2441 = vld [vmem:[#allocation2 + $0x40] sm:$0xff]
    %v2442 = vld [vmem:[#allocation2 + $0x48] sm:$0xff]
    %v2443 = vld [vmem:[#allocation2 + $0x50] sm:$0xff]
    %v2444 = vld [vmem:[#allocation2 + $0x58] sm:$0xff]
    %v2445 = vlaneseq
    %v2446 = vshrl.u32 %v2445, 7
    %v2447 = vsub.s32 0, %v2446
    %v2448 = vrot.slane %v2440, %v2447
    %v2449 = vmul.f32 %v2441, %v2448
    %v2450 = vmul.f32 %v2442, %v2448
    %v2451 = vmul.f32 %v2443, %v2448
    %v2452 = vmul.f32 %v2444, %v2448
    %v2453 = vadd.f32 %v2434, %v2449
    %v2454 = vadd.f32 %v2435, %v2450
    %v2455 = vadd.f32 %v2436, %v2451
    %v2456 = vadd.f32 %v2437, %v2452
    %s2457 = sadd.s32 %s2395, 96
    %s2458 = scalar_lea.vmem [#allocation3], %s2457
    %v2459 = vld [vmem:[%s2458] sm:$0x1]
    %v2460 = vld [vmem:[#allocation2 + $0x60] sm:$0xff]
    %v2461 = vld [vmem:[#allocation2 + $0x68] sm:$0xff]
    %v2462 = vld [vmem:[#allocation2 + $0x70] sm:$0xff]
    %v2463 = vld [vmem:[#allocation2 + $0x78] sm:$0xff]
    %v2464 = vlaneseq
    %v2465 = vshrl.u32 %v2464, 7
    %v2466 = vsub.s32 0, %v2465
    %v2467 = vrot.slane %v2459, %v2466
    %v2468 = vmul.f32 %v2460, %v2467
    %v2469 = vmul.f32 %v2461, %v2467
    %v2470 = vmul.f32 %v2462, %v2467
    %v2471 = vmul.f32 %v2463, %v2467
    %v2472 = vadd.f32 %v2453, %v2468
    %v2473 = vadd.f32 %v2454, %v2469
    %v2474 = vadd.f32 %v2455, %v2470
    %v2475 = vadd.f32 %v2456, %v2471
    %s2476 = sadd.s32 %s2395, 128
    %s2477 = scalar_lea.vmem [#allocation3], %s2476
    %v2478 = vld [vmem:[%s2477] sm:$0x1]
    %v2479 = vld [vmem:[#allocation2 + $0x80] sm:$0xff]
    %v2480 = vld [vmem:[#allocation2 + $0x88] sm:$0xff]
    %v2481 = vld [vmem:[#allocation2 + $0x90] sm:$0xff]
    %v2482 = vld [vmem:[#allocation2 + $0x98] sm:$0xff]
    %v2483 = vlaneseq
    %v2484 = vshrl.u32 %v2483, 7
    %v2485 = vsub.s32 0, %v2484
    %v2486 = vrot.slane %v2478, %v2485
    %v2487 = vmul.f32 %v2479, %v2486
    %v2488 = vmul.f32 %v2480, %v2486
    %v2489 = vmul.f32 %v2481, %v2486
    %v2490 = vmul.f32 %v2482, %v2486
    %v2491 = vadd.f32 %v2472, %v2487
    %v2492 = vadd.f32 %v2473, %v2488
    %v2493 = vadd.f32 %v2474, %v2489
    %v2494 = vadd.f32 %v2475, %v2490
    %s2495 = sadd.s32 %s2395, 160
    %s2496 = scalar_lea.vmem [#allocation3], %s2495
    %v2497 = vld [vmem:[%s2496] sm:$0x1]
    %v2498 = vld [vmem:[#allocation2 + $0xa0] sm:$0xff]
    %v2499 = vld [vmem:[#allocation2 + $0xa8] sm:$0xff]
    %v2500 = vld [vmem:[#allocation2 + $0xb0] sm:$0xff]
    %v2501 = vld [vmem:[#allocation2 + $0xb8] sm:$0xff]
    %v2502 = vlaneseq
    %v2503 = vshrl.u32 %v2502, 7
    %v2504 = vsub.s32 0, %v2503
    %v2505 = vrot.slane %v2497, %v2504
    %v2506 = vmul.f32 %v2498, %v2505
    %v2507 = vmul.f32 %v2499, %v2505
    %v2508 = vmul.f32 %v2500, %v2505
    %v2509 = vmul.f32 %v2501, %v2505
    %v2510 = vadd.f32 %v2491, %v2506
    %v2511 = vadd.f32 %v2492, %v2507
    %v2512 = vadd.f32 %v2493, %v2508
    %v2513 = vadd.f32 %v2494, %v2509
    %s2514 = sadd.s32 %s2395, 192
    %s2515 = scalar_lea.vmem [#allocation3], %s2514
    %v2516 = vld [vmem:[%s2515] sm:$0x1]
    %v2517 = vld [vmem:[#allocation2 + $0xc0] sm:$0xff]
    %v2518 = vld [vmem:[#allocation2 + $0xc8] sm:$0xff]
    %v2519 = vld [vmem:[#allocation2 + $0xd0] sm:$0xff]
    %v2520 = vld [vmem:[#allocation2 + $0xd8] sm:$0xff]
    %v2521 = vlaneseq
    %v2522 = vshrl.u32 %v2521, 7
    %v2523 = vsub.s32 0, %v2522
    %v2524 = vrot.slane %v2516, %v2523
    %v2525 = vmul.f32 %v2517, %v2524
    %v2526 = vmul.f32 %v2518, %v2524
    %v2527 = vmul.f32 %v2519, %v2524
    %v2528 = vmul.f32 %v2520, %v2524
    %v2529 = vadd.f32 %v2510, %v2525
    %v2530 = vadd.f32 %v2511, %v2526
    %v2531 = vadd.f32 %v2512, %v2527
    %v2532 = vadd.f32 %v2513, %v2528
    %s2533 = sadd.s32 %s2395, 224
    %s2534 = scalar_lea.vmem [#allocation3], %s2533
    %v2535 = vld [vmem:[%s2534] sm:$0x1]
    %v2536 = vld [vmem:[#allocation2 + $0xe0] sm:$0xff]
    %v2537 = vld [vmem:[#allocation2 + $0xe8] sm:$0xff]
    %v2538 = vld [vmem:[#allocation2 + $0xf0] sm:$0xff]
    %v2539 = vld [vmem:[#allocation2 + $0xf8] sm:$0xff]
    %v2540 = vlaneseq
    %v2541 = vshrl.u32 %v2540, 7
    %v2542 = vsub.s32 0, %v2541
    %v2543 = vrot.slane %v2535, %v2542
    %v2544 = vmul.f32 %v2536, %v2543
    %v2545 = vmul.f32 %v2537, %v2543
    %v2546 = vmul.f32 %v2538, %v2543
    %v2547 = vmul.f32 %v2539, %v2543
    %v2548 = vadd.f32 %v2529, %v2544
    %v2549 = vadd.f32 %v2530, %v2545
    %v2550 = vadd.f32 %v2531, %v2546
    %v2551 = vadd.f32 %v2532, %v2547
    %s2552 = sadd.s32 %s2395, 256
    %s2553 = scalar_lea.vmem [#allocation3], %s2552
    %v2554 = vld [vmem:[%s2553] sm:$0x1]
    %v2555 = vld [vmem:[#allocation2 + $0x100] sm:$0xff]
    %v2556 = vld [vmem:[#allocation2 + $0x108] sm:$0xff]
    %v2557 = vld [vmem:[#allocation2 + $0x110] sm:$0xff]
    %v2558 = vld [vmem:[#allocation2 + $0x118] sm:$0xff]
    %v2559 = vlaneseq
    %v2560 = vshrl.u32 %v2559, 7
    %v2561 = vsub.s32 0, %v2560
    %v2562 = vrot.slane %v2554, %v2561
    %v2563 = vmul.f32 %v2555, %v2562
    %v2564 = vmul.f32 %v2556, %v2562
    %v2565 = vmul.f32 %v2557, %v2562
    %v2566 = vmul.f32 %v2558, %v2562
    %v2567 = vadd.f32 %v2548, %v2563
    %v2568 = vadd.f32 %v2549, %v2564
    %v2569 = vadd.f32 %v2550, %v2565
    %v2570 = vadd.f32 %v2551, %v2566
    %s2571 = sadd.s32 %s2395, 288
    %s2572 = scalar_lea.vmem [#allocation3], %s2571
    %v2573 = vld [vmem:[%s2572] sm:$0x1]
    %v2574 = vld [vmem:[#allocation2 + $0x120] sm:$0xff]
    %v2575 = vld [vmem:[#allocation2 + $0x128] sm:$0xff]
    %v2576 = vld [vmem:[#allocation2 + $0x130] sm:$0xff]
    %v2577 = vld [vmem:[#allocation2 + $0x138] sm:$0xff]
    %v2578 = vlaneseq
    %v2579 = vshrl.u32 %v2578, 7
    %v2580 = vsub.s32 0, %v2579
    %v2581 = vrot.slane %v2573, %v2580
    %v2582 = vmul.f32 %v2574, %v2581
    %v2583 = vmul.f32 %v2575, %v2581
    %v2584 = vmul.f32 %v2576, %v2581
    %v2585 = vmul.f32 %v2577, %v2581
    %v2586 = vadd.f32 %v2567, %v2582
    %v2587 = vadd.f32 %v2568, %v2583
    %v2588 = vadd.f32 %v2569, %v2584
    %v2589 = vadd.f32 %v2570, %v2585
    %s2590 = sadd.s32 %s2395, 320
    %s2591 = scalar_lea.vmem [#allocation3], %s2590
    %v2592 = vld [vmem:[%s2591] sm:$0x1]
    %v2593 = vld [vmem:[#allocation2 + $0x140] sm:$0xff]
    %v2594 = vld [vmem:[#allocation2 + $0x148] sm:$0xff]
    %v2595 = vld [vmem:[#allocation2 + $0x150] sm:$0xff]
    %v2596 = vld [vmem:[#allocation2 + $0x158] sm:$0xff]
    %v2597 = vlaneseq
    %v2598 = vshrl.u32 %v2597, 7
    %v2599 = vsub.s32 0, %v2598
    %v2600 = vrot.slane %v2592, %v2599
    %v2601 = vmul.f32 %v2593, %v2600
    %v2602 = vmul.f32 %v2594, %v2600
    %v2603 = vmul.f32 %v2595, %v2600
    %v2604 = vmul.f32 %v2596, %v2600
    %v2605 = vadd.f32 %v2586, %v2601
    %v2606 = vadd.f32 %v2587, %v2602
    %v2607 = vadd.f32 %v2588, %v2603
    %v2608 = vadd.f32 %v2589, %v2604
    %s2609 = sadd.s32 %s2395, 352
    %s2610 = scalar_lea.vmem [#allocation3], %s2609
    %v2611 = vld [vmem:[%s2610] sm:$0x1]
    %v2612 = vld [vmem:[#allocation2 + $0x160] sm:$0xff]
    %v2613 = vld [vmem:[#allocation2 + $0x168] sm:$0xff]
    %v2614 = vld [vmem:[#allocation2 + $0x170] sm:$0xff]
    %v2615 = vld [vmem:[#allocation2 + $0x178] sm:$0xff]
    %v2616 = vlaneseq
    %v2617 = vshrl.u32 %v2616, 7
    %v2618 = vsub.s32 0, %v2617
    %v2619 = vrot.slane %v2611, %v2618
    %v2620 = vmul.f32 %v2612, %v2619
    %v2621 = vmul.f32 %v2613, %v2619
    %v2622 = vmul.f32 %v2614, %v2619
    %v2623 = vmul.f32 %v2615, %v2619
    %v2624 = vadd.f32 %v2605, %v2620
    %v2625 = vadd.f32 %v2606, %v2621
    %v2626 = vadd.f32 %v2607, %v2622
    %v2627 = vadd.f32 %v2608, %v2623
    %s2628 = sadd.s32 %s2395, 384
    %s2629 = scalar_lea.vmem [#allocation3], %s2628
    %v2630 = vld [vmem:[%s2629] sm:$0x1]
    %v2631 = vld [vmem:[#allocation2 + $0x180] sm:$0xff]
    %v2632 = vld [vmem:[#allocation2 + $0x188] sm:$0xff]
    %v2633 = vld [vmem:[#allocation2 + $0x190] sm:$0xff]
    %v2634 = vld [vmem:[#allocation2 + $0x198] sm:$0xff]
    %v2635 = vlaneseq
    %v2636 = vshrl.u32 %v2635, 7
    %v2637 = vsub.s32 0, %v2636
    %v2638 = vrot.slane %v2630, %v2637
    %v2639 = vmul.f32 %v2631, %v2638
    %v2640 = vmul.f32 %v2632, %v2638
    %v2641 = vmul.f32 %v2633, %v2638
    %v2642 = vmul.f32 %v2634, %v2638
    %v2643 = vadd.f32 %v2624, %v2639
    %v2644 = vadd.f32 %v2625, %v2640
    %v2645 = vadd.f32 %v2626, %v2641
    %v2646 = vadd.f32 %v2627, %v2642
    %s2647 = sadd.s32 %s2395, 416
    %s2648 = scalar_lea.vmem [#allocation3], %s2647
    %v2649 = vld [vmem:[%s2648] sm:$0x1]
    %v2650 = vld [vmem:[#allocation2 + $0x1a0] sm:$0xff]
    %v2651 = vld [vmem:[#allocation2 + $0x1a8] sm:$0xff]
    %v2652 = vld [vmem:[#allocation2 + $0x1b0] sm:$0xff]
    %v2653 = vld [vmem:[#allocation2 + $0x1b8] sm:$0xff]
    %v2654 = vlaneseq
    %v2655 = vshrl.u32 %v2654, 7
    %v2656 = vsub.s32 0, %v2655
    %v2657 = vrot.slane %v2649, %v2656
    %v2658 = vmul.f32 %v2650, %v2657
    %v2659 = vmul.f32 %v2651, %v2657
    %v2660 = vmul.f32 %v2652, %v2657
    %v2661 = vmul.f32 %v2653, %v2657
    %v2662 = vadd.f32 %v2643, %v2658
    %v2663 = vadd.f32 %v2644, %v2659
    %v2664 = vadd.f32 %v2645, %v2660
    %v2665 = vadd.f32 %v2646, %v2661
    %s2666 = sadd.s32 %s2395, 448
    %s2667 = scalar_lea.vmem [#allocation3], %s2666
    %v2668 = vld [vmem:[%s2667] sm:$0x1]
    %v2669 = vld [vmem:[#allocation2 + $0x1c0] sm:$0xff]
    %v2670 = vld [vmem:[#allocation2 + $0x1c8] sm:$0xff]
    %v2671 = vld [vmem:[#allocation2 + $0x1d0] sm:$0xff]
    %v2672 = vld [vmem:[#allocation2 + $0x1d8] sm:$0xff]
    %v2673 = vlaneseq
    %v2674 = vshrl.u32 %v2673, 7
    %v2675 = vsub.s32 0, %v2674
    %v2676 = vrot.slane %v2668, %v2675
    %v2677 = vmul.f32 %v2669, %v2676
    %v2678 = vmul.f32 %v2670, %v2676
    %v2679 = vmul.f32 %v2671, %v2676
    %v2680 = vmul.f32 %v2672, %v2676
    %v2681 = vadd.f32 %v2662, %v2677
    %v2682 = vadd.f32 %v2663, %v2678
    %v2683 = vadd.f32 %v2664, %v2679
    %v2684 = vadd.f32 %v2665, %v2680
    %s2685 = sadd.s32 %s2395, 480
    %s2686 = scalar_lea.vmem [#allocation3], %s2685
    %v2687 = vld [vmem:[%s2686] sm:$0x1]
    %v2688 = vld [vmem:[#allocation2 + $0x1e0] sm:$0xff]
    %v2689 = vld [vmem:[#allocation2 + $0x1e8] sm:$0xff]
    %v2690 = vld [vmem:[#allocation2 + $0x1f0] sm:$0xff]
    %v2691 = vld [vmem:[#allocation2 + $0x1f8] sm:$0xff]
    %v2692 = vlaneseq
    %v2693 = vshrl.u32 %v2692, 7
    %v2694 = vsub.s32 0, %v2693
    %v2695 = vrot.slane %v2687, %v2694
    %v2696 = vmul.f32 %v2688, %v2695
    %v2697 = vmul.f32 %v2689, %v2695
    %v2698 = vmul.f32 %v2690, %v2695
    %v2699 = vmul.f32 %v2691, %v2695
    %v2700 = vadd.f32 %v2681, %v2696
    %v2701 = vadd.f32 %v2682, %v2697
    %v2702 = vadd.f32 %v2683, %v2698
    %v2703 = vadd.f32 %v2684, %v2699
    %s2704 = sadd.s32 %s2395, 512
    %s2705 = scalar_lea.vmem [#allocation3], %s2704
    %v2706 = vld [vmem:[%s2705] sm:$0x1]
    %v2707 = vld [vmem:[#allocation2 + $0x200] sm:$0xff]
    %v2708 = vld [vmem:[#allocation2 + $0x208] sm:$0xff]
    %v2709 = vld [vmem:[#allocation2 + $0x210] sm:$0xff]
    %v2710 = vld [vmem:[#allocation2 + $0x218] sm:$0xff]
    %v2711 = vlaneseq
    %v2712 = vshrl.u32 %v2711, 7
    %v2713 = vsub.s32 0, %v2712
    %v2714 = vrot.slane %v2706, %v2713
    %v2715 = vmul.f32 %v2707, %v2714
    %v2716 = vmul.f32 %v2708, %v2714
    %v2717 = vmul.f32 %v2709, %v2714
    %v2718 = vmul.f32 %v2710, %v2714
    %v2719 = vadd.f32 %v2700, %v2715
    %v2720 = vadd.f32 %v2701, %v2716
    %v2721 = vadd.f32 %v2702, %v2717
    %v2722 = vadd.f32 %v2703, %v2718
    %s2723 = sadd.s32 %s2395, 544
    %s2724 = scalar_lea.vmem [#allocation3], %s2723
    %v2725 = vld [vmem:[%s2724] sm:$0x1]
    %v2726 = vld [vmem:[#allocation2 + $0x220] sm:$0xff]
    %v2727 = vld [vmem:[#allocation2 + $0x228] sm:$0xff]
    %v2728 = vld [vmem:[#allocation2 + $0x230] sm:$0xff]
    %v2729 = vld [vmem:[#allocation2 + $0x238] sm:$0xff]
    %v2730 = vlaneseq
    %v2731 = vshrl.u32 %v2730, 7
    %v2732 = vsub.s32 0, %v2731
    %v2733 = vrot.slane %v2725, %v2732
    %v2734 = vmul.f32 %v2726, %v2733
    %v2735 = vmul.f32 %v2727, %v2733
    %v2736 = vmul.f32 %v2728, %v2733
    %v2737 = vmul.f32 %v2729, %v2733
    %v2738 = vadd.f32 %v2719, %v2734
    %v2739 = vadd.f32 %v2720, %v2735
    %v2740 = vadd.f32 %v2721, %v2736
    %v2741 = vadd.f32 %v2722, %v2737
    %s2742 = sadd.s32 %s2395, 576
    %s2743 = scalar_lea.vmem [#allocation3], %s2742
    %v2744 = vld [vmem:[%s2743] sm:$0x1]
    %v2745 = vld [vmem:[#allocation2 + $0x240] sm:$0xff]
    %v2746 = vld [vmem:[#allocation2 + $0x248] sm:$0xff]
    %v2747 = vld [vmem:[#allocation2 + $0x250] sm:$0xff]
    %v2748 = vld [vmem:[#allocation2 + $0x258] sm:$0xff]
    %v2749 = vlaneseq
    %v2750 = vshrl.u32 %v2749, 7
    %v2751 = vsub.s32 0, %v2750
    %v2752 = vrot.slane %v2744, %v2751
    %v2753 = vmul.f32 %v2745, %v2752
    %v2754 = vmul.f32 %v2746, %v2752
    %v2755 = vmul.f32 %v2747, %v2752
    %v2756 = vmul.f32 %v2748, %v2752
    %v2757 = vadd.f32 %v2738, %v2753
    %v2758 = vadd.f32 %v2739, %v2754
    %v2759 = vadd.f32 %v2740, %v2755
    %v2760 = vadd.f32 %v2741, %v2756
    %s2761 = sadd.s32 %s2395, 608
    %s2762 = scalar_lea.vmem [#allocation3], %s2761
    %v2763 = vld [vmem:[%s2762] sm:$0x1]
    %v2764 = vld [vmem:[#allocation2 + $0x260] sm:$0xff]
    %v2765 = vld [vmem:[#allocation2 + $0x268] sm:$0xff]
    %v2766 = vld [vmem:[#allocation2 + $0x270] sm:$0xff]
    %v2767 = vld [vmem:[#allocation2 + $0x278] sm:$0xff]
    %v2768 = vlaneseq
    %v2769 = vshrl.u32 %v2768, 7
    %v2770 = vsub.s32 0, %v2769
    %v2771 = vrot.slane %v2763, %v2770
    %v2772 = vmul.f32 %v2764, %v2771
    %v2773 = vmul.f32 %v2765, %v2771
    %v2774 = vmul.f32 %v2766, %v2771
    %v2775 = vmul.f32 %v2767, %v2771
    %v2776 = vadd.f32 %v2757, %v2772
    %v2777 = vadd.f32 %v2758, %v2773
    %v2778 = vadd.f32 %v2759, %v2774
    %v2779 = vadd.f32 %v2760, %v2775
    %s2780 = sadd.s32 %s2395, 640
    %s2781 = scalar_lea.vmem [#allocation3], %s2780
    %v2782 = vld [vmem:[%s2781] sm:$0x1]
    %v2783 = vld [vmem:[#allocation2 + $0x280] sm:$0xff]
    %v2784 = vld [vmem:[#allocation2 + $0x288] sm:$0xff]
    %v2785 = vld [vmem:[#allocation2 + $0x290] sm:$0xff]
    %v2786 = vld [vmem:[#allocation2 + $0x298] sm:$0xff]
    %v2787 = vlaneseq
    %v2788 = vshrl.u32 %v2787, 7
    %v2789 = vsub.s32 0, %v2788
    %v2790 = vrot.slane %v2782, %v2789
    %v2791 = vmul.f32 %v2783, %v2790
    %v2792 = vmul.f32 %v2784, %v2790
    %v2793 = vmul.f32 %v2785, %v2790
    %v2794 = vmul.f32 %v2786, %v2790
    %v2795 = vadd.f32 %v2776, %v2791
    %v2796 = vadd.f32 %v2777, %v2792
    %v2797 = vadd.f32 %v2778, %v2793
    %v2798 = vadd.f32 %v2779, %v2794
    %s2799 = sadd.s32 %s2395, 672
    %s2800 = scalar_lea.vmem [#allocation3], %s2799
    %v2801 = vld [vmem:[%s2800] sm:$0x1]
    %v2802 = vld [vmem:[#allocation2 + $0x2a0] sm:$0xff]
    %v2803 = vld [vmem:[#allocation2 + $0x2a8] sm:$0xff]
    %v2804 = vld [vmem:[#allocation2 + $0x2b0] sm:$0xff]
    %v2805 = vld [vmem:[#allocation2 + $0x2b8] sm:$0xff]
    %v2806 = vlaneseq
    %v2807 = vshrl.u32 %v2806, 7
    %v2808 = vsub.s32 0, %v2807
    %v2809 = vrot.slane %v2801, %v2808
    %v2810 = vmul.f32 %v2802, %v2809
    %v2811 = vmul.f32 %v2803, %v2809
    %v2812 = vmul.f32 %v2804, %v2809
    %v2813 = vmul.f32 %v2805, %v2809
    %v2814 = vadd.f32 %v2795, %v2810
    %v2815 = vadd.f32 %v2796, %v2811
    %v2816 = vadd.f32 %v2797, %v2812
    %v2817 = vadd.f32 %v2798, %v2813
    %s2818 = sadd.s32 %s2395, 704
    %s2819 = scalar_lea.vmem [#allocation3], %s2818
    %v2820 = vld [vmem:[%s2819] sm:$0x1]
    %v2821 = vld [vmem:[#allocation2 + $0x2c0] sm:$0xff]
    %v2822 = vld [vmem:[#allocation2 + $0x2c8] sm:$0xff]
    %v2823 = vld [vmem:[#allocation2 + $0x2d0] sm:$0xff]
    %v2824 = vld [vmem:[#allocation2 + $0x2d8] sm:$0xff]
    %v2825 = vlaneseq
    %v2826 = vshrl.u32 %v2825, 7
    %v2827 = vsub.s32 0, %v2826
    %v2828 = vrot.slane %v2820, %v2827
    %v2829 = vmul.f32 %v2821, %v2828
    %v2830 = vmul.f32 %v2822, %v2828
    %v2831 = vmul.f32 %v2823, %v2828
    %v2832 = vmul.f32 %v2824, %v2828
    %v2833 = vadd.f32 %v2814, %v2829
    %v2834 = vadd.f32 %v2815, %v2830
    %v2835 = vadd.f32 %v2816, %v2831
    %v2836 = vadd.f32 %v2817, %v2832
    %s2837 = sadd.s32 %s2395, 736
    %s2838 = scalar_lea.vmem [#allocation3], %s2837
    %v2839 = vld [vmem:[%s2838] sm:$0x1]
    %v2840 = vld [vmem:[#allocation2 + $0x2e0] sm:$0xff]
    %v2841 = vld [vmem:[#allocation2 + $0x2e8] sm:$0xff]
    %v2842 = vld [vmem:[#allocation2 + $0x2f0] sm:$0xff]
    %v2843 = vld [vmem:[#allocation2 + $0x2f8] sm:$0xff]
    %v2844 = vlaneseq
    %v2845 = vshrl.u32 %v2844, 7
    %v2846 = vsub.s32 0, %v2845
    %v2847 = vrot.slane %v2839, %v2846
    %v2848 = vmul.f32 %v2840, %v2847
    %v2849 = vmul.f32 %v2841, %v2847
    %v2850 = vmul.f32 %v2842, %v2847
    %v2851 = vmul.f32 %v2843, %v2847
    %v2852 = vadd.f32 %v2833, %v2848
    %v2853 = vadd.f32 %v2834, %v2849
    %v2854 = vadd.f32 %v2835, %v2850
    %v2855 = vadd.f32 %v2836, %v2851
    %s2856 = sadd.s32 %s2395, 768
    %s2857 = scalar_lea.vmem [#allocation3], %s2856
    %v2858 = vld [vmem:[%s2857] sm:$0x1]
    %v2859 = vld [vmem:[#allocation2 + $0x300] sm:$0xff]
    %v2860 = vld [vmem:[#allocation2 + $0x308] sm:$0xff]
    %v2861 = vld [vmem:[#allocation2 + $0x310] sm:$0xff]
    %v2862 = vld [vmem:[#allocation2 + $0x318] sm:$0xff]
    %v2863 = vlaneseq
    %v2864 = vshrl.u32 %v2863, 7
    %v2865 = vsub.s32 0, %v2864
    %v2866 = vrot.slane %v2858, %v2865
    %v2867 = vmul.f32 %v2859, %v2866
    %v2868 = vmul.f32 %v2860, %v2866
    %v2869 = vmul.f32 %v2861, %v2866
    %v2870 = vmul.f32 %v2862, %v2866
    %v2871 = vadd.f32 %v2852, %v2867
    %v2872 = vadd.f32 %v2853, %v2868
    %v2873 = vadd.f32 %v2854, %v2869
    %v2874 = vadd.f32 %v2855, %v2870
    %v2875 = vmul.f32 %v2871, 0.04
    %v2876 = vmul.f32 %v2872, 0.04
    %v2877 = vmul.f32 %v2873, 0.04
    %v2878 = vmul.f32 %v2874, 0.04
    %s2879 = scalar_lea.vmem [#allocation5], %s2395
    %v2880 = vld [vmem:[%s2879] sm:$0x1]
    %v2881 = vld [vmem:[#allocation4] sm:$0xff]
    %v2882 = vld [vmem:[#allocation4 + $0x8] sm:$0xff]
    %v2883 = vld [vmem:[#allocation4 + $0x10] sm:$0xff]
    %v2884 = vld [vmem:[#allocation4 + $0x18] sm:$0xff]
    %v2885 = vlaneseq
    %v2886 = vshrl.u32 %v2885, 7
    %v2887 = vsub.s32 0, %v2886
    %v2888 = vrot.slane %v2880, %v2887
    %v2889 = vmul.f32 %v2881, %v2888
    %v2890 = vmul.f32 %v2882, %v2888
    %v2891 = vmul.f32 %v2883, %v2888
    %v2892 = vmul.f32 %v2884, %v2888
    %v2893 = vadd.f32 %v2889, 1e-06
    %v2894 = vadd.f32 %v2890, 1e-06
    %v2895 = vadd.f32 %v2891, 1e-06
    %v2896 = vadd.f32 %v2892, 1e-06
    %v2897 = vrcp.pop %v2893
    %v2898 = vmul.f32 %v2875, %v2897
    %v2899 = vrcp.pop %v2894
    %v2900 = vmul.f32 %v2876, %v2899
    %v2901 = vrcp.pop %v2895
    %v2902 = vmul.f32 %v2877, %v2901
    %v2903 = vrcp.pop %v2896
    %v2904 = vmul.f32 %v2878, %v2903
    %v2905 = vadd.f32 %v2898, 1e-06
    %v2906 = vadd.f32 %v2900, 1e-06
    %v2907 = vadd.f32 %v2902, 1e-06
    %v2908 = vadd.f32 %v2904, 1e-06
    %v2909 = vlog2.pop %v2905
    %v2910 = vmul.f32 %v2909, 0.6931472
    %v2911 = vlog2.pop %v2906
    %v2912 = vmul.f32 %v2911, 0.6931472
    %v2913 = vlog2.pop %v2907
    %v2914 = vmul.f32 %v2913, 0.6931472
    %v2915 = vlog2.pop %v2908
    %v2916 = vmul.f32 %v2915, 0.6931472
    %v2917 = vmul.f32 %v2875, %v2910
    %v2918 = vmul.f32 %v2876, %v2912
    %v2919 = vmul.f32 %v2877, %v2914
    %v2920 = vmul.f32 %v2878, %v2916
    %v2921 = vadd.f32 %v2917, %v2918
    %v2922 = vadd.f32 %v2921, %v2919
    %v2923 = vadd.f32 %v2922, %v2920
    %v2924 = vrot.slane %v2923, 4
    %v2925 = vadd.f32 %v2923, %v2924
    %v2926 = vrot.slane %v2925, 2
    %v2927 = vadd.f32 %v2925, %v2926
    %v2928 = vrot.slane %v2927, 1
    %v2929 = vadd.f32 %v2927, %v2928
    %v2930 = vadd.f32 %v2400, %v2929
  $region14: #{local_mutual_information.1} parent=0 // loop_footer
    %s2399 = sadd.s32 1, %s2395
  $region15: #{local_mutual_information.1} parent=0 // loop_footer_branch
    %2394 = sbr.rel target = $region11
  $region16: #{local_mutual_information.1} parent=0 // loop_exit
    _
  %2931 = vst [vmem:[%s2] sm:$0x1] %v2400
  // Predicated region
  $region17: #{local_mutual_information.1} parent=0 // pred_check
    _
  $region18: #{local_mutual_information.1} parent=0 // pred_check_branch
    %2933 = sbr.rel (0) target = $region20
  $region19: #{local_mutual_information.1} parent=0 // pred_region
    _
  $region20: #{local_mutual_information.1} parent=0 // pred_fallthru
    _
  // Predicated region
  $region21: #{local_mutual_information.1} parent=0 // pred_check
    _
  $region22: #{local_mutual_information.1} parent=0 // pred_check_branch
    %2935 = sbr.rel (0) target = $region24
  $region23: #{local_mutual_information.1} parent=0 // pred_region
    _
  $region24: #{local_mutual_information.1} parent=0 // pred_fallthru
    _

</llo_original>
